<compile_context>
chip_gen: v6e
topology: v6e:2x2x1
jax: 0.10.0
libtpu: 0.0.40
codegen_flags: <defaults>
</compile_context>

<pallas_src>
import functools

import jax
import jax.numpy as jnp
from jax.experimental import pallas as pl
from jax.experimental.pallas import tpu as pltpu

HIDDEN = 512
OUT_DIM = 32
OUT_PAD = 128  # lane-dense padded width of the final layer / output


def _round_up(n, m):
    return ((n + m - 1) // m) * m


def _rnd_kernel(x_ref,
                w1_ref, b1_ref,
                w2_ref, b2_ref,
                w3_ref, b3_ref,
                w4_ref, b4_ref,
                w5_ref, b5_ref,
                o_ref, *, scale):
    def dense_relu(h, w_ref, b_ref):
        # bf16 MXU matmul with f32 accumulation; bias + ReLU in f32 (VPU).
        y = jnp.dot(h.astype(jnp.bfloat16), w_ref[...],
                    preferred_element_type=jnp.float32)
        y = y + b_ref[...]          # (1, out) broadcasts over batch rows
        return jnp.maximum(y, 0.0)

    h = x_ref[...].astype(jnp.float32)
    h = dense_relu(h, w1_ref, b1_ref)
    h = dense_relu(h, w2_ref, b2_ref)
    h = dense_relu(h, w3_ref, b3_ref)
    h = dense_relu(h, w4_ref, b4_ref)
    h = dense_relu(h, w5_ref, b5_ref)   # last layer also ReLU'd (matches PyTorch module)
    o_ref[...] = (jnp.tanh(h) * scale).astype(o_ref.dtype)


def rnd_forward(x, params, scale, *, batch_tile=256):
    """x: (B, num_inputs) float32.  params: dict of (in, out) weights, (1, out) biases.

    Weights are stored transposed relative to PyTorch so every layer is y = x @ W + b.
    """
    B, num_inputs = x.shape

    # --- batch tiling: MXU-friendly tiles, zero-pad ragged batches ---------------
    tb = _round_up(min(batch_tile, _round_up(B, 8)), 8)
    B_pad = _round_up(B, tb)
    if B_pad != B:
        x = jnp.pad(x, ((0, B_pad - B), (0, 0)))
    x = x.astype(jnp.float32)

    # --- weights in bf16 for MXU peak; biases stay f32 ----------------------------
    w1 = params["w1"].astype(jnp.bfloat16)
    w2 = params["w2"].astype(jnp.bfloat16)
    w3 = params["w3"].astype(jnp.bfloat16)
    w4 = params["w4"].astype(jnp.bfloat16)
    b1 = params["b1"].astype(jnp.float32)
    b2 = params["b2"].astype(jnp.float32)
    b3 = params["b3"].astype(jnp.float32)
    b4 = params["b4"].astype(jnp.float32)
    # lane-dense final layer: pad 32 -> 128 output columns (sliced off below).
    w5 = jnp.pad(params["w5"], ((0, 0), (0, OUT_PAD - OUT_DIM))).astype(jnp.bfloat16)
    b5 = jnp.pad(params["b5"], ((0, 0), (0, OUT_PAD - OUT_DIM))).astype(jnp.float32)

    grid = (B_pad // tb,)  # "parallel" axis -> shards across TensorCores on v7x when >= 2 steps

    def resident(arr):
        # Whole array resident in VMEM; block index constant across the grid.
        return pl.BlockSpec(arr.shape, lambda i: (0, 0))

    weights = (w1, b1, w2, b2, w3, b3, w4, b4, w5, b5)
    flops = 2 * B_pad * (num_inputs * HIDDEN + 3 * HIDDEN * HIDDEN + HIDDEN * OUT_PAD)
    bytes_accessed = int(
        x.size * x.dtype.itemsize
        + B_pad * OUT_PAD * 4
        + sum(a.size * a.dtype.itemsize for a in weights))
    cost = pl.CostEstimate(flops=flops,
                           transcendentals=B_pad * OUT_PAD,   # tanh
                           bytes_accessed=bytes_accessed)

    kernel = functools.partial(_rnd_kernel, scale=float(scale))

    out = pl.pallas_call(
        kernel,
        out_shape=jax.ShapeDtypeStruct((B_pad, OUT_PAD), jnp.float32),
        grid_spec=pltpu.PrefetchScalarGridSpec(
            num_scalar_prefetch=0,
            grid=grid,
            in_specs=[
                pl.BlockSpec((tb, num_inputs), lambda i: (i, 0)),  # x tile
                resident(w1), resident(b1),
                resident(w2), resident(b2),
                resident(w3), resident(b3),
                resident(w4), resident(b4),
                resident(w5), resident(b5),
            ],
            out_specs=pl.BlockSpec((tb, OUT_PAD), lambda i: (i, 0)),
        ),
        compiler_params=pltpu.CompilerParams(
            dimension_semantics=("parallel",)),
        cost_estimate=cost,
    )(x, *weights)

    return out[:B, :OUT_DIM]


def init_params(key, num_inputs):
    """Deterministic synthetic params. Weights stored as (in, out); biases as (1, out)."""
    dims = [(num_inputs, HIDDEN), (HIDDEN, HIDDEN), (HIDDEN, HIDDEN),
            (HIDDEN, HIDDEN), (HIDDEN, OUT_DIM)]
    params = {}
    for idx, (fan_in, fan_out) in enumerate(dims, start=1):
        key, kw, kb = jax.random.split(key, 3)
        bound = 1.0 / jnp.sqrt(fan_in)  # matches nn.Linear default init range
        params[f"w{idx}"] = jax.random.uniform(
            kw, (fan_in, fan_out), jnp.float32, minval=-bound, maxval=bound)
        params[f"b{idx}"] = jax.random.uniform(
            kb, (1, fan_out), jnp.float32, minval=-bound, maxval=bound)
    return params


def rnd_reference(x, params, scale):
    """Pure-JAX reference mimicking the kernel's bf16-matmul / f32-accumulate math."""
    h = x.astype(jnp.float32)
    for idx in range(1, 6):
        w = params[f"w{idx}"].astype(jnp.bfloat16)
        y = jnp.dot(h.astype(jnp.bfloat16), w, preferred_element_type=jnp.float32)
        h = jnp.maximum(y + params[f"b{idx}"], 0.0)
    return jnp.tanh(h) * scale


if __name__ == "__main__":
    key = jax.random.PRNGKey(0)
    num_inputs = 16
    batch = 24
    scale = 2.0

    k_params, k_x = jax.random.split(key)
    params = init_params(k_params, num_inputs)
    x = jax.random.normal(k_x, (batch, num_inputs), jnp.float32)

    ref = rnd_reference(x, params, scale)

    # Default (large-tile) path: tile clamps to the small demo batch, grid = 1 step.
    out = jax.block_until_ready(rnd_forward(x, params, scale))
    assert out.shape == (batch, OUT_DIM)
    assert jnp.allclose(out, ref, atol=5e-3, rtol=5e-3), "mismatch vs reference"

    # Multi-step grid + ragged-batch padding path (tb=16 -> B padded 24 -> 32, grid=2).
    out2 = jax.block_until_ready(rnd_forward(x, params, scale, batch_tile=16))
    assert out2.shape == (batch, OUT_DIM)
    assert jnp.allclose(out2, ref, atol=5e-3, rtol=5e-3), "mismatch vs reference (tiled)"

    print("KERNEL_OK")
</pallas_src>

<mosaic_0001>
module attributes {stable_mosaic.version = 11 : i64} {
  func.func @_rnd_kernel(%arg0: i32, %arg1: memref<24x16xf32, #tpu.memory_space<vmem>>, %arg2: memref<16x512xbf16, #tpu.memory_space<vmem>>, %arg3: memref<1x512xf32, #tpu.memory_space<vmem>>, %arg4: memref<512x512xbf16, #tpu.memory_space<vmem>>, %arg5: memref<1x512xf32, #tpu.memory_space<vmem>>, %arg6: memref<512x512xbf16, #tpu.memory_space<vmem>>, %arg7: memref<1x512xf32, #tpu.memory_space<vmem>>, %arg8: memref<512x512xbf16, #tpu.memory_space<vmem>>, %arg9: memref<1x512xf32, #tpu.memory_space<vmem>>, %arg10: memref<512x128xbf16, #tpu.memory_space<vmem>>, %arg11: memref<1x128xf32, #tpu.memory_space<vmem>>, %arg12: memref<24x128xf32, #tpu.memory_space<vmem>>) attributes {dimension_semantics = [#tpu.dimension_semantics<parallel>], iteration_bounds = array<i64: 1>, scalar_prefetch = 0 : i64, scratch_operands = 0 : i64, tpu.core_type = #tpu.core_type<tc>, window_params = [{transform_indices = @transform_0, window_bounds = array<i64: 24, 16>}, {pipeline_mode = #tpu.pipeline_mode<synchronous>, transform_indices = @transform_1, window_bounds = array<i64: 16, 512>}, {pipeline_mode = #tpu.pipeline_mode<synchronous>, transform_indices = @transform_2, window_bounds = array<i64: 1, 512>}, {pipeline_mode = #tpu.pipeline_mode<synchronous>, transform_indices = @transform_3, window_bounds = array<i64: 512, 512>}, {pipeline_mode = #tpu.pipeline_mode<synchronous>, transform_indices = @transform_4, window_bounds = array<i64: 1, 512>}, {pipeline_mode = #tpu.pipeline_mode<synchronous>, transform_indices = @transform_5, window_bounds = array<i64: 512, 512>}, {pipeline_mode = #tpu.pipeline_mode<synchronous>, transform_indices = @transform_6, window_bounds = array<i64: 1, 512>}, {pipeline_mode = #tpu.pipeline_mode<synchronous>, transform_indices = @transform_7, window_bounds = array<i64: 512, 512>}, {pipeline_mode = #tpu.pipeline_mode<synchronous>, transform_indices = @transform_8, window_bounds = array<i64: 1, 512>}, {pipeline_mode = #tpu.pipeline_mode<synchronous>, transform_indices = @transform_9, window_bounds = array<i64: 512, 128>}, {pipeline_mode = #tpu.pipeline_mode<synchronous>, transform_indices = @transform_10, window_bounds = array<i64: 1, 128>}, {transform_indices = @transform_11, window_bounds = array<i64: 24, 128>}]} {
    %c0 = arith.constant 0 : index
    %c0_0 = arith.constant 0 : index
    %0 = vector.load %arg1[%c0, %c0_0] : memref<24x16xf32, #tpu.memory_space<vmem>>, vector<24x16xf32>
    %1 = arith.truncf %0 : vector<24x16xf32> to vector<24x16xbf16>
    %c0_1 = arith.constant 0 : index
    %c0_2 = arith.constant 0 : index
    %2 = vector.load %arg2[%c0_1, %c0_2] : memref<16x512xbf16, #tpu.memory_space<vmem>>, vector<16x512xbf16>
    %cst = arith.constant dense<0.000000e+00> : vector<24x512xf32>
    %3 = tpu.matmul %1, %2, %cst {dimension_numbers = #tpu.dot_dimension_numbers<[1], [0], [0], [1], [0, 0, 1, 1], [], []>} : vector<24x16xbf16>, vector<16x512xbf16>, vector<24x512xf32> -> vector<24x512xf32>
    %c0_3 = arith.constant 0 : index
    %c0_4 = arith.constant 0 : index
    %4 = vector.load %arg3[%c0_3, %c0_4] : memref<1x512xf32, #tpu.memory_space<vmem>>, vector<1x512xf32>
    %5 = vector.broadcast %4 : vector<1x512xf32> to vector<24x512xf32>
    %6 = arith.addf %3, %5 : vector<24x512xf32>
    %cst_5 = arith.constant 0.000000e+00 : f32
    %7 = vector.broadcast %cst_5 : f32 to vector<24x512xf32>
    %8 = arith.maximumf %6, %7 : vector<24x512xf32>
    %9 = arith.truncf %8 : vector<24x512xf32> to vector<24x512xbf16>
    %c0_6 = arith.constant 0 : index
    %c0_7 = arith.constant 0 : index
    %10 = vector.load %arg4[%c0_6, %c0_7] : memref<512x512xbf16, #tpu.memory_space<vmem>>, vector<512x512xbf16>
    %cst_8 = arith.constant dense<0.000000e+00> : vector<24x512xf32>
    %11 = tpu.matmul %9, %10, %cst_8 {dimension_numbers = #tpu.dot_dimension_numbers<[1], [0], [0], [1], [0, 0, 1, 1], [], []>} : vector<24x512xbf16>, vector<512x512xbf16>, vector<24x512xf32> -> vector<24x512xf32>
    %c0_9 = arith.constant 0 : index
    %c0_10 = arith.constant 0 : index
    %12 = vector.load %arg5[%c0_9, %c0_10] : memref<1x512xf32, #tpu.memory_space<vmem>>, vector<1x512xf32>
    %13 = vector.broadcast %12 : vector<1x512xf32> to vector<24x512xf32>
    %14 = arith.addf %11, %13 : vector<24x512xf32>
    %cst_11 = arith.constant 0.000000e+00 : f32
    %15 = vector.broadcast %cst_11 : f32 to vector<24x512xf32>
    %16 = arith.maximumf %14, %15 : vector<24x512xf32>
    %17 = arith.truncf %16 : vector<24x512xf32> to vector<24x512xbf16>
    %c0_12 = arith.constant 0 : index
    %c0_13 = arith.constant 0 : index
    %18 = vector.load %arg6[%c0_12, %c0_13] : memref<512x512xbf16, #tpu.memory_space<vmem>>, vector<512x512xbf16>
    %cst_14 = arith.constant dense<0.000000e+00> : vector<24x512xf32>
    %19 = tpu.matmul %17, %18, %cst_14 {dimension_numbers = #tpu.dot_dimension_numbers<[1], [0], [0], [1], [0, 0, 1, 1], [], []>} : vector<24x512xbf16>, vector<512x512xbf16>, vector<24x512xf32> -> vector<24x512xf32>
    %c0_15 = arith.constant 0 : index
    %c0_16 = arith.constant 0 : index
    %20 = vector.load %arg7[%c0_15, %c0_16] : memref<1x512xf32, #tpu.memory_space<vmem>>, vector<1x512xf32>
    %21 = vector.broadcast %20 : vector<1x512xf32> to vector<24x512xf32>
    %22 = arith.addf %19, %21 : vector<24x512xf32>
    %cst_17 = arith.constant 0.000000e+00 : f32
    %23 = vector.broadcast %cst_17 : f32 to vector<24x512xf32>
    %24 = arith.maximumf %22, %23 : vector<24x512xf32>
    %25 = arith.truncf %24 : vector<24x512xf32> to vector<24x512xbf16>
    %c0_18 = arith.constant 0 : index
    %c0_19 = arith.constant 0 : index
    %26 = vector.load %arg8[%c0_18, %c0_19] : memref<512x512xbf16, #tpu.memory_space<vmem>>, vector<512x512xbf16>
    %cst_20 = arith.constant dense<0.000000e+00> : vector<24x512xf32>
    %27 = tpu.matmul %25, %26, %cst_20 {dimension_numbers = #tpu.dot_dimension_numbers<[1], [0], [0], [1], [0, 0, 1, 1], [], []>} : vector<24x512xbf16>, vector<512x512xbf16>, vector<24x512xf32> -> vector<24x512xf32>
    %c0_21 = arith.constant 0 : index
    %c0_22 = arith.constant 0 : index
    %28 = vector.load %arg9[%c0_21, %c0_22] : memref<1x512xf32, #tpu.memory_space<vmem>>, vector<1x512xf32>
    %29 = vector.broadcast %28 : vector<1x512xf32> to vector<24x512xf32>
    %30 = arith.addf %27, %29 : vector<24x512xf32>
    %cst_23 = arith.constant 0.000000e+00 : f32
    %31 = vector.broadcast %cst_23 : f32 to vector<24x512xf32>
    %32 = arith.maximumf %30, %31 : vector<24x512xf32>
    %33 = arith.truncf %32 : vector<24x512xf32> to vector<24x512xbf16>
    %c0_24 = arith.constant 0 : index
    %c0_25 = arith.constant 0 : index
    %34 = vector.load %arg10[%c0_24, %c0_25] : memref<512x128xbf16, #tpu.memory_space<vmem>>, vector<512x128xbf16>
    %cst_26 = arith.constant dense<0.000000e+00> : vector<24x128xf32>
    %35 = tpu.matmul %33, %34, %cst_26 {dimension_numbers = #tpu.dot_dimension_numbers<[1], [0], [0], [1], [0, 0, 1, 1], [], []>} : vector<24x512xbf16>, vector<512x128xbf16>, vector<24x128xf32> -> vector<24x128xf32>
    %c0_27 = arith.constant 0 : index
    %c0_28 = arith.constant 0 : index
    %36 = vector.load %arg11[%c0_27, %c0_28] : memref<1x128xf32, #tpu.memory_space<vmem>>, vector<1x128xf32>
    %37 = vector.broadcast %36 : vector<1x128xf32> to vector<24x128xf32>
    %38 = arith.addf %35, %37 : vector<24x128xf32>
    %cst_29 = arith.constant 0.000000e+00 : f32
    %39 = vector.broadcast %cst_29 : f32 to vector<24x128xf32>
    %40 = arith.maximumf %38, %39 : vector<24x128xf32>
    %41 = math.tanh %40 : vector<24x128xf32>
    %cst_30 = arith.constant 2.000000e+00 : f32
    %42 = vector.broadcast %cst_30 : f32 to vector<24x128xf32>
    %43 = arith.mulf %41, %42 : vector<24x128xf32>
    %c0_31 = arith.constant 0 : index
    %c0_32 = arith.constant 0 : index
    %44 = vector.load %arg12[%c0_31, %c0_32] : memref<24x128xf32, #tpu.memory_space<vmem>>, vector<24x128xf32>
    tpu.vector_store %arg12[%c0_31, %c0_32], %43 {strides = array<i32>} : memref<24x128xf32, #tpu.memory_space<vmem>>, vector<24x128xf32>,
    return
  }
  func.func @transform_0(%arg0: i32) -> (i32, i32) {
    %c0_i32 = arith.constant 0 : i32
    %c0_i32_0 = arith.constant 0 : i32
    return %arg0, %c0_i32 : i32, i32
  }
  func.func @transform_1(%arg0: i32) -> (i32, i32) {
    %c0_i32 = arith.constant 0 : i32
    %c0_i32_0 = arith.constant 0 : i32
    %c0_i32_1 = arith.constant 0 : i32
    return %c0_i32, %c0_i32_0 : i32, i32
  }
  func.func @transform_2(%arg0: i32) -> (i32, i32) {
    %c0_i32 = arith.constant 0 : i32
    %c0_i32_0 = arith.constant 0 : i32
    %c0_i32_1 = arith.constant 0 : i32
    return %c0_i32, %c0_i32_0 : i32, i32
  }
  func.func @transform_3(%arg0: i32) -> (i32, i32) {
    %c0_i32 = arith.constant 0 : i32
    %c0_i32_0 = arith.constant 0 : i32
    %c0_i32_1 = arith.constant 0 : i32
    return %c0_i32, %c0_i32_0 : i32, i32
  }
  func.func @transform_4(%arg0: i32) -> (i32, i32) {
    %c0_i32 = arith.constant 0 : i32
    %c0_i32_0 = arith.constant 0 : i32
    %c0_i32_1 = arith.constant 0 : i32
    return %c0_i32, %c0_i32_0 : i32, i32
  }
  func.func @transform_5(%arg0: i32) -> (i32, i32) {
    %c0_i32 = arith.constant 0 : i32
    %c0_i32_0 = arith.constant 0 : i32
    %c0_i32_1 = arith.constant 0 : i32
    return %c0_i32, %c0_i32_0 : i32, i32
  }
  func.func @transform_6(%arg0: i32) -> (i32, i32) {
    %c0_i32 = arith.constant 0 : i32
    %c0_i32_0 = arith.constant 0 : i32
    %c0_i32_1 = arith.constant 0 : i32
    return %c0_i32, %c0_i32_0 : i32, i32
  }
  func.func @transform_7(%arg0: i32) -> (i32, i32) {
    %c0_i32 = arith.constant 0 : i32
    %c0_i32_0 = arith.constant 0 : i32
    %c0_i32_1 = arith.constant 0 : i32
    return %c0_i32, %c0_i32_0 : i32, i32
  }
  func.func @transform_8(%arg0: i32) -> (i32, i32) {
    %c0_i32 = arith.constant 0 : i32
    %c0_i32_0 = arith.constant 0 : i32
    %c0_i32_1 = arith.constant 0 : i32
    return %c0_i32, %c0_i32_0 : i32, i32
  }
  func.func @transform_9(%arg0: i32) -> (i32, i32) {
    %c0_i32 = arith.constant 0 : i32
    %c0_i32_0 = arith.constant 0 : i32
    %c0_i32_1 = arith.constant 0 : i32
    return %c0_i32, %c0_i32_0 : i32, i32
  }
  func.func @transform_10(%arg0: i32) -> (i32, i32) {
    %c0_i32 = arith.constant 0 : i32
    %c0_i32_0 = arith.constant 0 : i32
    %c0_i32_1 = arith.constant 0 : i32
    return %c0_i32, %c0_i32_0 : i32, i32
  }
  func.func @transform_11(%arg0: i32) -> (i32, i32) {
    %c0_i32 = arith.constant 0 : i32
    %c0_i32_0 = arith.constant 0 : i32
    return %arg0, %c0_i32 : i32, i32
  }
}

</mosaic_0001>

<llo_original>
// kernel: tpu_custom_call.1
$region0: #{tpu_custom_call.1}
  #allocation0 [shape = 'u32[]', space=smem, size = 0x4, offset = 0x4, fixed_abs, tag = 'smem constant byte address 0x4 - core index']
  #allocation1 [shape = 'u32[144,128]{1,0:T(1,128)}', space=vmem, size = 0x12000, scoped, tag = 'internal scratch']
  %s0 = inlined_call_operand.vmem [shape: f32[24,16], index: 0, kind: input, shape index: {}]
  %s1 = inlined_call_operand.vmem [shape: bf16[16,512], index: 1, kind: input, shape index: {}]
  %s2 = inlined_call_operand.vmem [shape: f32[1,512], index: 2, kind: input, shape index: {}]
  %s3 = inlined_call_operand.hbm [shape: bf16[512,512], index: 3, kind: input, shape index: {}]
  %s4 = inlined_call_operand.vmem [shape: f32[1,512], index: 4, kind: input, shape index: {}]
  %s5 = inlined_call_operand.hbm [shape: bf16[512,512], index: 5, kind: input, shape index: {}]
  %s6 = inlined_call_operand.vmem [shape: f32[1,512], index: 6, kind: input, shape index: {}]
  %s7 = inlined_call_operand.hbm [shape: bf16[512,512], index: 7, kind: input, shape index: {}]
  %s8 = inlined_call_operand.vmem [shape: f32[1,512], index: 8, kind: input, shape index: {}]
  %s9 = inlined_call_operand.hbm [shape: bf16[512,128], index: 9, kind: input, shape index: {}]
  %s10 = inlined_call_operand.vmem [shape: f32[1,128], index: 10, kind: input, shape index: {}]
  %s11 = inlined_call_operand.hbm [shape: f32[24,128], index: 11, kind: output, shape index: {}]
  %s12 = sld [smem:[#allocation0]]
  $region70: #{tpu_custom_call.1} parent=0
    _
  %s14 = ssub.s32 1, %s12
  %s15 = scalar_select 0, %s14, %s12
  $region1: #{tpu_custom_call.1} parent=0
    #allocation2 [shape = 'u8[524288]{0}', space=vmem, size = 0x80000, scoped, tag = 'input window, operand 3, single buffered']
    #allocation3 [shape = 's32[1]{0}', space=sflag, size = 0x4, scoped, tag = 'scoped memory for tpu_custom_call.1']
    #allocation4 [shape = 's32[1]{0}', space=sflag, size = 0x4, scoped, tag = 'scoped memory for tpu_custom_call.1']
    #allocation5 [shape = 'u8[524288]{0}', space=vmem, size = 0x80000, scoped, tag = 'input window, operand 5, single buffered']
    #allocation6 [shape = 's32[1]{0}', space=sflag, size = 0x4, scoped, tag = 'scoped memory for tpu_custom_call.1']
    #allocation7 [shape = 'u8[524288]{0}', space=vmem, size = 0x80000, scoped, tag = 'input window, operand 7, single buffered']
    #allocation8 [shape = 'u8[131072]{0}', space=vmem, size = 0x20000, scoped, tag = 'input window, operand 9, single buffered']
    #allocation9 [shape = 's32[1]{0}', space=sflag, size = 0x4, scoped, tag = 'scoped memory for tpu_custom_call.1']
    #allocation10 [shape = 'u8[12288]{0}', space=vmem, size = 0x3000, scoped, tag = 'output window, operand 0, single buffered']
    %16 = vsyncpa [#allocation3], 0
    %17 = vsyncpa [#allocation6], 0
    %18 = vsyncpa [#allocation9], 0
    %19 = vsyncpa [#allocation4], 0
    // Predicated region
    $region2: #{tpu_custom_call.1} parent=1 // pred_check
      _
    $region3: #{tpu_custom_call.1} parent=1 // pred_check_branch
      %21 = sbr.rel (0) target = $region5
    $region4: #{tpu_custom_call.1} parent=1 // pred_region
      _
    $region5: #{tpu_custom_call.1} parent=1 // pred_fallthru
      _
    // Predicated region
    $region6: #{tpu_custom_call.1} parent=1 // pred_check
      _
    $region7: #{tpu_custom_call.1} parent=1 // pred_check_branch
      %23 = sbr.rel (0) target = $region9
    $region8: #{tpu_custom_call.1} parent=1 // pred_region
      _
    $region9: #{tpu_custom_call.1} parent=1 // pred_fallthru
      _
    // Predicated region
    $region10: #{tpu_custom_call.1} parent=1 // pred_check
      _
    $region11: #{tpu_custom_call.1} parent=1 // pred_check_branch
      %25 = sbr.rel (0) target = $region13
    $region12: #{tpu_custom_call.1} parent=1 // pred_region
      _
    $region13: #{tpu_custom_call.1} parent=1 // pred_fallthru
      _
    // Predicated region
    $region14: #{tpu_custom_call.1} parent=1 // pred_check
      _
    $region15: #{tpu_custom_call.1} parent=1 // pred_check_branch
      %27 = sbr.rel (0) target = $region17
    $region16: #{tpu_custom_call.1} parent=1 // pred_region
      %s29 = ssub.s32 16384, 16384
      %30 = vsyncadd [#allocation3], %s29
      %s31 = sshll.u32 [#allocation2], 4
      %s32 = int_to_ptr.vmem [resolvable:$true] %s31
      %37 = dma.hbm_to_vmem [thread:$0]  %s3, 16384, %s32, [#allocation3], 256, 256, 16
    $region17: #{tpu_custom_call.1} parent=1 // pred_fallthru
      _
    // Predicated region
    $region18: #{tpu_custom_call.1} parent=1 // pred_check
      _
    $region19: #{tpu_custom_call.1} parent=1 // pred_check_branch
      %39 = sbr.rel (0) target = $region21
    $region20: #{tpu_custom_call.1} parent=1 // pred_region
      _
    $region21: #{tpu_custom_call.1} parent=1 // pred_fallthru
      _
    // Predicated region
    $region22: #{tpu_custom_call.1} parent=1 // pred_check
      _
    $region23: #{tpu_custom_call.1} parent=1 // pred_check_branch
      %41 = sbr.rel (0) target = $region25
    $region24: #{tpu_custom_call.1} parent=1 // pred_region
      %s43 = ssub.s32 16384, 16384
      %44 = vsyncadd [#allocation6], %s43
      %s45 = sshll.u32 [#allocation5], 4
      %s46 = int_to_ptr.vmem [resolvable:$true] %s45
      %51 = dma.hbm_to_vmem [thread:$0]  %s5, 16384, %s46, [#allocation6], 256, 256, 16
    $region25: #{tpu_custom_call.1} parent=1 // pred_fallthru
      _
    // Predicated region
    $region26: #{tpu_custom_call.1} parent=1 // pred_check
      _
    $region27: #{tpu_custom_call.1} parent=1 // pred_check_branch
      %53 = sbr.rel (0) target = $region29
    $region28: #{tpu_custom_call.1} parent=1 // pred_region
      _
    $region29: #{tpu_custom_call.1} parent=1 // pred_fallthru
      _
    // Predicated region
    $region30: #{tpu_custom_call.1} parent=1 // pred_check
      _
    $region31: #{tpu_custom_call.1} parent=1 // pred_check_branch
      %55 = sbr.rel (0) target = $region33
    $region32: #{tpu_custom_call.1} parent=1 // pred_region
      %s57 = ssub.s32 16384, 16384
      %58 = vsyncadd [#allocation6], %s57
      %s59 = sshll.u32 [#allocation7], 4
      %s60 = int_to_ptr.vmem [resolvable:$true] %s59
      %65 = dma.hbm_to_vmem [thread:$0]  %s7, 16384, %s60, [#allocation6], 256, 256, 16
    $region33: #{tpu_custom_call.1} parent=1 // pred_fallthru
      _
    // Predicated region
    $region34: #{tpu_custom_call.1} parent=1 // pred_check
      _
    $region35: #{tpu_custom_call.1} parent=1 // pred_check_branch
      %67 = sbr.rel (0) target = $region37
    $region36: #{tpu_custom_call.1} parent=1 // pred_region
      _
    $region37: #{tpu_custom_call.1} parent=1 // pred_fallthru
      _
    // Predicated region
    $region38: #{tpu_custom_call.1} parent=1 // pred_check
      _
    $region39: #{tpu_custom_call.1} parent=1 // pred_check_branch
      %69 = sbr.rel (0) target = $region41
    $region40: #{tpu_custom_call.1} parent=1 // pred_region
      %s71 = ssub.s32 4096, 4096
      %72 = vsyncadd [#allocation9], %s71
      %s73 = sshll.u32 [#allocation8], 4
      %s74 = int_to_ptr.vmem [resolvable:$true] %s73
      %79 = dma.hbm_to_vmem [thread:$0]  %s9, 4096, %s74, [#allocation9], 64, 64, 4
    $region41: #{tpu_custom_call.1} parent=1 // pred_fallthru
      _
    // Predicated region
    $region42: #{tpu_custom_call.1} parent=1 // pred_check
      _
    $region43: #{tpu_custom_call.1} parent=1 // pred_check_branch
      %81 = sbr.rel (0) target = $region45
    $region44: #{tpu_custom_call.1} parent=1 // pred_region
      _
    $region45: #{tpu_custom_call.1} parent=1 // pred_fallthru
      _
    // Predicated region
    $region46: #{tpu_custom_call.1} parent=1 // pred_check
      _
    $region47: #{tpu_custom_call.1} parent=1 // pred_check_branch
      %83 = sbr.rel (0) target = $region49
    $region48: #{tpu_custom_call.1} parent=1 // pred_region
      %84 = dma.done [#allocation3], 16384
    $region49: #{tpu_custom_call.1} parent=1 // pred_fallthru
      _
    // Predicated region
    $region50: #{tpu_custom_call.1} parent=1 // pred_check
      _
    $region51: #{tpu_custom_call.1} parent=1 // pred_check_branch
      %86 = sbr.rel (0) target = $region53
    $region52: #{tpu_custom_call.1} parent=1 // pred_region
      %87 = dma.done [#allocation6], 16384
    $region53: #{tpu_custom_call.1} parent=1 // pred_fallthru
      _
    // Predicated region
    $region54: #{tpu_custom_call.1} parent=1 // pred_check
      _
    $region55: #{tpu_custom_call.1} parent=1 // pred_check_branch
      %89 = sbr.rel (0) target = $region57
    $region56: #{tpu_custom_call.1} parent=1 // pred_region
      %90 = dma.done [#allocation6], 16384
    $region57: #{tpu_custom_call.1} parent=1 // pred_fallthru
      _
    // Predicated region
    $region58: #{tpu_custom_call.1} parent=1 // pred_check
      _
    $region59: #{tpu_custom_call.1} parent=1 // pred_check_branch
      %92 = sbr.rel (0) target = $region61
    $region60: #{tpu_custom_call.1} parent=1 // pred_region
      %93 = dma.done [#allocation9], 4096
    $region61: #{tpu_custom_call.1} parent=1 // pred_fallthru
      _
    %v95 = vld [vmem:[%s0] sm:$0xff]
    %v96 = vld [vmem:[%s0 + $0x8] sm:$0xff]
    %v97 = vld [vmem:[%s0 + $0x10] sm:$0xff]
    %v98 = vpack.c.bf16 %v96, %v95
    %v99 = vpack.c.bf16 %v97, %v97
    %v100 = vld [vmem:[%s1] sm:$0xff]
    %v101 = vld [vmem:[%s1 + $0x8] sm:$0xff]
    %v102 = vld [vmem:[%s1 + $0x10] sm:$0xff]
    %v103 = vld [vmem:[%s1 + $0x18] sm:$0xff]
    %v104 = vld [vmem:[%s2] sm:$0xf]
    %v106 = vlaneseq
    %v107 = vshrl.u32 %v106, 7
    %v108 = vsub.s32 0, %v107
    %v109 = vrot.slane %v104, %v108
    %v110 = vlaneseq
    %v111 = vshrl.u32 %v110, 7
    %v112 = vsub.s32 1, %v111
    %v113 = vrot.slane %v104, %v112
    %v114 = vlaneseq
    %v115 = vshrl.u32 %v114, 7
    %v116 = vsub.s32 2, %v115
    %v117 = vrot.slane %v104, %v116
    %v118 = vlaneseq
    %v119 = vshrl.u32 %v118, 7
    %v120 = vsub.s32 3, %v119
    %v121 = vrot.slane %v104, %v120
    %v130 = vunpack.c.l.b16 %v100
    %v131 = vunpack.c.h.b16 %v100
    %v132 = vunpack.c.l.b16 %v101
    %v133 = vunpack.c.h.b16 %v101
    %v134 = vunpack.c.l.b16 %v102
    %v135 = vunpack.c.h.b16 %v102
    %v136 = vunpack.c.l.b16 %v103
    %v137 = vunpack.c.h.b16 %v103
    %v138 = vpack.c.b16 %v134, %v130
    %v139 = vpack.c.b16 %v135, %v131
    %v140 = vpack.c.b16 %v136, %v132
    %v141 = vpack.c.b16 %v137, %v133
    %vm146 = vcmask 130048
    %v148 = vsel %vm146, %v98, 0
    %v151 = vsel %vm146, %v99, 0
    %153 = vmatprep.subr.bf16.mxu0 0
    %154 = vmatpush1.bf16.msra.mxu0 0
    %155 = vmatprep.subr.bf16.mxu0 0
    %156 = vmatpush1.bf16.msra.mxu0 0
    %157 = vmatprep.subr.bf16.mxu0 0
    %158 = vmatpush1.bf16.msra.mxu0 0
    %159 = vmatprep.subr.bf16.mxu0 0
    %160 = vmatpush1.bf16.msra.mxu0 0
    %161 = vmatprep.subr.bf16.mxu0 0
    %162 = vmatpush1.bf16.msra.mxu0 0
    %163 = vmatprep.subr.bf16.mxu0 0
    %164 = vmatpush1.bf16.msra.mxu0 0
    %165 = vmatprep.subr.bf16.mxu0 0
    %166 = vmatpush1.bf16.msra.mxu0 0
    %167 = vmatprep.subr.bf16.mxu0 %v139
    %168 = vmatpush1.bf16.msra.mxu0 %v138
    %169 = vmatprep.subr.bf16.mxu0 0
    %170 = vmatpush2.bf16.msra.mxu0 0
    %171 = vmatprep.subr.bf16.mxu0 0
    %172 = vmatpush2.bf16.msra.mxu0 0
    %173 = vmatprep.subr.bf16.mxu0 0
    %174 = vmatpush2.bf16.msra.mxu0 0
    %175 = vmatprep.subr.bf16.mxu0 0
    %176 = vmatpush2.bf16.msra.mxu0 0
    %177 = vmatprep.subr.bf16.mxu0 0
    %178 = vmatpush2.bf16.msra.mxu0 0
    %179 = vmatprep.subr.bf16.mxu0 0
    %180 = vmatpush2.bf16.msra.mxu0 0
    %181 = vmatprep.subr.bf16.mxu0 0
    %182 = vmatpush2.bf16.msra.mxu0 0
    %183 = vmatprep.subr.bf16.mxu0 0
    %184 = vmatpush2.bf16.msra.mxu0 0
    %185 = vmatprep.mubr.bf16.mxu0 0
    %186 = vmatmul.mubr.bf16.gmra.mxu0 %v148
    %v187 = vpop.f32.mrf.mxu0
    %v188 = vadd.f32 %v109, %v187
    %v189 = vpop.f32.mrf.mxu0
    %v190 = vadd.f32 %v113, %v189
    %v191 = vpop.f32.mrf.mxu0
    %v192 = vadd.f32 %v109, %v191
    %v193 = vpop.f32.mrf.mxu0
    %v194 = vadd.f32 %v113, %v193
    %195 = vmatprep.mubr.bf16.mxu0 0
    %196 = vmatmul.mubr.bf16.gmra.mxu0 %v151
    %v197 = vpop.f32.mrf.mxu0
    %v198 = vadd.f32 %v109, %v197
    %v199 = vpop.f32.mrf.mxu0
    %v200 = vadd.f32 %v113, %v199
    %v201 = vpop.f32.mrf.mxu0
    %v202 = vpop.f32.mrf.mxu0
    %203 = vdwg.mxu0
    %204 = vmatprep.subr.bf16.mxu0 0
    %205 = vmatpush1.bf16.msra.mxu0 0
    %206 = vmatprep.subr.bf16.mxu0 0
    %207 = vmatpush1.bf16.msra.mxu0 0
    %208 = vmatprep.subr.bf16.mxu0 0
    %209 = vmatpush1.bf16.msra.mxu0 0
    %210 = vmatprep.subr.bf16.mxu0 0
    %211 = vmatpush1.bf16.msra.mxu0 0
    %212 = vmatprep.subr.bf16.mxu0 0
    %213 = vmatpush1.bf16.msra.mxu0 0
    %214 = vmatprep.subr.bf16.mxu0 0
    %215 = vmatpush1.bf16.msra.mxu0 0
    %216 = vmatprep.subr.bf16.mxu0 0
    %217 = vmatpush1.bf16.msra.mxu0 0
    %218 = vmatprep.subr.bf16.mxu0 %v141
    %219 = vmatpush1.bf16.msra.mxu0 %v140
    %220 = vmatprep.subr.bf16.mxu0 0
    %221 = vmatpush2.bf16.msra.mxu0 0
    %222 = vmatprep.subr.bf16.mxu0 0
    %223 = vmatpush2.bf16.msra.mxu0 0
    %224 = vmatprep.subr.bf16.mxu0 0
    %225 = vmatpush2.bf16.msra.mxu0 0
    %226 = vmatprep.subr.bf16.mxu0 0
    %227 = vmatpush2.bf16.msra.mxu0 0
    %228 = vmatprep.subr.bf16.mxu0 0
    %229 = vmatpush2.bf16.msra.mxu0 0
    %230 = vmatprep.subr.bf16.mxu0 0
    %231 = vmatpush2.bf16.msra.mxu0 0
    %232 = vmatprep.subr.bf16.mxu0 0
    %233 = vmatpush2.bf16.msra.mxu0 0
    %234 = vmatprep.subr.bf16.mxu0 0
    %235 = vmatpush2.bf16.msra.mxu0 0
    %236 = vmatprep.mubr.bf16.mxu0 0
    %237 = vmatmul.mubr.bf16.gmra.mxu0 %v148
    %v238 = vpop.f32.mrf.mxu0
    %v239 = vadd.f32 %v117, %v238
    %v240 = vpop.f32.mrf.mxu0
    %v241 = vadd.f32 %v121, %v240
    %v242 = vpop.f32.mrf.mxu0
    %v243 = vadd.f32 %v117, %v242
    %v244 = vpop.f32.mrf.mxu0
    %v245 = vadd.f32 %v121, %v244
    %246 = vmatprep.mubr.bf16.mxu0 0
    %247 = vmatmul.mubr.bf16.gmra.mxu0 %v151
    %v248 = vpop.f32.mrf.mxu0
    %v249 = vadd.f32 %v117, %v248
    %v250 = vpop.f32.mrf.mxu0
    %v251 = vadd.f32 %v121, %v250
    %v252 = vpop.f32.mrf.mxu0
    %v253 = vpop.f32.mrf.mxu0
    %254 = vdwg.mxu0
    %v255 = vmax.f32 %v188, 0.0
    %v256 = vmax.f32 %v190, 0.0
    %v257 = vmax.f32 %v239, 0.0
    %v258 = vmax.f32 %v241, 0.0
    %v259 = vmax.f32 %v192, 0.0
    %v260 = vmax.f32 %v194, 0.0
    %v261 = vmax.f32 %v243, 0.0
    %v262 = vmax.f32 %v245, 0.0
    %v263 = vmax.f32 %v198, 0.0
    %v264 = vmax.f32 %v200, 0.0
    %v265 = vmax.f32 %v249, 0.0
    %v266 = vmax.f32 %v251, 0.0
    %v267 = vpack.c.bf16 %v259, %v255
    %v268 = vpack.c.bf16 %v260, %v256
    %v269 = vpack.c.bf16 %v261, %v257
    %v270 = vpack.c.bf16 %v262, %v258
    %v271 = vpack.c.bf16 %v263, %v263
    %v272 = vpack.c.bf16 %v264, %v264
    %v273 = vpack.c.bf16 %v265, %v265
    %v274 = vpack.c.bf16 %v266, %v266
    %v275 = vld [vmem:[#allocation2] sm:$0xff]
    %v276 = vld [vmem:[#allocation2 + $0x8] sm:$0xff]
    %v277 = vld [vmem:[#allocation2 + $0x10] sm:$0xff]
    %v278 = vld [vmem:[#allocation2 + $0x18] sm:$0xff]
    %v279 = vld [vmem:[#allocation2 + $0x20] sm:$0xff]
    %v280 = vld [vmem:[#allocation2 + $0x28] sm:$0xff]
    %v281 = vld [vmem:[#allocation2 + $0x30] sm:$0xff]
    %v282 = vld [vmem:[#allocation2 + $0x38] sm:$0xff]
    %v283 = vld [vmem:[#allocation2 + $0x40] sm:$0xff]
    %v284 = vld [vmem:[#allocation2 + $0x48] sm:$0xff]
    %v285 = vld [vmem:[#allocation2 + $0x50] sm:$0xff]
    %v286 = vld [vmem:[#allocation2 + $0x58] sm:$0xff]
    %v287 = vld [vmem:[#allocation2 + $0x60] sm:$0xff]
    %v288 = vld [vmem:[#allocation2 + $0x68] sm:$0xff]
    %v289 = vld [vmem:[#allocation2 + $0x70] sm:$0xff]
    %v290 = vld [vmem:[#allocation2 + $0x78] sm:$0xff]
    %v291 = vld [vmem:[#allocation2 + $0x80] sm:$0xff]
    %v292 = vld [vmem:[#allocation2 + $0x88] sm:$0xff]
    %v293 = vld [vmem:[#allocation2 + $0x90] sm:$0xff]
    %v294 = vld [vmem:[#allocation2 + $0x98] sm:$0xff]
    %v295 = vld [vmem:[#allocation2 + $0xa0] sm:$0xff]
    %v296 = vld [vmem:[#allocation2 + $0xa8] sm:$0xff]
    %v297 = vld [vmem:[#allocation2 + $0xb0] sm:$0xff]
    %v298 = vld [vmem:[#allocation2 + $0xb8] sm:$0xff]
    %v299 = vld [vmem:[#allocation2 + $0xc0] sm:$0xff]
    %v300 = vld [vmem:[#allocation2 + $0xc8] sm:$0xff]
    %v301 = vld [vmem:[#allocation2 + $0xd0] sm:$0xff]
    %v302 = vld [vmem:[#allocation2 + $0xd8] sm:$0xff]
    %v303 = vld [vmem:[#allocation2 + $0xe0] sm:$0xff]
    %v304 = vld [vmem:[#allocation2 + $0xe8] sm:$0xff]
    %v305 = vld [vmem:[#allocation2 + $0xf0] sm:$0xff]
    %v306 = vld [vmem:[#allocation2 + $0xf8] sm:$0xff]
    %v307 = vld [vmem:[#allocation2 + $0x100] sm:$0xff]
    %v308 = vld [vmem:[#allocation2 + $0x108] sm:$0xff]
    %v309 = vld [vmem:[#allocation2 + $0x110] sm:$0xff]
    %v310 = vld [vmem:[#allocation2 + $0x118] sm:$0xff]
    %v311 = vld [vmem:[#allocation2 + $0x120] sm:$0xff]
    %v312 = vld [vmem:[#allocation2 + $0x128] sm:$0xff]
    %v313 = vld [vmem:[#allocation2 + $0x130] sm:$0xff]
    %v314 = vld [vmem:[#allocation2 + $0x138] sm:$0xff]
    %v315 = vld [vmem:[#allocation2 + $0x140] sm:$0xff]
    %v316 = vld [vmem:[#allocation2 + $0x148] sm:$0xff]
    %v317 = vld [vmem:[#allocation2 + $0x150] sm:$0xff]
    %v318 = vld [vmem:[#allocation2 + $0x158] sm:$0xff]
    %v319 = vld [vmem:[#allocation2 + $0x160] sm:$0xff]
    %v320 = vld [vmem:[#allocation2 + $0x168] sm:$0xff]
    %v321 = vld [vmem:[#allocation2 + $0x170] sm:$0xff]
    %v322 = vld [vmem:[#allocation2 + $0x178] sm:$0xff]
    %v323 = vld [vmem:[#allocation2 + $0x180] sm:$0xff]
    %v324 = vld [vmem:[#allocation2 + $0x188] sm:$0xff]
    %v325 = vld [vmem:[#allocation2 + $0x190] sm:$0xff]
    %v326 = vld [vmem:[#allocation2 + $0x198] sm:$0xff]
    %v327 = vld [vmem:[#allocation2 + $0x1a0] sm:$0xff]
    %v328 = vld [vmem:[#allocation2 + $0x1a8] sm:$0xff]
    %v329 = vld [vmem:[#allocation2 + $0x1b0] sm:$0xff]
    %v330 = vld [vmem:[#allocation2 + $0x1b8] sm:$0xff]
    %v331 = vld [vmem:[#allocation2 + $0x1c0] sm:$0xff]
    %v332 = vld [vmem:[#allocation2 + $0x1c8] sm:$0xff]
    %v333 = vld [vmem:[#allocation2 + $0x1d0] sm:$0xff]
    %v334 = vld [vmem:[#allocation2 + $0x1d8] sm:$0xff]
    %v335 = vld [vmem:[#allocation2 + $0x1e0] sm:$0xff]
    %v336 = vld [vmem:[#allocation2 + $0x1e8] sm:$0xff]
    %v337 = vld [vmem:[#allocation2 + $0x1f0] sm:$0xff]
    %v338 = vld [vmem:[#allocation2 + $0x1f8] sm:$0xff]
    %v339 = vld [vmem:[#allocation2 + $0x200] sm:$0xff]
    %v340 = vld [vmem:[#allocation2 + $0x208] sm:$0xff]
    %v341 = vld [vmem:[#allocation2 + $0x210] sm:$0xff]
    %v342 = vld [vmem:[#allocation2 + $0x218] sm:$0xff]
    %v343 = vld [vmem:[#allocation2 + $0x220] sm:$0xff]
    %v344 = vld [vmem:[#allocation2 + $0x228] sm:$0xff]
    %v345 = vld [vmem:[#allocation2 + $0x230] sm:$0xff]
    %v346 = vld [vmem:[#allocation2 + $0x238] sm:$0xff]
    %v347 = vld [vmem:[#allocation2 + $0x240] sm:$0xff]
    %v348 = vld [vmem:[#allocation2 + $0x248] sm:$0xff]
    %v349 = vld [vmem:[#allocation2 + $0x250] sm:$0xff]
    %v350 = vld [vmem:[#allocation2 + $0x258] sm:$0xff]
    %v351 = vld [vmem:[#allocation2 + $0x260] sm:$0xff]
    %v352 = vld [vmem:[#allocation2 + $0x268] sm:$0xff]
    %v353 = vld [vmem:[#allocation2 + $0x270] sm:$0xff]
    %v354 = vld [vmem:[#allocation2 + $0x278] sm:$0xff]
    %v355 = vld [vmem:[#allocation2 + $0x280] sm:$0xff]
    %v356 = vld [vmem:[#allocation2 + $0x288] sm:$0xff]
    %v357 = vld [vmem:[#allocation2 + $0x290] sm:$0xff]
    %v358 = vld [vmem:[#allocation2 + $0x298] sm:$0xff]
    %v359 = vld [vmem:[#allocation2 + $0x2a0] sm:$0xff]
    %v360 = vld [vmem:[#allocation2 + $0x2a8] sm:$0xff]
    %v361 = vld [vmem:[#allocation2 + $0x2b0] sm:$0xff]
    %v362 = vld [vmem:[#allocation2 + $0x2b8] sm:$0xff]
    %v363 = vld [vmem:[#allocation2 + $0x2c0] sm:$0xff]
    %v364 = vld [vmem:[#allocation2 + $0x2c8] sm:$0xff]
    %v365 = vld [vmem:[#allocation2 + $0x2d0] sm:$0xff]
    %v366 = vld [vmem:[#allocation2 + $0x2d8] sm:$0xff]
    %v367 = vld [vmem:[#allocation2 + $0x2e0] sm:$0xff]
    %v368 = vld [vmem:[#allocation2 + $0x2e8] sm:$0xff]
    %v369 = vld [vmem:[#allocation2 + $0x2f0] sm:$0xff]
    %v370 = vld [vmem:[#allocation2 + $0x2f8] sm:$0xff]
    %v371 = vld [vmem:[#allocation2 + $0x300] sm:$0xff]
    %v372 = vld [vmem:[#allocation2 + $0x308] sm:$0xff]
    %v373 = vld [vmem:[#allocation2 + $0x310] sm:$0xff]
    %v374 = vld [vmem:[#allocation2 + $0x318] sm:$0xff]
    %v375 = vld [vmem:[#allocation2 + $0x320] sm:$0xff]
    %v376 = vld [vmem:[#allocation2 + $0x328] sm:$0xff]
    %v377 = vld [vmem:[#allocation2 + $0x330] sm:$0xff]
    %v378 = vld [vmem:[#allocation2 + $0x338] sm:$0xff]
    %v379 = vld [vmem:[#allocation2 + $0x340] sm:$0xff]
    %v380 = vld [vmem:[#allocation2 + $0x348] sm:$0xff]
    %v381 = vld [vmem:[#allocation2 + $0x350] sm:$0xff]
    %v382 = vld [vmem:[#allocation2 + $0x358] sm:$0xff]
    %v383 = vld [vmem:[#allocation2 + $0x360] sm:$0xff]
    %v384 = vld [vmem:[#allocation2 + $0x368] sm:$0xff]
    %v385 = vld [vmem:[#allocation2 + $0x370] sm:$0xff]
    %v386 = vld [vmem:[#allocation2 + $0x378] sm:$0xff]
    %v387 = vld [vmem:[#allocation2 + $0x380] sm:$0xff]
    %v388 = vld [vmem:[#allocation2 + $0x388] sm:$0xff]
    %v389 = vld [vmem:[#allocation2 + $0x390] sm:$0xff]
    %v390 = vld [vmem:[#allocation2 + $0x398] sm:$0xff]
    %v391 = vld [vmem:[#allocation2 + $0x3a0] sm:$0xff]
    %v392 = vld [vmem:[#allocation2 + $0x3a8] sm:$0xff]
    %v393 = vld [vmem:[#allocation2 + $0x3b0] sm:$0xff]
    %v394 = vld [vmem:[#allocation2 + $0x3b8] sm:$0xff]
    %v395 = vld [vmem:[#allocation2 + $0x3c0] sm:$0xff]
    %v396 = vld [vmem:[#allocation2 + $0x3c8] sm:$0xff]
    %v397 = vld [vmem:[#allocation2 + $0x3d0] sm:$0xff]
    %v398 = vld [vmem:[#allocation2 + $0x3d8] sm:$0xff]
    %v399 = vld [vmem:[#allocation2 + $0x3e0] sm:$0xff]
    %v400 = vld [vmem:[#allocation2 + $0x3e8] sm:$0xff]
    %v401 = vld [vmem:[#allocation2 + $0x3f0] sm:$0xff]
    %v402 = vld [vmem:[#allocation2 + $0x3f8] sm:$0xff]
    %v403 = vld [vmem:[%s4] sm:$0xf]
    %v405 = vlaneseq
    %v406 = vshrl.u32 %v405, 7
    %v407 = vsub.s32 0, %v406
    %v408 = vrot.slane %v403, %v407
    %v409 = vlaneseq
    %v410 = vshrl.u32 %v409, 7
    %v411 = vsub.s32 1, %v410
    %v412 = vrot.slane %v403, %v411
    %v413 = vlaneseq
    %v414 = vshrl.u32 %v413, 7
    %v415 = vsub.s32 2, %v414
    %v416 = vrot.slane %v403, %v415
    %v417 = vlaneseq
    %v418 = vshrl.u32 %v417, 7
    %v419 = vsub.s32 3, %v418
    %v420 = vrot.slane %v403, %v419
    %v553 = vunpack.c.l.b16 %v275
    %v554 = vunpack.c.h.b16 %v275
    %v555 = vunpack.c.l.b16 %v276
    %v556 = vunpack.c.h.b16 %v276
    %v557 = vunpack.c.l.b16 %v277
    %v558 = vunpack.c.h.b16 %v277
    %v559 = vunpack.c.l.b16 %v278
    %v560 = vunpack.c.h.b16 %v278
    %v561 = vunpack.c.l.b16 %v279
    %v562 = vunpack.c.h.b16 %v279
    %v563 = vunpack.c.l.b16 %v280
    %v564 = vunpack.c.h.b16 %v280
    %v565 = vunpack.c.l.b16 %v281
    %v566 = vunpack.c.h.b16 %v281
    %v567 = vunpack.c.l.b16 %v282
    %v568 = vunpack.c.h.b16 %v282
    %v569 = vunpack.c.l.b16 %v283
    %v570 = vunpack.c.h.b16 %v283
    %v571 = vunpack.c.l.b16 %v284
    %v572 = vunpack.c.h.b16 %v284
    %v573 = vunpack.c.l.b16 %v285
    %v574 = vunpack.c.h.b16 %v285
    %v575 = vunpack.c.l.b16 %v286
    %v576 = vunpack.c.h.b16 %v286
    %v577 = vunpack.c.l.b16 %v287
    %v578 = vunpack.c.h.b16 %v287
    %v579 = vunpack.c.l.b16 %v288
    %v580 = vunpack.c.h.b16 %v288
    %v581 = vunpack.c.l.b16 %v289
    %v582 = vunpack.c.h.b16 %v289
    %v583 = vunpack.c.l.b16 %v290
    %v584 = vunpack.c.h.b16 %v290
    %v585 = vunpack.c.l.b16 %v291
    %v586 = vunpack.c.h.b16 %v291
    %v587 = vunpack.c.l.b16 %v292
    %v588 = vunpack.c.h.b16 %v292
    %v589 = vunpack.c.l.b16 %v293
    %v590 = vunpack.c.h.b16 %v293
    %v591 = vunpack.c.l.b16 %v294
    %v592 = vunpack.c.h.b16 %v294
    %v593 = vunpack.c.l.b16 %v295
    %v594 = vunpack.c.h.b16 %v295
    %v595 = vunpack.c.l.b16 %v296
    %v596 = vunpack.c.h.b16 %v296
    %v597 = vunpack.c.l.b16 %v297
    %v598 = vunpack.c.h.b16 %v297
    %v599 = vunpack.c.l.b16 %v298
    %v600 = vunpack.c.h.b16 %v298
    %v601 = vunpack.c.l.b16 %v299
    %v602 = vunpack.c.h.b16 %v299
    %v603 = vunpack.c.l.b16 %v300
    %v604 = vunpack.c.h.b16 %v300
    %v605 = vunpack.c.l.b16 %v301
    %v606 = vunpack.c.h.b16 %v301
    %v607 = vunpack.c.l.b16 %v302
    %v608 = vunpack.c.h.b16 %v302
    %v609 = vunpack.c.l.b16 %v303
    %v610 = vunpack.c.h.b16 %v303
    %v611 = vunpack.c.l.b16 %v304
    %v612 = vunpack.c.h.b16 %v304
    %v613 = vunpack.c.l.b16 %v305
    %v614 = vunpack.c.h.b16 %v305
    %v615 = vunpack.c.l.b16 %v306
    %v616 = vunpack.c.h.b16 %v306
    %v617 = vunpack.c.l.b16 %v307
    %v618 = vunpack.c.h.b16 %v307
    %v619 = vunpack.c.l.b16 %v308
    %v620 = vunpack.c.h.b16 %v308
    %v621 = vunpack.c.l.b16 %v309
    %v622 = vunpack.c.h.b16 %v309
    %v623 = vunpack.c.l.b16 %v310
    %v624 = vunpack.c.h.b16 %v310
    %v625 = vunpack.c.l.b16 %v311
    %v626 = vunpack.c.h.b16 %v311
    %v627 = vunpack.c.l.b16 %v312
    %v628 = vunpack.c.h.b16 %v312
    %v629 = vunpack.c.l.b16 %v313
    %v630 = vunpack.c.h.b16 %v313
    %v631 = vunpack.c.l.b16 %v314
    %v632 = vunpack.c.h.b16 %v314
    %v633 = vunpack.c.l.b16 %v315
    %v634 = vunpack.c.h.b16 %v315
    %v635 = vunpack.c.l.b16 %v316
    %v636 = vunpack.c.h.b16 %v316
    %v637 = vunpack.c.l.b16 %v317
    %v638 = vunpack.c.h.b16 %v317
    %v639 = vunpack.c.l.b16 %v318
    %v640 = vunpack.c.h.b16 %v318
    %v641 = vunpack.c.l.b16 %v319
    %v642 = vunpack.c.h.b16 %v319
    %v643 = vunpack.c.l.b16 %v320
    %v644 = vunpack.c.h.b16 %v320
    %v645 = vunpack.c.l.b16 %v321
    %v646 = vunpack.c.h.b16 %v321
    %v647 = vunpack.c.l.b16 %v322
    %v648 = vunpack.c.h.b16 %v322
    %v649 = vunpack.c.l.b16 %v323
    %v650 = vunpack.c.h.b16 %v323
    %v651 = vunpack.c.l.b16 %v324
    %v652 = vunpack.c.h.b16 %v324
    %v653 = vunpack.c.l.b16 %v325
    %v654 = vunpack.c.h.b16 %v325
    %v655 = vunpack.c.l.b16 %v326
    %v656 = vunpack.c.h.b16 %v326
    %v657 = vunpack.c.l.b16 %v327
    %v658 = vunpack.c.h.b16 %v327
    %v659 = vunpack.c.l.b16 %v328
    %v660 = vunpack.c.h.b16 %v328
    %v661 = vunpack.c.l.b16 %v329
    %v662 = vunpack.c.h.b16 %v329
    %v663 = vunpack.c.l.b16 %v330
    %v664 = vunpack.c.h.b16 %v330
    %v665 = vunpack.c.l.b16 %v331
    %v666 = vunpack.c.h.b16 %v331
    %v667 = vunpack.c.l.b16 %v332
    %v668 = vunpack.c.h.b16 %v332
    %v669 = vunpack.c.l.b16 %v333
    %v670 = vunpack.c.h.b16 %v333
    %v671 = vunpack.c.l.b16 %v334
    %v672 = vunpack.c.h.b16 %v334
    %v673 = vunpack.c.l.b16 %v335
    %v674 = vunpack.c.h.b16 %v335
    %v675 = vunpack.c.l.b16 %v336
    %v676 = vunpack.c.h.b16 %v336
    %v677 = vunpack.c.l.b16 %v337
    %v678 = vunpack.c.h.b16 %v337
    %v679 = vunpack.c.l.b16 %v338
    %v680 = vunpack.c.h.b16 %v338
    %v681 = vunpack.c.l.b16 %v339
    %v682 = vunpack.c.h.b16 %v339
    %v683 = vunpack.c.l.b16 %v340
    %v684 = vunpack.c.h.b16 %v340
    %v685 = vunpack.c.l.b16 %v341
    %v686 = vunpack.c.h.b16 %v341
    %v687 = vunpack.c.l.b16 %v342
    %v688 = vunpack.c.h.b16 %v342
    %v689 = vunpack.c.l.b16 %v343
    %v690 = vunpack.c.h.b16 %v343
    %v691 = vunpack.c.l.b16 %v344
    %v692 = vunpack.c.h.b16 %v344
    %v693 = vunpack.c.l.b16 %v345
    %v694 = vunpack.c.h.b16 %v345
    %v695 = vunpack.c.l.b16 %v346
    %v696 = vunpack.c.h.b16 %v346
    %v697 = vunpack.c.l.b16 %v347
    %v698 = vunpack.c.h.b16 %v347
    %v699 = vunpack.c.l.b16 %v348
    %v700 = vunpack.c.h.b16 %v348
    %v701 = vunpack.c.l.b16 %v349
    %v702 = vunpack.c.h.b16 %v349
    %v703 = vunpack.c.l.b16 %v350
    %v704 = vunpack.c.h.b16 %v350
    %v705 = vunpack.c.l.b16 %v351
    %v706 = vunpack.c.h.b16 %v351
    %v707 = vunpack.c.l.b16 %v352
    %v708 = vunpack.c.h.b16 %v352
    %v709 = vunpack.c.l.b16 %v353
    %v710 = vunpack.c.h.b16 %v353
    %v711 = vunpack.c.l.b16 %v354
    %v712 = vunpack.c.h.b16 %v354
    %v713 = vunpack.c.l.b16 %v355
    %v714 = vunpack.c.h.b16 %v355
    %v715 = vunpack.c.l.b16 %v356
    %v716 = vunpack.c.h.b16 %v356
    %v717 = vunpack.c.l.b16 %v357
    %v718 = vunpack.c.h.b16 %v357
    %v719 = vunpack.c.l.b16 %v358
    %v720 = vunpack.c.h.b16 %v358
    %v721 = vunpack.c.l.b16 %v359
    %v722 = vunpack.c.h.b16 %v359
    %v723 = vunpack.c.l.b16 %v360
    %v724 = vunpack.c.h.b16 %v360
    %v725 = vunpack.c.l.b16 %v361
    %v726 = vunpack.c.h.b16 %v361
    %v727 = vunpack.c.l.b16 %v362
    %v728 = vunpack.c.h.b16 %v362
    %v729 = vunpack.c.l.b16 %v363
    %v730 = vunpack.c.h.b16 %v363
    %v731 = vunpack.c.l.b16 %v364
    %v732 = vunpack.c.h.b16 %v364
    %v733 = vunpack.c.l.b16 %v365
    %v734 = vunpack.c.h.b16 %v365
    %v735 = vunpack.c.l.b16 %v366
    %v736 = vunpack.c.h.b16 %v366
    %v737 = vunpack.c.l.b16 %v367
    %v738 = vunpack.c.h.b16 %v367
    %v739 = vunpack.c.l.b16 %v368
    %v740 = vunpack.c.h.b16 %v368
    %v741 = vunpack.c.l.b16 %v369
    %v742 = vunpack.c.h.b16 %v369
    %v743 = vunpack.c.l.b16 %v370
    %v744 = vunpack.c.h.b16 %v370
    %v745 = vunpack.c.l.b16 %v371
    %v746 = vunpack.c.h.b16 %v371
    %v747 = vunpack.c.l.b16 %v372
    %v748 = vunpack.c.h.b16 %v372
    %v749 = vunpack.c.l.b16 %v373
    %v750 = vunpack.c.h.b16 %v373
    %v751 = vunpack.c.l.b16 %v374
    %v752 = vunpack.c.h.b16 %v374
    %v753 = vunpack.c.l.b16 %v375
    %v754 = vunpack.c.h.b16 %v375
    %v755 = vunpack.c.l.b16 %v376
    %v756 = vunpack.c.h.b16 %v376
    %v757 = vunpack.c.l.b16 %v377
    %v758 = vunpack.c.h.b16 %v377
    %v759 = vunpack.c.l.b16 %v378
    %v760 = vunpack.c.h.b16 %v378
    %v761 = vunpack.c.l.b16 %v379
    %v762 = vunpack.c.h.b16 %v379
    %v763 = vunpack.c.l.b16 %v380
    %v764 = vunpack.c.h.b16 %v380
    %v765 = vunpack.c.l.b16 %v381
    %v766 = vunpack.c.h.b16 %v381
    %v767 = vunpack.c.l.b16 %v382
    %v768 = vunpack.c.h.b16 %v382
    %v769 = vunpack.c.l.b16 %v383
    %v770 = vunpack.c.h.b16 %v383
    %v771 = vunpack.c.l.b16 %v384
    %v772 = vunpack.c.h.b16 %v384
    %v773 = vunpack.c.l.b16 %v385
    %v774 = vunpack.c.h.b16 %v385
    %v775 = vunpack.c.l.b16 %v386
    %v776 = vunpack.c.h.b16 %v386
    %v777 = vunpack.c.l.b16 %v387
    %v778 = vunpack.c.h.b16 %v387
    %v779 = vunpack.c.l.b16 %v388
    %v780 = vunpack.c.h.b16 %v388
    %v781 = vunpack.c.l.b16 %v389
    %v782 = vunpack.c.h.b16 %v389
    %v783 = vunpack.c.l.b16 %v390
    %v784 = vunpack.c.h.b16 %v390
    %v785 = vunpack.c.l.b16 %v391
    %v786 = vunpack.c.h.b16 %v391
    %v787 = vunpack.c.l.b16 %v392
    %v788 = vunpack.c.h.b16 %v392
    %v789 = vunpack.c.l.b16 %v393
    %v790 = vunpack.c.h.b16 %v393
    %v791 = vunpack.c.l.b16 %v394
    %v792 = vunpack.c.h.b16 %v394
    %v793 = vunpack.c.l.b16 %v395
    %v794 = vunpack.c.h.b16 %v395
    %v795 = vunpack.c.l.b16 %v396
    %v796 = vunpack.c.h.b16 %v396
    %v797 = vunpack.c.l.b16 %v397
    %v798 = vunpack.c.h.b16 %v397
    %v799 = vunpack.c.l.b16 %v398
    %v800 = vunpack.c.h.b16 %v398
    %v801 = vunpack.c.l.b16 %v399
    %v802 = vunpack.c.h.b16 %v399
    %v803 = vunpack.c.l.b16 %v400
    %v804 = vunpack.c.h.b16 %v400
    %v805 = vunpack.c.l.b16 %v401
    %v806 = vunpack.c.h.b16 %v401
    %v807 = vunpack.c.l.b16 %v402
    %v808 = vunpack.c.h.b16 %v402
    %v809 = vpack.c.b16 %v557, %v553
    %v810 = vpack.c.b16 %v558, %v554
    %v811 = vpack.c.b16 %v559, %v555
    %v812 = vpack.c.b16 %v560, %v556
    %v813 = vpack.c.b16 %v565, %v561
    %v814 = vpack.c.b16 %v566, %v562
    %v815 = vpack.c.b16 %v567, %v563
    %v816 = vpack.c.b16 %v568, %v564
    %v817 = vpack.c.b16 %v573, %v569
    %v818 = vpack.c.b16 %v574, %v570
    %v819 = vpack.c.b16 %v575, %v571
    %v820 = vpack.c.b16 %v576, %v572
    %v821 = vpack.c.b16 %v581, %v577
    %v822 = vpack.c.b16 %v582, %v578
    %v823 = vpack.c.b16 %v583, %v579
    %v824 = vpack.c.b16 %v584, %v580
    %v825 = vpack.c.b16 %v589, %v585
    %v826 = vpack.c.b16 %v590, %v586
    %v827 = vpack.c.b16 %v591, %v587
    %v828 = vpack.c.b16 %v592, %v588
    %v829 = vpack.c.b16 %v597, %v593
    %v830 = vpack.c.b16 %v598, %v594
    %v831 = vpack.c.b16 %v599, %v595
    %v832 = vpack.c.b16 %v600, %v596
    %v833 = vpack.c.b16 %v605, %v601
    %v834 = vpack.c.b16 %v606, %v602
    %v835 = vpack.c.b16 %v607, %v603
    %v836 = vpack.c.b16 %v608, %v604
    %v837 = vpack.c.b16 %v613, %v609
    %v838 = vpack.c.b16 %v614, %v610
    %v839 = vpack.c.b16 %v615, %v611
    %v840 = vpack.c.b16 %v616, %v612
    %v841 = vpack.c.b16 %v621, %v617
    %v842 = vpack.c.b16 %v622, %v618
    %v843 = vpack.c.b16 %v623, %v619
    %v844 = vpack.c.b16 %v624, %v620
    %v845 = vpack.c.b16 %v629, %v625
    %v846 = vpack.c.b16 %v630, %v626
    %v847 = vpack.c.b16 %v631, %v627
    %v848 = vpack.c.b16 %v632, %v628
    %v849 = vpack.c.b16 %v637, %v633
    %v850 = vpack.c.b16 %v638, %v634
    %v851 = vpack.c.b16 %v639, %v635
    %v852 = vpack.c.b16 %v640, %v636
    %v853 = vpack.c.b16 %v645, %v641
    %v854 = vpack.c.b16 %v646, %v642
    %v855 = vpack.c.b16 %v647, %v643
    %v856 = vpack.c.b16 %v648, %v644
    %v857 = vpack.c.b16 %v653, %v649
    %v858 = vpack.c.b16 %v654, %v650
    %v859 = vpack.c.b16 %v655, %v651
    %v860 = vpack.c.b16 %v656, %v652
    %v861 = vpack.c.b16 %v661, %v657
    %v862 = vpack.c.b16 %v662, %v658
    %v863 = vpack.c.b16 %v663, %v659
    %v864 = vpack.c.b16 %v664, %v660
    %v865 = vpack.c.b16 %v669, %v665
    %v866 = vpack.c.b16 %v670, %v666
    %v867 = vpack.c.b16 %v671, %v667
    %v868 = vpack.c.b16 %v672, %v668
    %v869 = vpack.c.b16 %v677, %v673
    %v870 = vpack.c.b16 %v678, %v674
    %v871 = vpack.c.b16 %v679, %v675
    %v872 = vpack.c.b16 %v680, %v676
    %v873 = vpack.c.b16 %v685, %v681
    %v874 = vpack.c.b16 %v686, %v682
    %v875 = vpack.c.b16 %v687, %v683
    %v876 = vpack.c.b16 %v688, %v684
    %v877 = vpack.c.b16 %v693, %v689
    %v878 = vpack.c.b16 %v694, %v690
    %v879 = vpack.c.b16 %v695, %v691
    %v880 = vpack.c.b16 %v696, %v692
    %v881 = vpack.c.b16 %v701, %v697
    %v882 = vpack.c.b16 %v702, %v698
    %v883 = vpack.c.b16 %v703, %v699
    %v884 = vpack.c.b16 %v704, %v700
    %v885 = vpack.c.b16 %v709, %v705
    %v886 = vpack.c.b16 %v710, %v706
    %v887 = vpack.c.b16 %v711, %v707
    %v888 = vpack.c.b16 %v712, %v708
    %v889 = vpack.c.b16 %v717, %v713
    %v890 = vpack.c.b16 %v718, %v714
    %v891 = vpack.c.b16 %v719, %v715
    %v892 = vpack.c.b16 %v720, %v716
    %v893 = vpack.c.b16 %v725, %v721
    %v894 = vpack.c.b16 %v726, %v722
    %v895 = vpack.c.b16 %v727, %v723
    %v896 = vpack.c.b16 %v728, %v724
    %v897 = vpack.c.b16 %v733, %v729
    %v898 = vpack.c.b16 %v734, %v730
    %v899 = vpack.c.b16 %v735, %v731
    %v900 = vpack.c.b16 %v736, %v732
    %v901 = vpack.c.b16 %v741, %v737
    %v902 = vpack.c.b16 %v742, %v738
    %v903 = vpack.c.b16 %v743, %v739
    %v904 = vpack.c.b16 %v744, %v740
    %v905 = vpack.c.b16 %v749, %v745
    %v906 = vpack.c.b16 %v750, %v746
    %v907 = vpack.c.b16 %v751, %v747
    %v908 = vpack.c.b16 %v752, %v748
    %v909 = vpack.c.b16 %v757, %v753
    %v910 = vpack.c.b16 %v758, %v754
    %v911 = vpack.c.b16 %v759, %v755
    %v912 = vpack.c.b16 %v760, %v756
    %v913 = vpack.c.b16 %v765, %v761
    %v914 = vpack.c.b16 %v766, %v762
    %v915 = vpack.c.b16 %v767, %v763
    %v916 = vpack.c.b16 %v768, %v764
    %v917 = vpack.c.b16 %v773, %v769
    %v918 = vpack.c.b16 %v774, %v770
    %v919 = vpack.c.b16 %v775, %v771
    %v920 = vpack.c.b16 %v776, %v772
    %v921 = vpack.c.b16 %v781, %v777
    %v922 = vpack.c.b16 %v782, %v778
    %v923 = vpack.c.b16 %v783, %v779
    %v924 = vpack.c.b16 %v784, %v780
    %v925 = vpack.c.b16 %v789, %v785
    %v926 = vpack.c.b16 %v790, %v786
    %v927 = vpack.c.b16 %v791, %v787
    %v928 = vpack.c.b16 %v792, %v788
    %v929 = vpack.c.b16 %v797, %v793
    %v930 = vpack.c.b16 %v798, %v794
    %v931 = vpack.c.b16 %v799, %v795
    %v932 = vpack.c.b16 %v800, %v796
    %v933 = vpack.c.b16 %v805, %v801
    %v934 = vpack.c.b16 %v806, %v802
    %v935 = vpack.c.b16 %v807, %v803
    %v936 = vpack.c.b16 %v808, %v804
    %1065 = vmatprep.subr.bf16.mxu0 %v838
    %1066 = vmatpush1.bf16.msra.mxu0 %v837
    %1067 = vmatprep.subr.bf16.mxu0 %v834
    %1068 = vmatpush1.bf16.msra.mxu0 %v833
    %1069 = vmatprep.subr.bf16.mxu0 %v830
    %1070 = vmatpush1.bf16.msra.mxu0 %v829
    %1071 = vmatprep.subr.bf16.mxu0 %v826
    %1072 = vmatpush1.bf16.msra.mxu0 %v825
    %1073 = vmatprep.subr.bf16.mxu0 %v822
    %1074 = vmatpush1.bf16.msra.mxu0 %v821
    %1075 = vmatprep.subr.bf16.mxu0 %v818
    %1076 = vmatpush1.bf16.msra.mxu0 %v817
    %1077 = vmatprep.subr.bf16.mxu0 %v814
    %1078 = vmatpush1.bf16.msra.mxu0 %v813
    %1079 = vmatprep.subr.bf16.mxu0 %v810
    %1080 = vmatpush1.bf16.msra.mxu0 %v809
    %1081 = vmatprep.subr.bf16.mxu0 %v870
    %1082 = vmatpush2.bf16.msra.mxu0 %v869
    %1083 = vmatprep.subr.bf16.mxu0 %v866
    %1084 = vmatpush2.bf16.msra.mxu0 %v865
    %1085 = vmatprep.subr.bf16.mxu0 %v862
    %1086 = vmatpush2.bf16.msra.mxu0 %v861
    %1087 = vmatprep.subr.bf16.mxu0 %v858
    %1088 = vmatpush2.bf16.msra.mxu0 %v857
    %1089 = vmatprep.subr.bf16.mxu0 %v854
    %1090 = vmatpush2.bf16.msra.mxu0 %v853
    %1091 = vmatprep.subr.bf16.mxu0 %v850
    %1092 = vmatpush2.bf16.msra.mxu0 %v849
    %1093 = vmatprep.subr.bf16.mxu0 %v846
    %1094 = vmatpush2.bf16.msra.mxu0 %v845
    %1095 = vmatprep.subr.bf16.mxu0 %v842
    %1096 = vmatpush2.bf16.msra.mxu0 %v841
    %1097 = vmatprep.mubr.bf16.mxu0 %v268
    %1098 = vmatmul.mubr.bf16.gmra.mxu0 %v267
    %v1099 = vpop.f32.mrf.mxu0
    %v1100 = vadd.f32 %v408, %v1099
    %v1101 = vpop.f32.mrf.mxu0
    %v1102 = vadd.f32 %v412, %v1101
    %v1103 = vpop.f32.mrf.mxu0
    %v1104 = vadd.f32 %v408, %v1103
    %v1105 = vpop.f32.mrf.mxu0
    %v1106 = vadd.f32 %v412, %v1105
    %1107 = vmatprep.mubr.bf16.mxu0 %v272
    %1108 = vmatmul.mubr.bf16.gmra.mxu0 %v271
    %v1109 = vpop.f32.mrf.mxu0
    %v1110 = vadd.f32 %v408, %v1109
    %v1111 = vpop.f32.mrf.mxu0
    %v1112 = vadd.f32 %v412, %v1111
    %v1113 = vpop.f32.mrf.mxu0
    %v1114 = vpop.f32.mrf.mxu0
    %1115 = vdwg.mxu0
    %1116 = vmatprep.subr.bf16.mxu0 %v902
    %1117 = vmatpush1.bf16.msra.mxu0 %v901
    %1118 = vmatprep.subr.bf16.mxu0 %v898
    %1119 = vmatpush1.bf16.msra.mxu0 %v897
    %1120 = vmatprep.subr.bf16.mxu0 %v894
    %1121 = vmatpush1.bf16.msra.mxu0 %v893
    %1122 = vmatprep.subr.bf16.mxu0 %v890
    %1123 = vmatpush1.bf16.msra.mxu0 %v889
    %1124 = vmatprep.subr.bf16.mxu0 %v886
    %1125 = vmatpush1.bf16.msra.mxu0 %v885
    %1126 = vmatprep.subr.bf16.mxu0 %v882
    %1127 = vmatpush1.bf16.msra.mxu0 %v881
    %1128 = vmatprep.subr.bf16.mxu0 %v878
    %1129 = vmatpush1.bf16.msra.mxu0 %v877
    %1130 = vmatprep.subr.bf16.mxu0 %v874
    %1131 = vmatpush1.bf16.msra.mxu0 %v873
    %1132 = vmatprep.subr.bf16.mxu0 %v934
    %1133 = vmatpush2.bf16.msra.mxu0 %v933
    %1134 = vmatprep.subr.bf16.mxu0 %v930
    %1135 = vmatpush2.bf16.msra.mxu0 %v929
    %1136 = vmatprep.subr.bf16.mxu0 %v926
    %1137 = vmatpush2.bf16.msra.mxu0 %v925
    %1138 = vmatprep.subr.bf16.mxu0 %v922
    %1139 = vmatpush2.bf16.msra.mxu0 %v921
    %1140 = vmatprep.subr.bf16.mxu0 %v918
    %1141 = vmatpush2.bf16.msra.mxu0 %v917
    %1142 = vmatprep.subr.bf16.mxu0 %v914
    %1143 = vmatpush2.bf16.msra.mxu0 %v913
    %1144 = vmatprep.subr.bf16.mxu0 %v910
    %1145 = vmatpush2.bf16.msra.mxu0 %v909
    %1146 = vmatprep.subr.bf16.mxu0 %v906
    %1147 = vmatpush2.bf16.msra.mxu0 %v905
    %1148 = vmatprep.mubr.bf16.mxu0 %v270
    %1149 = vmatmul.mubr.bf16.gmra.mxu0 %v269
    %v1150 = vpop.f32.mrf.mxu0
    %v1151 = vadd.f32 %v1100, %v1150
    %v1152 = vpop.f32.mrf.mxu0
    %v1153 = vadd.f32 %v1102, %v1152
    %v1154 = vpop.f32.mrf.mxu0
    %v1155 = vadd.f32 %v1104, %v1154
    %v1156 = vpop.f32.mrf.mxu0
    %v1157 = vadd.f32 %v1106, %v1156
    %1158 = vmatprep.mubr.bf16.mxu0 %v274
    %1159 = vmatmul.mubr.bf16.gmra.mxu0 %v273
    %v1160 = vpop.f32.mrf.mxu0
    %v1161 = vadd.f32 %v1110, %v1160
    %v1162 = vpop.f32.mrf.mxu0
    %v1163 = vadd.f32 %v1112, %v1162
    %v1164 = vpop.f32.mrf.mxu0
    %v1165 = vpop.f32.mrf.mxu0
    %1166 = vdwg.mxu0
    %1167 = vmatprep.subr.bf16.mxu0 %v840
    %1168 = vmatpush1.bf16.msra.mxu0 %v839
    %1169 = vmatprep.subr.bf16.mxu0 %v836
    %1170 = vmatpush1.bf16.msra.mxu0 %v835
    %1171 = vmatprep.subr.bf16.mxu0 %v832
    %1172 = vmatpush1.bf16.msra.mxu0 %v831
    %1173 = vmatprep.subr.bf16.mxu0 %v828
    %1174 = vmatpush1.bf16.msra.mxu0 %v827
    %1175 = vmatprep.subr.bf16.mxu0 %v824
    %1176 = vmatpush1.bf16.msra.mxu0 %v823
    %1177 = vmatprep.subr.bf16.mxu0 %v820
    %1178 = vmatpush1.bf16.msra.mxu0 %v819
    %1179 = vmatprep.subr.bf16.mxu0 %v816
    %1180 = vmatpush1.bf16.msra.mxu0 %v815
    %1181 = vmatprep.subr.bf16.mxu0 %v812
    %1182 = vmatpush1.bf16.msra.mxu0 %v811
    %1183 = vmatprep.subr.bf16.mxu0 %v872
    %1184 = vmatpush2.bf16.msra.mxu0 %v871
    %1185 = vmatprep.subr.bf16.mxu0 %v868
    %1186 = vmatpush2.bf16.msra.mxu0 %v867
    %1187 = vmatprep.subr.bf16.mxu0 %v864
    %1188 = vmatpush2.bf16.msra.mxu0 %v863
    %1189 = vmatprep.subr.bf16.mxu0 %v860
    %1190 = vmatpush2.bf16.msra.mxu0 %v859
    %1191 = vmatprep.subr.bf16.mxu0 %v856
    %1192 = vmatpush2.bf16.msra.mxu0 %v855
    %1193 = vmatprep.subr.bf16.mxu0 %v852
    %1194 = vmatpush2.bf16.msra.mxu0 %v851
    %1195 = vmatprep.subr.bf16.mxu0 %v848
    %1196 = vmatpush2.bf16.msra.mxu0 %v847
    %1197 = vmatprep.subr.bf16.mxu0 %v844
    %1198 = vmatpush2.bf16.msra.mxu0 %v843
    %1199 = vmatprep.mubr.bf16.mxu0 %v268
    %1200 = vmatmul.mubr.bf16.gmra.mxu0 %v267
    %v1201 = vpop.f32.mrf.mxu0
    %v1202 = vadd.f32 %v416, %v1201
    %v1203 = vpop.f32.mrf.mxu0
    %v1204 = vadd.f32 %v420, %v1203
    %v1205 = vpop.f32.mrf.mxu0
    %v1206 = vadd.f32 %v416, %v1205
    %v1207 = vpop.f32.mrf.mxu0
    %v1208 = vadd.f32 %v420, %v1207
    %1209 = vmatprep.mubr.bf16.mxu0 %v272
    %1210 = vmatmul.mubr.bf16.gmra.mxu0 %v271
    %v1211 = vpop.f32.mrf.mxu0
    %v1212 = vadd.f32 %v416, %v1211
    %v1213 = vpop.f32.mrf.mxu0
    %v1214 = vadd.f32 %v420, %v1213
    %v1215 = vpop.f32.mrf.mxu0
    %v1216 = vpop.f32.mrf.mxu0
    %1217 = vdwg.mxu0
    %1218 = vmatprep.subr.bf16.mxu0 %v904
    %1219 = vmatpush1.bf16.msra.mxu0 %v903
    %1220 = vmatprep.subr.bf16.mxu0 %v900
    %1221 = vmatpush1.bf16.msra.mxu0 %v899
    %1222 = vmatprep.subr.bf16.mxu0 %v896
    %1223 = vmatpush1.bf16.msra.mxu0 %v895
    %1224 = vmatprep.subr.bf16.mxu0 %v892
    %1225 = vmatpush1.bf16.msra.mxu0 %v891
    %1226 = vmatprep.subr.bf16.mxu0 %v888
    %1227 = vmatpush1.bf16.msra.mxu0 %v887
    %1228 = vmatprep.subr.bf16.mxu0 %v884
    %1229 = vmatpush1.bf16.msra.mxu0 %v883
    %1230 = vmatprep.subr.bf16.mxu0 %v880
    %1231 = vmatpush1.bf16.msra.mxu0 %v879
    %1232 = vmatprep.subr.bf16.mxu0 %v876
    %1233 = vmatpush1.bf16.msra.mxu0 %v875
    %1234 = vmatprep.subr.bf16.mxu0 %v936
    %1235 = vmatpush2.bf16.msra.mxu0 %v935
    %1236 = vmatprep.subr.bf16.mxu0 %v932
    %1237 = vmatpush2.bf16.msra.mxu0 %v931
    %1238 = vmatprep.subr.bf16.mxu0 %v928
    %1239 = vmatpush2.bf16.msra.mxu0 %v927
    %1240 = vmatprep.subr.bf16.mxu0 %v924
    %1241 = vmatpush2.bf16.msra.mxu0 %v923
    %1242 = vmatprep.subr.bf16.mxu0 %v920
    %1243 = vmatpush2.bf16.msra.mxu0 %v919
    %1244 = vmatprep.subr.bf16.mxu0 %v916
    %1245 = vmatpush2.bf16.msra.mxu0 %v915
    %1246 = vmatprep.subr.bf16.mxu0 %v912
    %1247 = vmatpush2.bf16.msra.mxu0 %v911
    %1248 = vmatprep.subr.bf16.mxu0 %v908
    %1249 = vmatpush2.bf16.msra.mxu0 %v907
    %1250 = vmatprep.mubr.bf16.mxu0 %v270
    %1251 = vmatmul.mubr.bf16.gmra.mxu0 %v269
    %v1252 = vpop.f32.mrf.mxu0
    %v1253 = vadd.f32 %v1202, %v1252
    %v1254 = vpop.f32.mrf.mxu0
    %v1255 = vadd.f32 %v1204, %v1254
    %v1256 = vpop.f32.mrf.mxu0
    %v1257 = vadd.f32 %v1206, %v1256
    %v1258 = vpop.f32.mrf.mxu0
    %v1259 = vadd.f32 %v1208, %v1258
    %1260 = vmatprep.mubr.bf16.mxu0 %v274
    %1261 = vmatmul.mubr.bf16.gmra.mxu0 %v273
    %v1262 = vpop.f32.mrf.mxu0
    %v1263 = vadd.f32 %v1212, %v1262
    %v1264 = vpop.f32.mrf.mxu0
    %v1265 = vadd.f32 %v1214, %v1264
    %v1266 = vpop.f32.mrf.mxu0
    %v1267 = vpop.f32.mrf.mxu0
    %1268 = vdwg.mxu0
    %v1269 = vmax.f32 %v1151, 0.0
    %v1270 = vmax.f32 %v1153, 0.0
    %v1271 = vmax.f32 %v1253, 0.0
    %v1272 = vmax.f32 %v1255, 0.0
    %v1273 = vmax.f32 %v1155, 0.0
    %v1274 = vmax.f32 %v1157, 0.0
    %v1275 = vmax.f32 %v1257, 0.0
    %v1276 = vmax.f32 %v1259, 0.0
    %v1277 = vmax.f32 %v1161, 0.0
    %v1278 = vmax.f32 %v1163, 0.0
    %v1279 = vmax.f32 %v1263, 0.0
    %v1280 = vmax.f32 %v1265, 0.0
    %v1281 = vpack.c.bf16 %v1273, %v1269
    %v1282 = vpack.c.bf16 %v1274, %v1270
    %v1283 = vpack.c.bf16 %v1275, %v1271
    %v1284 = vpack.c.bf16 %v1276, %v1272
    %v1285 = vpack.c.bf16 %v1277, %v1277
    %v1286 = vpack.c.bf16 %v1278, %v1278
    %v1287 = vpack.c.bf16 %v1279, %v1279
    %v1288 = vpack.c.bf16 %v1280, %v1280
    %v1289 = vld [vmem:[#allocation5] sm:$0xff]
    %v1290 = vld [vmem:[#allocation5 + $0x8] sm:$0xff]
    %v1291 = vld [vmem:[#allocation5 + $0x10] sm:$0xff]
    %v1292 = vld [vmem:[#allocation5 + $0x18] sm:$0xff]
    %v1293 = vld [vmem:[#allocation5 + $0x20] sm:$0xff]
    %v1294 = vld [vmem:[#allocation5 + $0x28] sm:$0xff]
    %v1295 = vld [vmem:[#allocation5 + $0x30] sm:$0xff]
    %v1296 = vld [vmem:[#allocation5 + $0x38] sm:$0xff]
    %v1297 = vld [vmem:[#allocation5 + $0x40] sm:$0xff]
    %v1298 = vld [vmem:[#allocation5 + $0x48] sm:$0xff]
    %v1299 = vld [vmem:[#allocation5 + $0x50] sm:$0xff]
    %v1300 = vld [vmem:[#allocation5 + $0x58] sm:$0xff]
    %v1301 = vld [vmem:[#allocation5 + $0x60] sm:$0xff]
    %v1302 = vld [vmem:[#allocation5 + $0x68] sm:$0xff]
    %v1303 = vld [vmem:[#allocation5 + $0x70] sm:$0xff]
    %v1304 = vld [vmem:[#allocation5 + $0x78] sm:$0xff]
    %v1305 = vld [vmem:[#allocation5 + $0x80] sm:$0xff]
    %v1306 = vld [vmem:[#allocation5 + $0x88] sm:$0xff]
    %v1307 = vld [vmem:[#allocation5 + $0x90] sm:$0xff]
    %v1308 = vld [vmem:[#allocation5 + $0x98] sm:$0xff]
    %v1309 = vld [vmem:[#allocation5 + $0xa0] sm:$0xff]
    %v1310 = vld [vmem:[#allocation5 + $0xa8] sm:$0xff]
    %v1311 = vld [vmem:[#allocation5 + $0xb0] sm:$0xff]
    %v1312 = vld [vmem:[#allocation5 + $0xb8] sm:$0xff]
    %v1313 = vld [vmem:[#allocation5 + $0xc0] sm:$0xff]
    %v1314 = vld [vmem:[#allocation5 + $0xc8] sm:$0xff]
    %v1315 = vld [vmem:[#allocation5 + $0xd0] sm:$0xff]
    %v1316 = vld [vmem:[#allocation5 + $0xd8] sm:$0xff]
    %v1317 = vld [vmem:[#allocation5 + $0xe0] sm:$0xff]
    %v1318 = vld [vmem:[#allocation5 + $0xe8] sm:$0xff]
    %v1319 = vld [vmem:[#allocation5 + $0xf0] sm:$0xff]
    %v1320 = vld [vmem:[#allocation5 + $0xf8] sm:$0xff]
    %v1321 = vld [vmem:[#allocation5 + $0x100] sm:$0xff]
    %v1322 = vld [vmem:[#allocation5 + $0x108] sm:$0xff]
    %v1323 = vld [vmem:[#allocation5 + $0x110] sm:$0xff]
    %v1324 = vld [vmem:[#allocation5 + $0x118] sm:$0xff]
    %v1325 = vld [vmem:[#allocation5 + $0x120] sm:$0xff]
    %v1326 = vld [vmem:[#allocation5 + $0x128] sm:$0xff]
    %v1327 = vld [vmem:[#allocation5 + $0x130] sm:$0xff]
    %v1328 = vld [vmem:[#allocation5 + $0x138] sm:$0xff]
    %v1329 = vld [vmem:[#allocation5 + $0x140] sm:$0xff]
    %v1330 = vld [vmem:[#allocation5 + $0x148] sm:$0xff]
    %v1331 = vld [vmem:[#allocation5 + $0x150] sm:$0xff]
    %v1332 = vld [vmem:[#allocation5 + $0x158] sm:$0xff]
    %v1333 = vld [vmem:[#allocation5 + $0x160] sm:$0xff]
    %v1334 = vld [vmem:[#allocation5 + $0x168] sm:$0xff]
    %v1335 = vld [vmem:[#allocation5 + $0x170] sm:$0xff]
    %v1336 = vld [vmem:[#allocation5 + $0x178] sm:$0xff]
    %v1337 = vld [vmem:[#allocation5 + $0x180] sm:$0xff]
    %v1338 = vld [vmem:[#allocation5 + $0x188] sm:$0xff]
    %v1339 = vld [vmem:[#allocation5 + $0x190] sm:$0xff]
    %v1340 = vld [vmem:[#allocation5 + $0x198] sm:$0xff]
    %v1341 = vld [vmem:[#allocation5 + $0x1a0] sm:$0xff]
    %v1342 = vld [vmem:[#allocation5 + $0x1a8] sm:$0xff]
    %v1343 = vld [vmem:[#allocation5 + $0x1b0] sm:$0xff]
    %v1344 = vld [vmem:[#allocation5 + $0x1b8] sm:$0xff]
    %v1345 = vld [vmem:[#allocation5 + $0x1c0] sm:$0xff]
    %v1346 = vld [vmem:[#allocation5 + $0x1c8] sm:$0xff]
    %v1347 = vld [vmem:[#allocation5 + $0x1d0] sm:$0xff]
    %v1348 = vld [vmem:[#allocation5 + $0x1d8] sm:$0xff]
    %v1349 = vld [vmem:[#allocation5 + $0x1e0] sm:$0xff]
    %v1350 = vld [vmem:[#allocation5 + $0x1e8] sm:$0xff]
    %v1351 = vld [vmem:[#allocation5 + $0x1f0] sm:$0xff]
    %v1352 = vld [vmem:[#allocation5 + $0x1f8] sm:$0xff]
    %v1353 = vld [vmem:[#allocation5 + $0x200] sm:$0xff]
    %v1354 = vld [vmem:[#allocation5 + $0x208] sm:$0xff]
    %v1355 = vld [vmem:[#allocation5 + $0x210] sm:$0xff]
    %v1356 = vld [vmem:[#allocation5 + $0x218] sm:$0xff]
    %v1357 = vld [vmem:[#allocation5 + $0x220] sm:$0xff]
    %v1358 = vld [vmem:[#allocation5 + $0x228] sm:$0xff]
    %v1359 = vld [vmem:[#allocation5 + $0x230] sm:$0xff]
    %v1360 = vld [vmem:[#allocation5 + $0x238] sm:$0xff]
    %v1361 = vld [vmem:[#allocation5 + $0x240] sm:$0xff]
    %v1362 = vld [vmem:[#allocation5 + $0x248] sm:$0xff]
    %v1363 = vld [vmem:[#allocation5 + $0x250] sm:$0xff]
    %v1364 = vld [vmem:[#allocation5 + $0x258] sm:$0xff]
    %v1365 = vld [vmem:[#allocation5 + $0x260] sm:$0xff]
    %v1366 = vld [vmem:[#allocation5 + $0x268] sm:$0xff]
    %v1367 = vld [vmem:[#allocation5 + $0x270] sm:$0xff]
    %v1368 = vld [vmem:[#allocation5 + $0x278] sm:$0xff]
    %v1369 = vld [vmem:[#allocation5 + $0x280] sm:$0xff]
    %v1370 = vld [vmem:[#allocation5 + $0x288] sm:$0xff]
    %v1371 = vld [vmem:[#allocation5 + $0x290] sm:$0xff]
    %v1372 = vld [vmem:[#allocation5 + $0x298] sm:$0xff]
    %v1373 = vld [vmem:[#allocation5 + $0x2a0] sm:$0xff]
    %v1374 = vld [vmem:[#allocation5 + $0x2a8] sm:$0xff]
    %v1375 = vld [vmem:[#allocation5 + $0x2b0] sm:$0xff]
    %v1376 = vld [vmem:[#allocation5 + $0x2b8] sm:$0xff]
    %v1377 = vld [vmem:[#allocation5 + $0x2c0] sm:$0xff]
    %v1378 = vld [vmem:[#allocation5 + $0x2c8] sm:$0xff]
    %v1379 = vld [vmem:[#allocation5 + $0x2d0] sm:$0xff]
    %v1380 = vld [vmem:[#allocation5 + $0x2d8] sm:$0xff]
    %v1381 = vld [vmem:[#allocation5 + $0x2e0] sm:$0xff]
    %v1382 = vld [vmem:[#allocation5 + $0x2e8] sm:$0xff]
    %v1383 = vld [vmem:[#allocation5 + $0x2f0] sm:$0xff]
    %v1384 = vld [vmem:[#allocation5 + $0x2f8] sm:$0xff]
    %v1385 = vld [vmem:[#allocation5 + $0x300] sm:$0xff]
    %v1386 = vld [vmem:[#allocation5 + $0x308] sm:$0xff]
    %v1387 = vld [vmem:[#allocation5 + $0x310] sm:$0xff]
    %v1388 = vld [vmem:[#allocation5 + $0x318] sm:$0xff]
    %v1389 = vld [vmem:[#allocation5 + $0x320] sm:$0xff]
    %v1390 = vld [vmem:[#allocation5 + $0x328] sm:$0xff]
    %v1391 = vld [vmem:[#allocation5 + $0x330] sm:$0xff]
    %v1392 = vld [vmem:[#allocation5 + $0x338] sm:$0xff]
    %v1393 = vld [vmem:[#allocation5 + $0x340] sm:$0xff]
    %v1394 = vld [vmem:[#allocation5 + $0x348] sm:$0xff]
    %v1395 = vld [vmem:[#allocation5 + $0x350] sm:$0xff]
    %v1396 = vld [vmem:[#allocation5 + $0x358] sm:$0xff]
    %v1397 = vld [vmem:[#allocation5 + $0x360] sm:$0xff]
    %v1398 = vld [vmem:[#allocation5 + $0x368] sm:$0xff]
    %v1399 = vld [vmem:[#allocation5 + $0x370] sm:$0xff]
    %v1400 = vld [vmem:[#allocation5 + $0x378] sm:$0xff]
    %v1401 = vld [vmem:[#allocation5 + $0x380] sm:$0xff]
    %v1402 = vld [vmem:[#allocation5 + $0x388] sm:$0xff]
    %v1403 = vld [vmem:[#allocation5 + $0x390] sm:$0xff]
    %v1404 = vld [vmem:[#allocation5 + $0x398] sm:$0xff]
    %v1405 = vld [vmem:[#allocation5 + $0x3a0] sm:$0xff]
    %v1406 = vld [vmem:[#allocation5 + $0x3a8] sm:$0xff]
    %v1407 = vld [vmem:[#allocation5 + $0x3b0] sm:$0xff]
    %v1408 = vld [vmem:[#allocation5 + $0x3b8] sm:$0xff]
    %v1409 = vld [vmem:[#allocation5 + $0x3c0] sm:$0xff]
    %v1410 = vld [vmem:[#allocation5 + $0x3c8] sm:$0xff]
    %v1411 = vld [vmem:[#allocation5 + $0x3d0] sm:$0xff]
    %v1412 = vld [vmem:[#allocation5 + $0x3d8] sm:$0xff]
    %v1413 = vld [vmem:[#allocation5 + $0x3e0] sm:$0xff]
    %v1414 = vld [vmem:[#allocation5 + $0x3e8] sm:$0xff]
    %v1415 = vld [vmem:[#allocation5 + $0x3f0] sm:$0xff]
    %v1416 = vld [vmem:[#allocation5 + $0x3f8] sm:$0xff]
    %v1417 = vld [vmem:[%s6] sm:$0xf]
    %v1419 = vlaneseq
    %v1420 = vshrl.u32 %v1419, 7
    %v1421 = vsub.s32 0, %v1420
    %v1422 = vrot.slane %v1417, %v1421
    %v1423 = vlaneseq
    %v1424 = vshrl.u32 %v1423, 7
    %v1425 = vsub.s32 1, %v1424
    %v1426 = vrot.slane %v1417, %v1425
    %v1427 = vlaneseq
    %v1428 = vshrl.u32 %v1427, 7
    %v1429 = vsub.s32 2, %v1428
    %v1430 = vrot.slane %v1417, %v1429
    %v1431 = vlaneseq
    %v1432 = vshrl.u32 %v1431, 7
    %v1433 = vsub.s32 3, %v1432
    %v1434 = vrot.slane %v1417, %v1433
    %v1567 = vunpack.c.l.b16 %v1289
    %v1568 = vunpack.c.h.b16 %v1289
    %v1569 = vunpack.c.l.b16 %v1290
    %v1570 = vunpack.c.h.b16 %v1290
    %v1571 = vunpack.c.l.b16 %v1291
    %v1572 = vunpack.c.h.b16 %v1291
    %v1573 = vunpack.c.l.b16 %v1292
    %v1574 = vunpack.c.h.b16 %v1292
    %v1575 = vunpack.c.l.b16 %v1293
    %v1576 = vunpack.c.h.b16 %v1293
    %v1577 = vunpack.c.l.b16 %v1294
    %v1578 = vunpack.c.h.b16 %v1294
    %v1579 = vunpack.c.l.b16 %v1295
    %v1580 = vunpack.c.h.b16 %v1295
    %v1581 = vunpack.c.l.b16 %v1296
    %v1582 = vunpack.c.h.b16 %v1296
    %v1583 = vunpack.c.l.b16 %v1297
    %v1584 = vunpack.c.h.b16 %v1297
    %v1585 = vunpack.c.l.b16 %v1298
    %v1586 = vunpack.c.h.b16 %v1298
    %v1587 = vunpack.c.l.b16 %v1299
    %v1588 = vunpack.c.h.b16 %v1299
    %v1589 = vunpack.c.l.b16 %v1300
    %v1590 = vunpack.c.h.b16 %v1300
    %v1591 = vunpack.c.l.b16 %v1301
    %v1592 = vunpack.c.h.b16 %v1301
    %v1593 = vunpack.c.l.b16 %v1302
    %v1594 = vunpack.c.h.b16 %v1302
    %v1595 = vunpack.c.l.b16 %v1303
    %v1596 = vunpack.c.h.b16 %v1303
    %v1597 = vunpack.c.l.b16 %v1304
    %v1598 = vunpack.c.h.b16 %v1304
    %v1599 = vunpack.c.l.b16 %v1305
    %v1600 = vunpack.c.h.b16 %v1305
    %v1601 = vunpack.c.l.b16 %v1306
    %v1602 = vunpack.c.h.b16 %v1306
    %v1603 = vunpack.c.l.b16 %v1307
    %v1604 = vunpack.c.h.b16 %v1307
    %v1605 = vunpack.c.l.b16 %v1308
    %v1606 = vunpack.c.h.b16 %v1308
    %v1607 = vunpack.c.l.b16 %v1309
    %v1608 = vunpack.c.h.b16 %v1309
    %v1609 = vunpack.c.l.b16 %v1310
    %v1610 = vunpack.c.h.b16 %v1310
    %v1611 = vunpack.c.l.b16 %v1311
    %v1612 = vunpack.c.h.b16 %v1311
    %v1613 = vunpack.c.l.b16 %v1312
    %v1614 = vunpack.c.h.b16 %v1312
    %v1615 = vunpack.c.l.b16 %v1313
    %v1616 = vunpack.c.h.b16 %v1313
    %v1617 = vunpack.c.l.b16 %v1314
    %v1618 = vunpack.c.h.b16 %v1314
    %v1619 = vunpack.c.l.b16 %v1315
    %v1620 = vunpack.c.h.b16 %v1315
    %v1621 = vunpack.c.l.b16 %v1316
    %v1622 = vunpack.c.h.b16 %v1316
    %v1623 = vunpack.c.l.b16 %v1317
    %v1624 = vunpack.c.h.b16 %v1317
    %v1625 = vunpack.c.l.b16 %v1318
    %v1626 = vunpack.c.h.b16 %v1318
    %v1627 = vunpack.c.l.b16 %v1319
    %v1628 = vunpack.c.h.b16 %v1319
    %v1629 = vunpack.c.l.b16 %v1320
    %v1630 = vunpack.c.h.b16 %v1320
    %v1631 = vunpack.c.l.b16 %v1321
    %v1632 = vunpack.c.h.b16 %v1321
    %v1633 = vunpack.c.l.b16 %v1322
    %v1634 = vunpack.c.h.b16 %v1322
    %v1635 = vunpack.c.l.b16 %v1323
    %v1636 = vunpack.c.h.b16 %v1323
    %v1637 = vunpack.c.l.b16 %v1324
    %v1638 = vunpack.c.h.b16 %v1324
    %v1639 = vunpack.c.l.b16 %v1325
    %v1640 = vunpack.c.h.b16 %v1325
    %v1641 = vunpack.c.l.b16 %v1326
    %v1642 = vunpack.c.h.b16 %v1326
    %v1643 = vunpack.c.l.b16 %v1327
    %v1644 = vunpack.c.h.b16 %v1327
    %v1645 = vunpack.c.l.b16 %v1328
    %v1646 = vunpack.c.h.b16 %v1328
    %v1647 = vunpack.c.l.b16 %v1329
    %v1648 = vunpack.c.h.b16 %v1329
    %v1649 = vunpack.c.l.b16 %v1330
    %v1650 = vunpack.c.h.b16 %v1330
    %v1651 = vunpack.c.l.b16 %v1331
    %v1652 = vunpack.c.h.b16 %v1331
    %v1653 = vunpack.c.l.b16 %v1332
    %v1654 = vunpack.c.h.b16 %v1332
    %v1655 = vunpack.c.l.b16 %v1333
    %v1656 = vunpack.c.h.b16 %v1333
    %v1657 = vunpack.c.l.b16 %v1334
    %v1658 = vunpack.c.h.b16 %v1334
    %v1659 = vunpack.c.l.b16 %v1335
    %v1660 = vunpack.c.h.b16 %v1335
    %v1661 = vunpack.c.l.b16 %v1336
    %v1662 = vunpack.c.h.b16 %v1336
    %v1663 = vunpack.c.l.b16 %v1337
    %v1664 = vunpack.c.h.b16 %v1337
    %v1665 = vunpack.c.l.b16 %v1338
    %v1666 = vunpack.c.h.b16 %v1338
    %v1667 = vunpack.c.l.b16 %v1339
    %v1668 = vunpack.c.h.b16 %v1339
    %v1669 = vunpack.c.l.b16 %v1340
    %v1670 = vunpack.c.h.b16 %v1340
    %v1671 = vunpack.c.l.b16 %v1341
    %v1672 = vunpack.c.h.b16 %v1341
    %v1673 = vunpack.c.l.b16 %v1342
    %v1674 = vunpack.c.h.b16 %v1342
    %v1675 = vunpack.c.l.b16 %v1343
    %v1676 = vunpack.c.h.b16 %v1343
    %v1677 = vunpack.c.l.b16 %v1344
    %v1678 = vunpack.c.h.b16 %v1344
    %v1679 = vunpack.c.l.b16 %v1345
    %v1680 = vunpack.c.h.b16 %v1345
    %v1681 = vunpack.c.l.b16 %v1346
    %v1682 = vunpack.c.h.b16 %v1346
    %v1683 = vunpack.c.l.b16 %v1347
    %v1684 = vunpack.c.h.b16 %v1347
    %v1685 = vunpack.c.l.b16 %v1348
    %v1686 = vunpack.c.h.b16 %v1348
    %v1687 = vunpack.c.l.b16 %v1349
    %v1688 = vunpack.c.h.b16 %v1349
    %v1689 = vunpack.c.l.b16 %v1350
    %v1690 = vunpack.c.h.b16 %v1350
    %v1691 = vunpack.c.l.b16 %v1351
    %v1692 = vunpack.c.h.b16 %v1351
    %v1693 = vunpack.c.l.b16 %v1352
    %v1694 = vunpack.c.h.b16 %v1352
    %v1695 = vunpack.c.l.b16 %v1353
    %v1696 = vunpack.c.h.b16 %v1353
    %v1697 = vunpack.c.l.b16 %v1354
    %v1698 = vunpack.c.h.b16 %v1354
    %v1699 = vunpack.c.l.b16 %v1355
    %v1700 = vunpack.c.h.b16 %v1355
    %v1701 = vunpack.c.l.b16 %v1356
    %v1702 = vunpack.c.h.b16 %v1356
    %v1703 = vunpack.c.l.b16 %v1357
    %v1704 = vunpack.c.h.b16 %v1357
    %v1705 = vunpack.c.l.b16 %v1358
    %v1706 = vunpack.c.h.b16 %v1358
    %v1707 = vunpack.c.l.b16 %v1359
    %v1708 = vunpack.c.h.b16 %v1359
    %v1709 = vunpack.c.l.b16 %v1360
    %v1710 = vunpack.c.h.b16 %v1360
    %v1711 = vunpack.c.l.b16 %v1361
    %v1712 = vunpack.c.h.b16 %v1361
    %v1713 = vunpack.c.l.b16 %v1362
    %v1714 = vunpack.c.h.b16 %v1362
    %v1715 = vunpack.c.l.b16 %v1363
    %v1716 = vunpack.c.h.b16 %v1363
    %v1717 = vunpack.c.l.b16 %v1364
    %v1718 = vunpack.c.h.b16 %v1364
    %v1719 = vunpack.c.l.b16 %v1365
    %v1720 = vunpack.c.h.b16 %v1365
    %v1721 = vunpack.c.l.b16 %v1366
    %v1722 = vunpack.c.h.b16 %v1366
    %v1723 = vunpack.c.l.b16 %v1367
    %v1724 = vunpack.c.h.b16 %v1367
    %v1725 = vunpack.c.l.b16 %v1368
    %v1726 = vunpack.c.h.b16 %v1368
    %v1727 = vunpack.c.l.b16 %v1369
    %v1728 = vunpack.c.h.b16 %v1369
    %v1729 = vunpack.c.l.b16 %v1370
    %v1730 = vunpack.c.h.b16 %v1370
    %v1731 = vunpack.c.l.b16 %v1371
    %v1732 = vunpack.c.h.b16 %v1371
    %v1733 = vunpack.c.l.b16 %v1372
    %v1734 = vunpack.c.h.b16 %v1372
    %v1735 = vunpack.c.l.b16 %v1373
    %v1736 = vunpack.c.h.b16 %v1373
    %v1737 = vunpack.c.l.b16 %v1374
    %v1738 = vunpack.c.h.b16 %v1374
    %v1739 = vunpack.c.l.b16 %v1375
    %v1740 = vunpack.c.h.b16 %v1375
    %v1741 = vunpack.c.l.b16 %v1376
    %v1742 = vunpack.c.h.b16 %v1376
    %v1743 = vunpack.c.l.b16 %v1377
    %v1744 = vunpack.c.h.b16 %v1377
    %v1745 = vunpack.c.l.b16 %v1378
    %v1746 = vunpack.c.h.b16 %v1378
    %v1747 = vunpack.c.l.b16 %v1379
    %v1748 = vunpack.c.h.b16 %v1379
    %v1749 = vunpack.c.l.b16 %v1380
    %v1750 = vunpack.c.h.b16 %v1380
    %v1751 = vunpack.c.l.b16 %v1381
    %v1752 = vunpack.c.h.b16 %v1381
    %v1753 = vunpack.c.l.b16 %v1382
    %v1754 = vunpack.c.h.b16 %v1382
    %v1755 = vunpack.c.l.b16 %v1383
    %v1756 = vunpack.c.h.b16 %v1383
    %v1757 = vunpack.c.l.b16 %v1384
    %v1758 = vunpack.c.h.b16 %v1384
    %v1759 = vunpack.c.l.b16 %v1385
    %v1760 = vunpack.c.h.b16 %v1385
    %v1761 = vunpack.c.l.b16 %v1386
    %v1762 = vunpack.c.h.b16 %v1386
    %v1763 = vunpack.c.l.b16 %v1387
    %v1764 = vunpack.c.h.b16 %v1387
    %v1765 = vunpack.c.l.b16 %v1388
    %v1766 = vunpack.c.h.b16 %v1388
    %v1767 = vunpack.c.l.b16 %v1389
    %v1768 = vunpack.c.h.b16 %v1389
    %v1769 = vunpack.c.l.b16 %v1390
    %v1770 = vunpack.c.h.b16 %v1390
    %v1771 = vunpack.c.l.b16 %v1391
    %v1772 = vunpack.c.h.b16 %v1391
    %v1773 = vunpack.c.l.b16 %v1392
    %v1774 = vunpack.c.h.b16 %v1392
    %v1775 = vunpack.c.l.b16 %v1393
    %v1776 = vunpack.c.h.b16 %v1393
    %v1777 = vunpack.c.l.b16 %v1394
    %v1778 = vunpack.c.h.b16 %v1394
    %v1779 = vunpack.c.l.b16 %v1395
    %v1780 = vunpack.c.h.b16 %v1395
    %v1781 = vunpack.c.l.b16 %v1396
    %v1782 = vunpack.c.h.b16 %v1396
    %v1783 = vunpack.c.l.b16 %v1397
    %v1784 = vunpack.c.h.b16 %v1397
    %v1785 = vunpack.c.l.b16 %v1398
    %v1786 = vunpack.c.h.b16 %v1398
    %v1787 = vunpack.c.l.b16 %v1399
    %v1788 = vunpack.c.h.b16 %v1399
    %v1789 = vunpack.c.l.b16 %v1400
    %v1790 = vunpack.c.h.b16 %v1400
    %v1791 = vunpack.c.l.b16 %v1401
    %v1792 = vunpack.c.h.b16 %v1401
    %v1793 = vunpack.c.l.b16 %v1402
    %v1794 = vunpack.c.h.b16 %v1402
    %v1795 = vunpack.c.l.b16 %v1403
    %v1796 = vunpack.c.h.b16 %v1403
    %v1797 = vunpack.c.l.b16 %v1404
    %v1798 = vunpack.c.h.b16 %v1404
    %v1799 = vunpack.c.l.b16 %v1405
    %v1800 = vunpack.c.h.b16 %v1405
    %v1801 = vunpack.c.l.b16 %v1406
    %v1802 = vunpack.c.h.b16 %v1406
    %v1803 = vunpack.c.l.b16 %v1407
    %v1804 = vunpack.c.h.b16 %v1407
    %v1805 = vunpack.c.l.b16 %v1408
    %v1806 = vunpack.c.h.b16 %v1408
    %v1807 = vunpack.c.l.b16 %v1409
    %v1808 = vunpack.c.h.b16 %v1409
    %v1809 = vunpack.c.l.b16 %v1410
    %v1810 = vunpack.c.h.b16 %v1410
    %v1811 = vunpack.c.l.b16 %v1411
    %v1812 = vunpack.c.h.b16 %v1411
    %v1813 = vunpack.c.l.b16 %v1412
    %v1814 = vunpack.c.h.b16 %v1412
    %v1815 = vunpack.c.l.b16 %v1413
    %v1816 = vunpack.c.h.b16 %v1413
    %v1817 = vunpack.c.l.b16 %v1414
    %v1818 = vunpack.c.h.b16 %v1414
    %v1819 = vunpack.c.l.b16 %v1415
    %v1820 = vunpack.c.h.b16 %v1415
    %v1821 = vunpack.c.l.b16 %v1416
    %v1822 = vunpack.c.h.b16 %v1416
    %v1823 = vpack.c.b16 %v1571, %v1567
    %v1824 = vpack.c.b16 %v1572, %v1568
    %v1825 = vpack.c.b16 %v1573, %v1569
    %v1826 = vpack.c.b16 %v1574, %v1570
    %v1827 = vpack.c.b16 %v1579, %v1575
    %v1828 = vpack.c.b16 %v1580, %v1576
    %v1829 = vpack.c.b16 %v1581, %v1577
    %v1830 = vpack.c.b16 %v1582, %v1578
    %v1831 = vpack.c.b16 %v1587, %v1583
    %v1832 = vpack.c.b16 %v1588, %v1584
    %v1833 = vpack.c.b16 %v1589, %v1585
    %v1834 = vpack.c.b16 %v1590, %v1586
    %v1835 = vpack.c.b16 %v1595, %v1591
    %v1836 = vpack.c.b16 %v1596, %v1592
    %v1837 = vpack.c.b16 %v1597, %v1593
    %v1838 = vpack.c.b16 %v1598, %v1594
    %v1839 = vpack.c.b16 %v1603, %v1599
    %v1840 = vpack.c.b16 %v1604, %v1600
    %v1841 = vpack.c.b16 %v1605, %v1601
    %v1842 = vpack.c.b16 %v1606, %v1602
    %v1843 = vpack.c.b16 %v1611, %v1607
    %v1844 = vpack.c.b16 %v1612, %v1608
    %v1845 = vpack.c.b16 %v1613, %v1609
    %v1846 = vpack.c.b16 %v1614, %v1610
    %v1847 = vpack.c.b16 %v1619, %v1615
    %v1848 = vpack.c.b16 %v1620, %v1616
    %v1849 = vpack.c.b16 %v1621, %v1617
    %v1850 = vpack.c.b16 %v1622, %v1618
    %v1851 = vpack.c.b16 %v1627, %v1623
    %v1852 = vpack.c.b16 %v1628, %v1624
    %v1853 = vpack.c.b16 %v1629, %v1625
    %v1854 = vpack.c.b16 %v1630, %v1626
    %v1855 = vpack.c.b16 %v1635, %v1631
    %v1856 = vpack.c.b16 %v1636, %v1632
    %v1857 = vpack.c.b16 %v1637, %v1633
    %v1858 = vpack.c.b16 %v1638, %v1634
    %v1859 = vpack.c.b16 %v1643, %v1639
    %v1860 = vpack.c.b16 %v1644, %v1640
    %v1861 = vpack.c.b16 %v1645, %v1641
    %v1862 = vpack.c.b16 %v1646, %v1642
    %v1863 = vpack.c.b16 %v1651, %v1647
    %v1864 = vpack.c.b16 %v1652, %v1648
    %v1865 = vpack.c.b16 %v1653, %v1649
    %v1866 = vpack.c.b16 %v1654, %v1650
    %v1867 = vpack.c.b16 %v1659, %v1655
    %v1868 = vpack.c.b16 %v1660, %v1656
    %v1869 = vpack.c.b16 %v1661, %v1657
    %v1870 = vpack.c.b16 %v1662, %v1658
    %v1871 = vpack.c.b16 %v1667, %v1663
    %v1872 = vpack.c.b16 %v1668, %v1664
    %v1873 = vpack.c.b16 %v1669, %v1665
    %v1874 = vpack.c.b16 %v1670, %v1666
    %v1875 = vpack.c.b16 %v1675, %v1671
    %v1876 = vpack.c.b16 %v1676, %v1672
    %v1877 = vpack.c.b16 %v1677, %v1673
    %v1878 = vpack.c.b16 %v1678, %v1674
    %v1879 = vpack.c.b16 %v1683, %v1679
    %v1880 = vpack.c.b16 %v1684, %v1680
    %v1881 = vpack.c.b16 %v1685, %v1681
    %v1882 = vpack.c.b16 %v1686, %v1682
    %v1883 = vpack.c.b16 %v1691, %v1687
    %v1884 = vpack.c.b16 %v1692, %v1688
    %v1885 = vpack.c.b16 %v1693, %v1689
    %v1886 = vpack.c.b16 %v1694, %v1690
    %v1887 = vpack.c.b16 %v1699, %v1695
    %v1888 = vpack.c.b16 %v1700, %v1696
    %v1889 = vpack.c.b16 %v1701, %v1697
    %v1890 = vpack.c.b16 %v1702, %v1698
    %v1891 = vpack.c.b16 %v1707, %v1703
    %v1892 = vpack.c.b16 %v1708, %v1704
    %v1893 = vpack.c.b16 %v1709, %v1705
    %v1894 = vpack.c.b16 %v1710, %v1706
    %v1895 = vpack.c.b16 %v1715, %v1711
    %v1896 = vpack.c.b16 %v1716, %v1712
    %v1897 = vpack.c.b16 %v1717, %v1713
    %v1898 = vpack.c.b16 %v1718, %v1714
    %v1899 = vpack.c.b16 %v1723, %v1719
    %v1900 = vpack.c.b16 %v1724, %v1720
    %v1901 = vpack.c.b16 %v1725, %v1721
    %v1902 = vpack.c.b16 %v1726, %v1722
    %v1903 = vpack.c.b16 %v1731, %v1727
    %v1904 = vpack.c.b16 %v1732, %v1728
    %v1905 = vpack.c.b16 %v1733, %v1729
    %v1906 = vpack.c.b16 %v1734, %v1730
    %v1907 = vpack.c.b16 %v1739, %v1735
    %v1908 = vpack.c.b16 %v1740, %v1736
    %v1909 = vpack.c.b16 %v1741, %v1737
    %v1910 = vpack.c.b16 %v1742, %v1738
    %v1911 = vpack.c.b16 %v1747, %v1743
    %v1912 = vpack.c.b16 %v1748, %v1744
    %v1913 = vpack.c.b16 %v1749, %v1745
    %v1914 = vpack.c.b16 %v1750, %v1746
    %v1915 = vpack.c.b16 %v1755, %v1751
    %v1916 = vpack.c.b16 %v1756, %v1752
    %v1917 = vpack.c.b16 %v1757, %v1753
    %v1918 = vpack.c.b16 %v1758, %v1754
    %v1919 = vpack.c.b16 %v1763, %v1759
    %v1920 = vpack.c.b16 %v1764, %v1760
    %v1921 = vpack.c.b16 %v1765, %v1761
    %v1922 = vpack.c.b16 %v1766, %v1762
    %v1923 = vpack.c.b16 %v1771, %v1767
    %v1924 = vpack.c.b16 %v1772, %v1768
    %v1925 = vpack.c.b16 %v1773, %v1769
    %v1926 = vpack.c.b16 %v1774, %v1770
    %v1927 = vpack.c.b16 %v1779, %v1775
    %v1928 = vpack.c.b16 %v1780, %v1776
    %v1929 = vpack.c.b16 %v1781, %v1777
    %v1930 = vpack.c.b16 %v1782, %v1778
    %v1931 = vpack.c.b16 %v1787, %v1783
    %v1932 = vpack.c.b16 %v1788, %v1784
    %v1933 = vpack.c.b16 %v1789, %v1785
    %v1934 = vpack.c.b16 %v1790, %v1786
    %v1935 = vpack.c.b16 %v1795, %v1791
    %v1936 = vpack.c.b16 %v1796, %v1792
    %v1937 = vpack.c.b16 %v1797, %v1793
    %v1938 = vpack.c.b16 %v1798, %v1794
    %v1939 = vpack.c.b16 %v1803, %v1799
    %v1940 = vpack.c.b16 %v1804, %v1800
    %v1941 = vpack.c.b16 %v1805, %v1801
    %v1942 = vpack.c.b16 %v1806, %v1802
    %v1943 = vpack.c.b16 %v1811, %v1807
    %v1944 = vpack.c.b16 %v1812, %v1808
    %v1945 = vpack.c.b16 %v1813, %v1809
    %v1946 = vpack.c.b16 %v1814, %v1810
    %v1947 = vpack.c.b16 %v1819, %v1815
    %v1948 = vpack.c.b16 %v1820, %v1816
    %v1949 = vpack.c.b16 %v1821, %v1817
    %v1950 = vpack.c.b16 %v1822, %v1818
    %2079 = vmatprep.subr.bf16.mxu0 %v1852
    %2080 = vmatpush1.bf16.msra.mxu0 %v1851
    %2081 = vmatprep.subr.bf16.mxu0 %v1848
    %2082 = vmatpush1.bf16.msra.mxu0 %v1847
    %2083 = vmatprep.subr.bf16.mxu0 %v1844
    %2084 = vmatpush1.bf16.msra.mxu0 %v1843
    %2085 = vmatprep.subr.bf16.mxu0 %v1840
    %2086 = vmatpush1.bf16.msra.mxu0 %v1839
    %2087 = vmatprep.subr.bf16.mxu0 %v1836
    %2088 = vmatpush1.bf16.msra.mxu0 %v1835
    %2089 = vmatprep.subr.bf16.mxu0 %v1832
    %2090 = vmatpush1.bf16.msra.mxu0 %v1831
    %2091 = vmatprep.subr.bf16.mxu0 %v1828
    %2092 = vmatpush1.bf16.msra.mxu0 %v1827
    %2093 = vmatprep.subr.bf16.mxu0 %v1824
    %2094 = vmatpush1.bf16.msra.mxu0 %v1823
    %2095 = vmatprep.subr.bf16.mxu0 %v1884
    %2096 = vmatpush2.bf16.msra.mxu0 %v1883
    %2097 = vmatprep.subr.bf16.mxu0 %v1880
    %2098 = vmatpush2.bf16.msra.mxu0 %v1879
    %2099 = vmatprep.subr.bf16.mxu0 %v1876
    %2100 = vmatpush2.bf16.msra.mxu0 %v1875
    %2101 = vmatprep.subr.bf16.mxu0 %v1872
    %2102 = vmatpush2.bf16.msra.mxu0 %v1871
    %2103 = vmatprep.subr.bf16.mxu0 %v1868
    %2104 = vmatpush2.bf16.msra.mxu0 %v1867
    %2105 = vmatprep.subr.bf16.mxu0 %v1864
    %2106 = vmatpush2.bf16.msra.mxu0 %v1863
    %2107 = vmatprep.subr.bf16.mxu0 %v1860
    %2108 = vmatpush2.bf16.msra.mxu0 %v1859
    %2109 = vmatprep.subr.bf16.mxu0 %v1856
    %2110 = vmatpush2.bf16.msra.mxu0 %v1855
    %2111 = vmatprep.mubr.bf16.mxu0 %v1282
    %2112 = vmatmul.mubr.bf16.gmra.mxu0 %v1281
    %v2113 = vpop.f32.mrf.mxu0
    %v2114 = vadd.f32 %v1422, %v2113
    %v2115 = vpop.f32.mrf.mxu0
    %v2116 = vadd.f32 %v1426, %v2115
    %v2117 = vpop.f32.mrf.mxu0
    %v2118 = vadd.f32 %v1422, %v2117
    %v2119 = vpop.f32.mrf.mxu0
    %v2120 = vadd.f32 %v1426, %v2119
    %2121 = vmatprep.mubr.bf16.mxu0 %v1286
    %2122 = vmatmul.mubr.bf16.gmra.mxu0 %v1285
    %v2123 = vpop.f32.mrf.mxu0
    %v2124 = vadd.f32 %v1422, %v2123
    %v2125 = vpop.f32.mrf.mxu0
    %v2126 = vadd.f32 %v1426, %v2125
    %v2127 = vpop.f32.mrf.mxu0
    %v2128 = vpop.f32.mrf.mxu0
    %2129 = vdwg.mxu0
    %2130 = vmatprep.subr.bf16.mxu0 %v1916
    %2131 = vmatpush1.bf16.msra.mxu0 %v1915
    %2132 = vmatprep.subr.bf16.mxu0 %v1912
    %2133 = vmatpush1.bf16.msra.mxu0 %v1911
    %2134 = vmatprep.subr.bf16.mxu0 %v1908
    %2135 = vmatpush1.bf16.msra.mxu0 %v1907
    %2136 = vmatprep.subr.bf16.mxu0 %v1904
    %2137 = vmatpush1.bf16.msra.mxu0 %v1903
    %2138 = vmatprep.subr.bf16.mxu0 %v1900
    %2139 = vmatpush1.bf16.msra.mxu0 %v1899
    %2140 = vmatprep.subr.bf16.mxu0 %v1896
    %2141 = vmatpush1.bf16.msra.mxu0 %v1895
    %2142 = vmatprep.subr.bf16.mxu0 %v1892
    %2143 = vmatpush1.bf16.msra.mxu0 %v1891
    %2144 = vmatprep.subr.bf16.mxu0 %v1888
    %2145 = vmatpush1.bf16.msra.mxu0 %v1887
    %2146 = vmatprep.subr.bf16.mxu0 %v1948
    %2147 = vmatpush2.bf16.msra.mxu0 %v1947
    %2148 = vmatprep.subr.bf16.mxu0 %v1944
    %2149 = vmatpush2.bf16.msra.mxu0 %v1943
    %2150 = vmatprep.subr.bf16.mxu0 %v1940
    %2151 = vmatpush2.bf16.msra.mxu0 %v1939
    %2152 = vmatprep.subr.bf16.mxu0 %v1936
    %2153 = vmatpush2.bf16.msra.mxu0 %v1935
    %2154 = vmatprep.subr.bf16.mxu0 %v1932
    %2155 = vmatpush2.bf16.msra.mxu0 %v1931
    %2156 = vmatprep.subr.bf16.mxu0 %v1928
    %2157 = vmatpush2.bf16.msra.mxu0 %v1927
    %2158 = vmatprep.subr.bf16.mxu0 %v1924
    %2159 = vmatpush2.bf16.msra.mxu0 %v1923
    %2160 = vmatprep.subr.bf16.mxu0 %v1920
    %2161 = vmatpush2.bf16.msra.mxu0 %v1919
    %2162 = vmatprep.mubr.bf16.mxu0 %v1284
    %2163 = vmatmul.mubr.bf16.gmra.mxu0 %v1283
    %v2164 = vpop.f32.mrf.mxu0
    %v2165 = vadd.f32 %v2114, %v2164
    %v2166 = vpop.f32.mrf.mxu0
    %v2167 = vadd.f32 %v2116, %v2166
    %v2168 = vpop.f32.mrf.mxu0
    %v2169 = vadd.f32 %v2118, %v2168
    %v2170 = vpop.f32.mrf.mxu0
    %v2171 = vadd.f32 %v2120, %v2170
    %2172 = vmatprep.mubr.bf16.mxu0 %v1288
    %2173 = vmatmul.mubr.bf16.gmra.mxu0 %v1287
    %v2174 = vpop.f32.mrf.mxu0
    %v2175 = vadd.f32 %v2124, %v2174
    %v2176 = vpop.f32.mrf.mxu0
    %v2177 = vadd.f32 %v2126, %v2176
    %v2178 = vpop.f32.mrf.mxu0
    %v2179 = vpop.f32.mrf.mxu0
    %2180 = vdwg.mxu0
    %2181 = vmatprep.subr.bf16.mxu0 %v1854
    %2182 = vmatpush1.bf16.msra.mxu0 %v1853
    %2183 = vmatprep.subr.bf16.mxu0 %v1850
    %2184 = vmatpush1.bf16.msra.mxu0 %v1849
    %2185 = vmatprep.subr.bf16.mxu0 %v1846
    %2186 = vmatpush1.bf16.msra.mxu0 %v1845
    %2187 = vmatprep.subr.bf16.mxu0 %v1842
    %2188 = vmatpush1.bf16.msra.mxu0 %v1841
    %2189 = vmatprep.subr.bf16.mxu0 %v1838
    %2190 = vmatpush1.bf16.msra.mxu0 %v1837
    %2191 = vmatprep.subr.bf16.mxu0 %v1834
    %2192 = vmatpush1.bf16.msra.mxu0 %v1833
    %2193 = vmatprep.subr.bf16.mxu0 %v1830
    %2194 = vmatpush1.bf16.msra.mxu0 %v1829
    %2195 = vmatprep.subr.bf16.mxu0 %v1826
    %2196 = vmatpush1.bf16.msra.mxu0 %v1825
    %2197 = vmatprep.subr.bf16.mxu0 %v1886
    %2198 = vmatpush2.bf16.msra.mxu0 %v1885
    %2199 = vmatprep.subr.bf16.mxu0 %v1882
    %2200 = vmatpush2.bf16.msra.mxu0 %v1881
    %2201 = vmatprep.subr.bf16.mxu0 %v1878
    %2202 = vmatpush2.bf16.msra.mxu0 %v1877
    %2203 = vmatprep.subr.bf16.mxu0 %v1874
    %2204 = vmatpush2.bf16.msra.mxu0 %v1873
    %2205 = vmatprep.subr.bf16.mxu0 %v1870
    %2206 = vmatpush2.bf16.msra.mxu0 %v1869
    %2207 = vmatprep.subr.bf16.mxu0 %v1866
    %2208 = vmatpush2.bf16.msra.mxu0 %v1865
    %2209 = vmatprep.subr.bf16.mxu0 %v1862
    %2210 = vmatpush2.bf16.msra.mxu0 %v1861
    %2211 = vmatprep.subr.bf16.mxu0 %v1858
    %2212 = vmatpush2.bf16.msra.mxu0 %v1857
    %2213 = vmatprep.mubr.bf16.mxu0 %v1282
    %2214 = vmatmul.mubr.bf16.gmra.mxu0 %v1281
    %v2215 = vpop.f32.mrf.mxu0
    %v2216 = vadd.f32 %v1430, %v2215
    %v2217 = vpop.f32.mrf.mxu0
    %v2218 = vadd.f32 %v1434, %v2217
    %v2219 = vpop.f32.mrf.mxu0
    %v2220 = vadd.f32 %v1430, %v2219
    %v2221 = vpop.f32.mrf.mxu0
    %v2222 = vadd.f32 %v1434, %v2221
    %2223 = vmatprep.mubr.bf16.mxu0 %v1286
    %2224 = vmatmul.mubr.bf16.gmra.mxu0 %v1285
    %v2225 = vpop.f32.mrf.mxu0
    %v2226 = vadd.f32 %v1430, %v2225
    %v2227 = vpop.f32.mrf.mxu0
    %v2228 = vadd.f32 %v1434, %v2227
    %v2229 = vpop.f32.mrf.mxu0
    %v2230 = vpop.f32.mrf.mxu0
    %2231 = vdwg.mxu0
    %2232 = vmatprep.subr.bf16.mxu0 %v1918
    %2233 = vmatpush1.bf16.msra.mxu0 %v1917
    %2234 = vmatprep.subr.bf16.mxu0 %v1914
    %2235 = vmatpush1.bf16.msra.mxu0 %v1913
    %2236 = vmatprep.subr.bf16.mxu0 %v1910
    %2237 = vmatpush1.bf16.msra.mxu0 %v1909
    %2238 = vmatprep.subr.bf16.mxu0 %v1906
    %2239 = vmatpush1.bf16.msra.mxu0 %v1905
    %2240 = vmatprep.subr.bf16.mxu0 %v1902
    %2241 = vmatpush1.bf16.msra.mxu0 %v1901
    %2242 = vmatprep.subr.bf16.mxu0 %v1898
    %2243 = vmatpush1.bf16.msra.mxu0 %v1897
    %2244 = vmatprep.subr.bf16.mxu0 %v1894
    %2245 = vmatpush1.bf16.msra.mxu0 %v1893
    %2246 = vmatprep.subr.bf16.mxu0 %v1890
    %2247 = vmatpush1.bf16.msra.mxu0 %v1889
    %2248 = vmatprep.subr.bf16.mxu0 %v1950
    %2249 = vmatpush2.bf16.msra.mxu0 %v1949
    %2250 = vmatprep.subr.bf16.mxu0 %v1946
    %2251 = vmatpush2.bf16.msra.mxu0 %v1945
    %2252 = vmatprep.subr.bf16.mxu0 %v1942
    %2253 = vmatpush2.bf16.msra.mxu0 %v1941
    %2254 = vmatprep.subr.bf16.mxu0 %v1938
    %2255 = vmatpush2.bf16.msra.mxu0 %v1937
    %2256 = vmatprep.subr.bf16.mxu0 %v1934
    %2257 = vmatpush2.bf16.msra.mxu0 %v1933
    %2258 = vmatprep.subr.bf16.mxu0 %v1930
    %2259 = vmatpush2.bf16.msra.mxu0 %v1929
    %2260 = vmatprep.subr.bf16.mxu0 %v1926
    %2261 = vmatpush2.bf16.msra.mxu0 %v1925
    %2262 = vmatprep.subr.bf16.mxu0 %v1922
    %2263 = vmatpush2.bf16.msra.mxu0 %v1921
    %2264 = vmatprep.mubr.bf16.mxu0 %v1284
    %2265 = vmatmul.mubr.bf16.gmra.mxu0 %v1283
    %v2266 = vpop.f32.mrf.mxu0
    %v2267 = vadd.f32 %v2216, %v2266
    %v2268 = vpop.f32.mrf.mxu0
    %v2269 = vadd.f32 %v2218, %v2268
    %v2270 = vpop.f32.mrf.mxu0
    %v2271 = vadd.f32 %v2220, %v2270
    %v2272 = vpop.f32.mrf.mxu0
    %v2273 = vadd.f32 %v2222, %v2272
    %2274 = vmatprep.mubr.bf16.mxu0 %v1288
    %2275 = vmatmul.mubr.bf16.gmra.mxu0 %v1287
    %v2276 = vpop.f32.mrf.mxu0
    %v2277 = vadd.f32 %v2226, %v2276
    %v2278 = vpop.f32.mrf.mxu0
    %v2279 = vadd.f32 %v2228, %v2278
    %v2280 = vpop.f32.mrf.mxu0
    %v2281 = vpop.f32.mrf.mxu0
    %2282 = vdwg.mxu0
    %v2283 = vmax.f32 %v2165, 0.0
    %v2284 = vmax.f32 %v2167, 0.0
    %v2285 = vmax.f32 %v2267, 0.0
    %v2286 = vmax.f32 %v2269, 0.0
    %v2287 = vmax.f32 %v2169, 0.0
    %v2288 = vmax.f32 %v2171, 0.0
    %v2289 = vmax.f32 %v2271, 0.0
    %v2290 = vmax.f32 %v2273, 0.0
    %v2291 = vmax.f32 %v2175, 0.0
    %v2292 = vmax.f32 %v2177, 0.0
    %v2293 = vmax.f32 %v2277, 0.0
    %v2294 = vmax.f32 %v2279, 0.0
    %v2295 = vpack.c.bf16 %v2287, %v2283
    %v2296 = vpack.c.bf16 %v2288, %v2284
    %v2297 = vpack.c.bf16 %v2289, %v2285
    %v2298 = vpack.c.bf16 %v2290, %v2286
    %v2299 = vpack.c.bf16 %v2291, %v2291
    %v2300 = vpack.c.bf16 %v2292, %v2292
    %v2301 = vpack.c.bf16 %v2293, %v2293
    %v2302 = vpack.c.bf16 %v2294, %v2294
    %v2303 = vld [vmem:[#allocation7] sm:$0xff]
    %v2304 = vld [vmem:[#allocation7 + $0x8] sm:$0xff]
    %v2305 = vld [vmem:[#allocation7 + $0x10] sm:$0xff]
    %v2306 = vld [vmem:[#allocation7 + $0x18] sm:$0xff]
    %v2307 = vld [vmem:[#allocation7 + $0x20] sm:$0xff]
    %v2308 = vld [vmem:[#allocation7 + $0x28] sm:$0xff]
    %v2309 = vld [vmem:[#allocation7 + $0x30] sm:$0xff]
    %v2310 = vld [vmem:[#allocation7 + $0x38] sm:$0xff]
    %v2311 = vld [vmem:[#allocation7 + $0x40] sm:$0xff]
    %v2312 = vld [vmem:[#allocation7 + $0x48] sm:$0xff]
    %v2313 = vld [vmem:[#allocation7 + $0x50] sm:$0xff]
    %v2314 = vld [vmem:[#allocation7 + $0x58] sm:$0xff]
    %v2315 = vld [vmem:[#allocation7 + $0x60] sm:$0xff]
    %v2316 = vld [vmem:[#allocation7 + $0x68] sm:$0xff]
    %v2317 = vld [vmem:[#allocation7 + $0x70] sm:$0xff]
    %v2318 = vld [vmem:[#allocation7 + $0x78] sm:$0xff]
    %v2319 = vld [vmem:[#allocation7 + $0x80] sm:$0xff]
    %v2320 = vld [vmem:[#allocation7 + $0x88] sm:$0xff]
    %v2321 = vld [vmem:[#allocation7 + $0x90] sm:$0xff]
    %v2322 = vld [vmem:[#allocation7 + $0x98] sm:$0xff]
    %v2323 = vld [vmem:[#allocation7 + $0xa0] sm:$0xff]
    %v2324 = vld [vmem:[#allocation7 + $0xa8] sm:$0xff]
    %v2325 = vld [vmem:[#allocation7 + $0xb0] sm:$0xff]
    %v2326 = vld [vmem:[#allocation7 + $0xb8] sm:$0xff]
    %v2327 = vld [vmem:[#allocation7 + $0xc0] sm:$0xff]
    %v2328 = vld [vmem:[#allocation7 + $0xc8] sm:$0xff]
    %v2329 = vld [vmem:[#allocation7 + $0xd0] sm:$0xff]
    %v2330 = vld [vmem:[#allocation7 + $0xd8] sm:$0xff]
    %v2331 = vld [vmem:[#allocation7 + $0xe0] sm:$0xff]
    %v2332 = vld [vmem:[#allocation7 + $0xe8] sm:$0xff]
    %v2333 = vld [vmem:[#allocation7 + $0xf0] sm:$0xff]
    %v2334 = vld [vmem:[#allocation7 + $0xf8] sm:$0xff]
    %v2335 = vld [vmem:[#allocation7 + $0x100] sm:$0xff]
    %v2336 = vld [vmem:[#allocation7 + $0x108] sm:$0xff]
    %v2337 = vld [vmem:[#allocation7 + $0x110] sm:$0xff]
    %v2338 = vld [vmem:[#allocation7 + $0x118] sm:$0xff]
    %v2339 = vld [vmem:[#allocation7 + $0x120] sm:$0xff]
    %v2340 = vld [vmem:[#allocation7 + $0x128] sm:$0xff]
    %v2341 = vld [vmem:[#allocation7 + $0x130] sm:$0xff]
    %v2342 = vld [vmem:[#allocation7 + $0x138] sm:$0xff]
    %v2343 = vld [vmem:[#allocation7 + $0x140] sm:$0xff]
    %v2344 = vld [vmem:[#allocation7 + $0x148] sm:$0xff]
    %v2345 = vld [vmem:[#allocation7 + $0x150] sm:$0xff]
    %v2346 = vld [vmem:[#allocation7 + $0x158] sm:$0xff]
    %v2347 = vld [vmem:[#allocation7 + $0x160] sm:$0xff]
    %v2348 = vld [vmem:[#allocation7 + $0x168] sm:$0xff]
    %v2349 = vld [vmem:[#allocation7 + $0x170] sm:$0xff]
    %v2350 = vld [vmem:[#allocation7 + $0x178] sm:$0xff]
    %v2351 = vld [vmem:[#allocation7 + $0x180] sm:$0xff]
    %v2352 = vld [vmem:[#allocation7 + $0x188] sm:$0xff]
    %v2353 = vld [vmem:[#allocation7 + $0x190] sm:$0xff]
    %v2354 = vld [vmem:[#allocation7 + $0x198] sm:$0xff]
    %v2355 = vld [vmem:[#allocation7 + $0x1a0] sm:$0xff]
    %v2356 = vld [vmem:[#allocation7 + $0x1a8] sm:$0xff]
    %v2357 = vld [vmem:[#allocation7 + $0x1b0] sm:$0xff]
    %v2358 = vld [vmem:[#allocation7 + $0x1b8] sm:$0xff]
    %v2359 = vld [vmem:[#allocation7 + $0x1c0] sm:$0xff]
    %v2360 = vld [vmem:[#allocation7 + $0x1c8] sm:$0xff]
    %v2361 = vld [vmem:[#allocation7 + $0x1d0] sm:$0xff]
    %v2362 = vld [vmem:[#allocation7 + $0x1d8] sm:$0xff]
    %v2363 = vld [vmem:[#allocation7 + $0x1e0] sm:$0xff]
    %v2364 = vld [vmem:[#allocation7 + $0x1e8] sm:$0xff]
    %v2365 = vld [vmem:[#allocation7 + $0x1f0] sm:$0xff]
    %v2366 = vld [vmem:[#allocation7 + $0x1f8] sm:$0xff]
    %v2367 = vld [vmem:[#allocation7 + $0x200] sm:$0xff]
    %v2368 = vld [vmem:[#allocation7 + $0x208] sm:$0xff]
    %v2369 = vld [vmem:[#allocation7 + $0x210] sm:$0xff]
    %v2370 = vld [vmem:[#allocation7 + $0x218] sm:$0xff]
    %v2371 = vld [vmem:[#allocation7 + $0x220] sm:$0xff]
    %v2372 = vld [vmem:[#allocation7 + $0x228] sm:$0xff]
    %v2373 = vld [vmem:[#allocation7 + $0x230] sm:$0xff]
    %v2374 = vld [vmem:[#allocation7 + $0x238] sm:$0xff]
    %v2375 = vld [vmem:[#allocation7 + $0x240] sm:$0xff]
    %v2376 = vld [vmem:[#allocation7 + $0x248] sm:$0xff]
    %v2377 = vld [vmem:[#allocation7 + $0x250] sm:$0xff]
    %v2378 = vld [vmem:[#allocation7 + $0x258] sm:$0xff]
    %v2379 = vld [vmem:[#allocation7 + $0x260] sm:$0xff]
    %v2380 = vld [vmem:[#allocation7 + $0x268] sm:$0xff]
    %v2381 = vld [vmem:[#allocation7 + $0x270] sm:$0xff]
    %v2382 = vld [vmem:[#allocation7 + $0x278] sm:$0xff]
    %v2383 = vld [vmem:[#allocation7 + $0x280] sm:$0xff]
    %v2384 = vld [vmem:[#allocation7 + $0x288] sm:$0xff]
    %v2385 = vld [vmem:[#allocation7 + $0x290] sm:$0xff]
    %v2386 = vld [vmem:[#allocation7 + $0x298] sm:$0xff]
    %v2387 = vld [vmem:[#allocation7 + $0x2a0] sm:$0xff]
    %v2388 = vld [vmem:[#allocation7 + $0x2a8] sm:$0xff]
    %v2389 = vld [vmem:[#allocation7 + $0x2b0] sm:$0xff]
    %v2390 = vld [vmem:[#allocation7 + $0x2b8] sm:$0xff]
    %v2391 = vld [vmem:[#allocation7 + $0x2c0] sm:$0xff]
    %v2392 = vld [vmem:[#allocation7 + $0x2c8] sm:$0xff]
    %v2393 = vld [vmem:[#allocation7 + $0x2d0] sm:$0xff]
    %v2394 = vld [vmem:[#allocation7 + $0x2d8] sm:$0xff]
    %v2395 = vld [vmem:[#allocation7 + $0x2e0] sm:$0xff]
    %v2396 = vld [vmem:[#allocation7 + $0x2e8] sm:$0xff]
    %v2397 = vld [vmem:[#allocation7 + $0x2f0] sm:$0xff]
    %v2398 = vld [vmem:[#allocation7 + $0x2f8] sm:$0xff]
    %v2399 = vld [vmem:[#allocation7 + $0x300] sm:$0xff]
    %v2400 = vld [vmem:[#allocation7 + $0x308] sm:$0xff]
    %v2401 = vld [vmem:[#allocation7 + $0x310] sm:$0xff]
    %v2402 = vld [vmem:[#allocation7 + $0x318] sm:$0xff]
    %v2403 = vld [vmem:[#allocation7 + $0x320] sm:$0xff]
    %v2404 = vld [vmem:[#allocation7 + $0x328] sm:$0xff]
    %v2405 = vld [vmem:[#allocation7 + $0x330] sm:$0xff]
    %v2406 = vld [vmem:[#allocation7 + $0x338] sm:$0xff]
    %v2407 = vld [vmem:[#allocation7 + $0x340] sm:$0xff]
    %v2408 = vld [vmem:[#allocation7 + $0x348] sm:$0xff]
    %v2409 = vld [vmem:[#allocation7 + $0x350] sm:$0xff]
    %v2410 = vld [vmem:[#allocation7 + $0x358] sm:$0xff]
    %v2411 = vld [vmem:[#allocation7 + $0x360] sm:$0xff]
    %v2412 = vld [vmem:[#allocation7 + $0x368] sm:$0xff]
    %v2413 = vld [vmem:[#allocation7 + $0x370] sm:$0xff]
    %v2414 = vld [vmem:[#allocation7 + $0x378] sm:$0xff]
    %v2415 = vld [vmem:[#allocation7 + $0x380] sm:$0xff]
    %v2416 = vld [vmem:[#allocation7 + $0x388] sm:$0xff]
    %v2417 = vld [vmem:[#allocation7 + $0x390] sm:$0xff]
    %v2418 = vld [vmem:[#allocation7 + $0x398] sm:$0xff]
    %v2419 = vld [vmem:[#allocation7 + $0x3a0] sm:$0xff]
    %v2420 = vld [vmem:[#allocation7 + $0x3a8] sm:$0xff]
    %v2421 = vld [vmem:[#allocation7 + $0x3b0] sm:$0xff]
    %v2422 = vld [vmem:[#allocation7 + $0x3b8] sm:$0xff]
    %v2423 = vld [vmem:[#allocation7 + $0x3c0] sm:$0xff]
    %v2424 = vld [vmem:[#allocation7 + $0x3c8] sm:$0xff]
    %v2425 = vld [vmem:[#allocation7 + $0x3d0] sm:$0xff]
    %v2426 = vld [vmem:[#allocation7 + $0x3d8] sm:$0xff]
    %v2427 = vld [vmem:[#allocation7 + $0x3e0] sm:$0xff]
    %v2428 = vld [vmem:[#allocation7 + $0x3e8] sm:$0xff]
    %v2429 = vld [vmem:[#allocation7 + $0x3f0] sm:$0xff]
    %v2430 = vld [vmem:[#allocation7 + $0x3f8] sm:$0xff]
    %v2431 = vld [vmem:[%s8] sm:$0xf]
    %v2433 = vlaneseq
    %v2434 = vshrl.u32 %v2433, 7
    %v2435 = vsub.s32 0, %v2434
    %v2436 = vrot.slane %v2431, %v2435
    %v2437 = vlaneseq
    %v2438 = vshrl.u32 %v2437, 7
    %v2439 = vsub.s32 1, %v2438
    %v2440 = vrot.slane %v2431, %v2439
    %v2441 = vlaneseq
    %v2442 = vshrl.u32 %v2441, 7
    %v2443 = vsub.s32 2, %v2442
    %v2444 = vrot.slane %v2431, %v2443
    %v2445 = vlaneseq
    %v2446 = vshrl.u32 %v2445, 7
    %v2447 = vsub.s32 3, %v2446
    %v2448 = vrot.slane %v2431, %v2447
    %v2581 = vunpack.c.l.b16 %v2303
    %v2582 = vunpack.c.h.b16 %v2303
    %v2583 = vunpack.c.l.b16 %v2304
    %v2584 = vunpack.c.h.b16 %v2304
    %v2585 = vunpack.c.l.b16 %v2305
    %v2586 = vunpack.c.h.b16 %v2305
    %v2587 = vunpack.c.l.b16 %v2306
    %v2588 = vunpack.c.h.b16 %v2306
    %v2589 = vunpack.c.l.b16 %v2307
    %v2590 = vunpack.c.h.b16 %v2307
    %v2591 = vunpack.c.l.b16 %v2308
    %v2592 = vunpack.c.h.b16 %v2308
    %v2593 = vunpack.c.l.b16 %v2309
    %v2594 = vunpack.c.h.b16 %v2309
    %v2595 = vunpack.c.l.b16 %v2310
    %v2596 = vunpack.c.h.b16 %v2310
    %v2597 = vunpack.c.l.b16 %v2311
    %v2598 = vunpack.c.h.b16 %v2311
    %v2599 = vunpack.c.l.b16 %v2312
    %v2600 = vunpack.c.h.b16 %v2312
    %v2601 = vunpack.c.l.b16 %v2313
    %v2602 = vunpack.c.h.b16 %v2313
    %v2603 = vunpack.c.l.b16 %v2314
    %v2604 = vunpack.c.h.b16 %v2314
    %v2605 = vunpack.c.l.b16 %v2315
    %v2606 = vunpack.c.h.b16 %v2315
    %v2607 = vunpack.c.l.b16 %v2316
    %v2608 = vunpack.c.h.b16 %v2316
    %v2609 = vunpack.c.l.b16 %v2317
    %v2610 = vunpack.c.h.b16 %v2317
    %v2611 = vunpack.c.l.b16 %v2318
    %v2612 = vunpack.c.h.b16 %v2318
    %v2613 = vunpack.c.l.b16 %v2319
    %v2614 = vunpack.c.h.b16 %v2319
    %v2615 = vunpack.c.l.b16 %v2320
    %v2616 = vunpack.c.h.b16 %v2320
    %v2617 = vunpack.c.l.b16 %v2321
    %v2618 = vunpack.c.h.b16 %v2321
    %v2619 = vunpack.c.l.b16 %v2322
    %v2620 = vunpack.c.h.b16 %v2322
    %v2621 = vunpack.c.l.b16 %v2323
    %v2622 = vunpack.c.h.b16 %v2323
    %v2623 = vunpack.c.l.b16 %v2324
    %v2624 = vunpack.c.h.b16 %v2324
    %v2625 = vunpack.c.l.b16 %v2325
    %v2626 = vunpack.c.h.b16 %v2325
    %v2627 = vunpack.c.l.b16 %v2326
    %v2628 = vunpack.c.h.b16 %v2326
    %v2629 = vunpack.c.l.b16 %v2327
    %v2630 = vunpack.c.h.b16 %v2327
    %v2631 = vunpack.c.l.b16 %v2328
    %v2632 = vunpack.c.h.b16 %v2328
    %v2633 = vunpack.c.l.b16 %v2329
    %v2634 = vunpack.c.h.b16 %v2329
    %v2635 = vunpack.c.l.b16 %v2330
    %v2636 = vunpack.c.h.b16 %v2330
    %v2637 = vunpack.c.l.b16 %v2331
    %v2638 = vunpack.c.h.b16 %v2331
    %v2639 = vunpack.c.l.b16 %v2332
    %v2640 = vunpack.c.h.b16 %v2332
    %v2641 = vunpack.c.l.b16 %v2333
    %v2642 = vunpack.c.h.b16 %v2333
    %v2643 = vunpack.c.l.b16 %v2334
    %v2644 = vunpack.c.h.b16 %v2334
    %v2645 = vunpack.c.l.b16 %v2335
    %v2646 = vunpack.c.h.b16 %v2335
    %v2647 = vunpack.c.l.b16 %v2336
    %v2648 = vunpack.c.h.b16 %v2336
    %v2649 = vunpack.c.l.b16 %v2337
    %v2650 = vunpack.c.h.b16 %v2337
    %v2651 = vunpack.c.l.b16 %v2338
    %v2652 = vunpack.c.h.b16 %v2338
    %v2653 = vunpack.c.l.b16 %v2339
    %v2654 = vunpack.c.h.b16 %v2339
    %v2655 = vunpack.c.l.b16 %v2340
    %v2656 = vunpack.c.h.b16 %v2340
    %v2657 = vunpack.c.l.b16 %v2341
    %v2658 = vunpack.c.h.b16 %v2341
    %v2659 = vunpack.c.l.b16 %v2342
    %v2660 = vunpack.c.h.b16 %v2342
    %v2661 = vunpack.c.l.b16 %v2343
    %v2662 = vunpack.c.h.b16 %v2343
    %v2663 = vunpack.c.l.b16 %v2344
    %v2664 = vunpack.c.h.b16 %v2344
    %v2665 = vunpack.c.l.b16 %v2345
    %v2666 = vunpack.c.h.b16 %v2345
    %v2667 = vunpack.c.l.b16 %v2346
    %v2668 = vunpack.c.h.b16 %v2346
    %v2669 = vunpack.c.l.b16 %v2347
    %v2670 = vunpack.c.h.b16 %v2347
    %v2671 = vunpack.c.l.b16 %v2348
    %v2672 = vunpack.c.h.b16 %v2348
    %v2673 = vunpack.c.l.b16 %v2349
    %v2674 = vunpack.c.h.b16 %v2349
    %v2675 = vunpack.c.l.b16 %v2350
    %v2676 = vunpack.c.h.b16 %v2350
    %v2677 = vunpack.c.l.b16 %v2351
    %v2678 = vunpack.c.h.b16 %v2351
    %v2679 = vunpack.c.l.b16 %v2352
    %v2680 = vunpack.c.h.b16 %v2352
    %v2681 = vunpack.c.l.b16 %v2353
    %v2682 = vunpack.c.h.b16 %v2353
    %v2683 = vunpack.c.l.b16 %v2354
    %v2684 = vunpack.c.h.b16 %v2354
    %v2685 = vunpack.c.l.b16 %v2355
    %v2686 = vunpack.c.h.b16 %v2355
    %v2687 = vunpack.c.l.b16 %v2356
    %v2688 = vunpack.c.h.b16 %v2356
    %v2689 = vunpack.c.l.b16 %v2357
    %v2690 = vunpack.c.h.b16 %v2357
    %v2691 = vunpack.c.l.b16 %v2358
    %v2692 = vunpack.c.h.b16 %v2358
    %v2693 = vunpack.c.l.b16 %v2359
    %v2694 = vunpack.c.h.b16 %v2359
    %v2695 = vunpack.c.l.b16 %v2360
    %v2696 = vunpack.c.h.b16 %v2360
    %v2697 = vunpack.c.l.b16 %v2361
    %v2698 = vunpack.c.h.b16 %v2361
    %v2699 = vunpack.c.l.b16 %v2362
    %v2700 = vunpack.c.h.b16 %v2362
    %v2701 = vunpack.c.l.b16 %v2363
    %v2702 = vunpack.c.h.b16 %v2363
    %v2703 = vunpack.c.l.b16 %v2364
    %v2704 = vunpack.c.h.b16 %v2364
    %v2705 = vunpack.c.l.b16 %v2365
    %v2706 = vunpack.c.h.b16 %v2365
    %v2707 = vunpack.c.l.b16 %v2366
    %v2708 = vunpack.c.h.b16 %v2366
    %v2709 = vunpack.c.l.b16 %v2367
    %v2710 = vunpack.c.h.b16 %v2367
    %v2711 = vunpack.c.l.b16 %v2368
    %v2712 = vunpack.c.h.b16 %v2368
    %v2713 = vunpack.c.l.b16 %v2369
    %v2714 = vunpack.c.h.b16 %v2369
    %v2715 = vunpack.c.l.b16 %v2370
    %v2716 = vunpack.c.h.b16 %v2370
    %v2717 = vunpack.c.l.b16 %v2371
    %v2718 = vunpack.c.h.b16 %v2371
    %v2719 = vunpack.c.l.b16 %v2372
    %v2720 = vunpack.c.h.b16 %v2372
    %v2721 = vunpack.c.l.b16 %v2373
    %v2722 = vunpack.c.h.b16 %v2373
    %v2723 = vunpack.c.l.b16 %v2374
    %v2724 = vunpack.c.h.b16 %v2374
    %v2725 = vunpack.c.l.b16 %v2375
    %v2726 = vunpack.c.h.b16 %v2375
    %v2727 = vunpack.c.l.b16 %v2376
    %v2728 = vunpack.c.h.b16 %v2376
    %v2729 = vunpack.c.l.b16 %v2377
    %v2730 = vunpack.c.h.b16 %v2377
    %v2731 = vunpack.c.l.b16 %v2378
    %v2732 = vunpack.c.h.b16 %v2378
    %v2733 = vunpack.c.l.b16 %v2379
    %v2734 = vunpack.c.h.b16 %v2379
    %v2735 = vunpack.c.l.b16 %v2380
    %v2736 = vunpack.c.h.b16 %v2380
    %v2737 = vunpack.c.l.b16 %v2381
    %v2738 = vunpack.c.h.b16 %v2381
    %v2739 = vunpack.c.l.b16 %v2382
    %v2740 = vunpack.c.h.b16 %v2382
    %v2741 = vunpack.c.l.b16 %v2383
    %v2742 = vunpack.c.h.b16 %v2383
    %v2743 = vunpack.c.l.b16 %v2384
    %v2744 = vunpack.c.h.b16 %v2384
    %v2745 = vunpack.c.l.b16 %v2385
    %v2746 = vunpack.c.h.b16 %v2385
    %v2747 = vunpack.c.l.b16 %v2386
    %v2748 = vunpack.c.h.b16 %v2386
    %v2749 = vunpack.c.l.b16 %v2387
    %v2750 = vunpack.c.h.b16 %v2387
    %v2751 = vunpack.c.l.b16 %v2388
    %v2752 = vunpack.c.h.b16 %v2388
    %v2753 = vunpack.c.l.b16 %v2389
    %v2754 = vunpack.c.h.b16 %v2389
    %v2755 = vunpack.c.l.b16 %v2390
    %v2756 = vunpack.c.h.b16 %v2390
    %v2757 = vunpack.c.l.b16 %v2391
    %v2758 = vunpack.c.h.b16 %v2391
    %v2759 = vunpack.c.l.b16 %v2392
    %v2760 = vunpack.c.h.b16 %v2392
    %v2761 = vunpack.c.l.b16 %v2393
    %v2762 = vunpack.c.h.b16 %v2393
    %v2763 = vunpack.c.l.b16 %v2394
    %v2764 = vunpack.c.h.b16 %v2394
    %v2765 = vunpack.c.l.b16 %v2395
    %v2766 = vunpack.c.h.b16 %v2395
    %v2767 = vunpack.c.l.b16 %v2396
    %v2768 = vunpack.c.h.b16 %v2396
    %v2769 = vunpack.c.l.b16 %v2397
    %v2770 = vunpack.c.h.b16 %v2397
    %v2771 = vunpack.c.l.b16 %v2398
    %v2772 = vunpack.c.h.b16 %v2398
    %v2773 = vunpack.c.l.b16 %v2399
    %v2774 = vunpack.c.h.b16 %v2399
    %v2775 = vunpack.c.l.b16 %v2400
    %v2776 = vunpack.c.h.b16 %v2400
    %v2777 = vunpack.c.l.b16 %v2401
    %v2778 = vunpack.c.h.b16 %v2401
    %v2779 = vunpack.c.l.b16 %v2402
    %v2780 = vunpack.c.h.b16 %v2402
    %v2781 = vunpack.c.l.b16 %v2403
    %v2782 = vunpack.c.h.b16 %v2403
    %v2783 = vunpack.c.l.b16 %v2404
    %v2784 = vunpack.c.h.b16 %v2404
    %v2785 = vunpack.c.l.b16 %v2405
    %v2786 = vunpack.c.h.b16 %v2405
    %v2787 = vunpack.c.l.b16 %v2406
    %v2788 = vunpack.c.h.b16 %v2406
    %v2789 = vunpack.c.l.b16 %v2407
    %v2790 = vunpack.c.h.b16 %v2407
    %v2791 = vunpack.c.l.b16 %v2408
    %v2792 = vunpack.c.h.b16 %v2408
    %v2793 = vunpack.c.l.b16 %v2409
    %v2794 = vunpack.c.h.b16 %v2409
    %v2795 = vunpack.c.l.b16 %v2410
    %v2796 = vunpack.c.h.b16 %v2410
    %v2797 = vunpack.c.l.b16 %v2411
    %v2798 = vunpack.c.h.b16 %v2411
    %v2799 = vunpack.c.l.b16 %v2412
    %v2800 = vunpack.c.h.b16 %v2412
    %v2801 = vunpack.c.l.b16 %v2413
    %v2802 = vunpack.c.h.b16 %v2413
    %v2803 = vunpack.c.l.b16 %v2414
    %v2804 = vunpack.c.h.b16 %v2414
    %v2805 = vunpack.c.l.b16 %v2415
    %v2806 = vunpack.c.h.b16 %v2415
    %v2807 = vunpack.c.l.b16 %v2416
    %v2808 = vunpack.c.h.b16 %v2416
    %v2809 = vunpack.c.l.b16 %v2417
    %v2810 = vunpack.c.h.b16 %v2417
    %v2811 = vunpack.c.l.b16 %v2418
    %v2812 = vunpack.c.h.b16 %v2418
    %v2813 = vunpack.c.l.b16 %v2419
    %v2814 = vunpack.c.h.b16 %v2419
    %v2815 = vunpack.c.l.b16 %v2420
    %v2816 = vunpack.c.h.b16 %v2420
    %v2817 = vunpack.c.l.b16 %v2421
    %v2818 = vunpack.c.h.b16 %v2421
    %v2819 = vunpack.c.l.b16 %v2422
    %v2820 = vunpack.c.h.b16 %v2422
    %v2821 = vunpack.c.l.b16 %v2423
    %v2822 = vunpack.c.h.b16 %v2423
    %v2823 = vunpack.c.l.b16 %v2424
    %v2824 = vunpack.c.h.b16 %v2424
    %v2825 = vunpack.c.l.b16 %v2425
    %v2826 = vunpack.c.h.b16 %v2425
    %v2827 = vunpack.c.l.b16 %v2426
    %v2828 = vunpack.c.h.b16 %v2426
    %v2829 = vunpack.c.l.b16 %v2427
    %v2830 = vunpack.c.h.b16 %v2427
    %v2831 = vunpack.c.l.b16 %v2428
    %v2832 = vunpack.c.h.b16 %v2428
    %v2833 = vunpack.c.l.b16 %v2429
    %v2834 = vunpack.c.h.b16 %v2429
    %v2835 = vunpack.c.l.b16 %v2430
    %v2836 = vunpack.c.h.b16 %v2430
    %v2837 = vpack.c.b16 %v2585, %v2581
    %v2838 = vpack.c.b16 %v2586, %v2582
    %v2839 = vpack.c.b16 %v2587, %v2583
    %v2840 = vpack.c.b16 %v2588, %v2584
    %v2841 = vpack.c.b16 %v2593, %v2589
    %v2842 = vpack.c.b16 %v2594, %v2590
    %v2843 = vpack.c.b16 %v2595, %v2591
    %v2844 = vpack.c.b16 %v2596, %v2592
    %v2845 = vpack.c.b16 %v2601, %v2597
    %v2846 = vpack.c.b16 %v2602, %v2598
    %v2847 = vpack.c.b16 %v2603, %v2599
    %v2848 = vpack.c.b16 %v2604, %v2600
    %v2849 = vpack.c.b16 %v2609, %v2605
    %v2850 = vpack.c.b16 %v2610, %v2606
    %v2851 = vpack.c.b16 %v2611, %v2607
    %v2852 = vpack.c.b16 %v2612, %v2608
    %v2853 = vpack.c.b16 %v2617, %v2613
    %v2854 = vpack.c.b16 %v2618, %v2614
    %v2855 = vpack.c.b16 %v2619, %v2615
    %v2856 = vpack.c.b16 %v2620, %v2616
    %v2857 = vpack.c.b16 %v2625, %v2621
    %v2858 = vpack.c.b16 %v2626, %v2622
    %v2859 = vpack.c.b16 %v2627, %v2623
    %v2860 = vpack.c.b16 %v2628, %v2624
    %v2861 = vpack.c.b16 %v2633, %v2629
    %v2862 = vpack.c.b16 %v2634, %v2630
    %v2863 = vpack.c.b16 %v2635, %v2631
    %v2864 = vpack.c.b16 %v2636, %v2632
    %v2865 = vpack.c.b16 %v2641, %v2637
    %v2866 = vpack.c.b16 %v2642, %v2638
    %v2867 = vpack.c.b16 %v2643, %v2639
    %v2868 = vpack.c.b16 %v2644, %v2640
    %v2869 = vpack.c.b16 %v2649, %v2645
    %v2870 = vpack.c.b16 %v2650, %v2646
    %v2871 = vpack.c.b16 %v2651, %v2647
    %v2872 = vpack.c.b16 %v2652, %v2648
    %v2873 = vpack.c.b16 %v2657, %v2653
    %v2874 = vpack.c.b16 %v2658, %v2654
    %v2875 = vpack.c.b16 %v2659, %v2655
    %v2876 = vpack.c.b16 %v2660, %v2656
    %v2877 = vpack.c.b16 %v2665, %v2661
    %v2878 = vpack.c.b16 %v2666, %v2662
    %v2879 = vpack.c.b16 %v2667, %v2663
    %v2880 = vpack.c.b16 %v2668, %v2664
    %v2881 = vpack.c.b16 %v2673, %v2669
    %v2882 = vpack.c.b16 %v2674, %v2670
    %v2883 = vpack.c.b16 %v2675, %v2671
    %v2884 = vpack.c.b16 %v2676, %v2672
    %v2885 = vpack.c.b16 %v2681, %v2677
    %v2886 = vpack.c.b16 %v2682, %v2678
    %v2887 = vpack.c.b16 %v2683, %v2679
    %v2888 = vpack.c.b16 %v2684, %v2680
    %v2889 = vpack.c.b16 %v2689, %v2685
    %v2890 = vpack.c.b16 %v2690, %v2686
    %v2891 = vpack.c.b16 %v2691, %v2687
    %v2892 = vpack.c.b16 %v2692, %v2688
    %v2893 = vpack.c.b16 %v2697, %v2693
    %v2894 = vpack.c.b16 %v2698, %v2694
    %v2895 = vpack.c.b16 %v2699, %v2695
    %v2896 = vpack.c.b16 %v2700, %v2696
    %v2897 = vpack.c.b16 %v2705, %v2701
    %v2898 = vpack.c.b16 %v2706, %v2702
    %v2899 = vpack.c.b16 %v2707, %v2703
    %v2900 = vpack.c.b16 %v2708, %v2704
    %v2901 = vpack.c.b16 %v2713, %v2709
    %v2902 = vpack.c.b16 %v2714, %v2710
    %v2903 = vpack.c.b16 %v2715, %v2711
    %v2904 = vpack.c.b16 %v2716, %v2712
    %v2905 = vpack.c.b16 %v2721, %v2717
    %v2906 = vpack.c.b16 %v2722, %v2718
    %v2907 = vpack.c.b16 %v2723, %v2719
    %v2908 = vpack.c.b16 %v2724, %v2720
    %v2909 = vpack.c.b16 %v2729, %v2725
    %v2910 = vpack.c.b16 %v2730, %v2726
    %v2911 = vpack.c.b16 %v2731, %v2727
    %v2912 = vpack.c.b16 %v2732, %v2728
    %v2913 = vpack.c.b16 %v2737, %v2733
    %v2914 = vpack.c.b16 %v2738, %v2734
    %v2915 = vpack.c.b16 %v2739, %v2735
    %v2916 = vpack.c.b16 %v2740, %v2736
    %v2917 = vpack.c.b16 %v2745, %v2741
    %v2918 = vpack.c.b16 %v2746, %v2742
    %v2919 = vpack.c.b16 %v2747, %v2743
    %v2920 = vpack.c.b16 %v2748, %v2744
    %v2921 = vpack.c.b16 %v2753, %v2749
    %v2922 = vpack.c.b16 %v2754, %v2750
    %v2923 = vpack.c.b16 %v2755, %v2751
    %v2924 = vpack.c.b16 %v2756, %v2752
    %v2925 = vpack.c.b16 %v2761, %v2757
    %v2926 = vpack.c.b16 %v2762, %v2758
    %v2927 = vpack.c.b16 %v2763, %v2759
    %v2928 = vpack.c.b16 %v2764, %v2760
    %v2929 = vpack.c.b16 %v2769, %v2765
    %v2930 = vpack.c.b16 %v2770, %v2766
    %v2931 = vpack.c.b16 %v2771, %v2767
    %v2932 = vpack.c.b16 %v2772, %v2768
    %v2933 = vpack.c.b16 %v2777, %v2773
    %v2934 = vpack.c.b16 %v2778, %v2774
    %v2935 = vpack.c.b16 %v2779, %v2775
    %v2936 = vpack.c.b16 %v2780, %v2776
    %v2937 = vpack.c.b16 %v2785, %v2781
    %v2938 = vpack.c.b16 %v2786, %v2782
    %v2939 = vpack.c.b16 %v2787, %v2783
    %v2940 = vpack.c.b16 %v2788, %v2784
    %v2941 = vpack.c.b16 %v2793, %v2789
    %v2942 = vpack.c.b16 %v2794, %v2790
    %v2943 = vpack.c.b16 %v2795, %v2791
    %v2944 = vpack.c.b16 %v2796, %v2792
    %v2945 = vpack.c.b16 %v2801, %v2797
    %v2946 = vpack.c.b16 %v2802, %v2798
    %v2947 = vpack.c.b16 %v2803, %v2799
    %v2948 = vpack.c.b16 %v2804, %v2800
    %v2949 = vpack.c.b16 %v2809, %v2805
    %v2950 = vpack.c.b16 %v2810, %v2806
    %v2951 = vpack.c.b16 %v2811, %v2807
    %v2952 = vpack.c.b16 %v2812, %v2808
    %v2953 = vpack.c.b16 %v2817, %v2813
    %v2954 = vpack.c.b16 %v2818, %v2814
    %v2955 = vpack.c.b16 %v2819, %v2815
    %v2956 = vpack.c.b16 %v2820, %v2816
    %v2957 = vpack.c.b16 %v2825, %v2821
    %v2958 = vpack.c.b16 %v2826, %v2822
    %v2959 = vpack.c.b16 %v2827, %v2823
    %v2960 = vpack.c.b16 %v2828, %v2824
    %v2961 = vpack.c.b16 %v2833, %v2829
    %v2962 = vpack.c.b16 %v2834, %v2830
    %v2963 = vpack.c.b16 %v2835, %v2831
    %v2964 = vpack.c.b16 %v2836, %v2832
    %3093 = vmatprep.subr.bf16.mxu0 %v2866
    %3094 = vmatpush1.bf16.msra.mxu0 %v2865
    %3095 = vmatprep.subr.bf16.mxu0 %v2862
    %3096 = vmatpush1.bf16.msra.mxu0 %v2861
    %3097 = vmatprep.subr.bf16.mxu0 %v2858
    %3098 = vmatpush1.bf16.msra.mxu0 %v2857
    %3099 = vmatprep.subr.bf16.mxu0 %v2854
    %3100 = vmatpush1.bf16.msra.mxu0 %v2853
    %3101 = vmatprep.subr.bf16.mxu0 %v2850
    %3102 = vmatpush1.bf16.msra.mxu0 %v2849
    %3103 = vmatprep.subr.bf16.mxu0 %v2846
    %3104 = vmatpush1.bf16.msra.mxu0 %v2845
    %3105 = vmatprep.subr.bf16.mxu0 %v2842
    %3106 = vmatpush1.bf16.msra.mxu0 %v2841
    %3107 = vmatprep.subr.bf16.mxu0 %v2838
    %3108 = vmatpush1.bf16.msra.mxu0 %v2837
    %3109 = vmatprep.subr.bf16.mxu0 %v2898
    %3110 = vmatpush2.bf16.msra.mxu0 %v2897
    %3111 = vmatprep.subr.bf16.mxu0 %v2894
    %3112 = vmatpush2.bf16.msra.mxu0 %v2893
    %3113 = vmatprep.subr.bf16.mxu0 %v2890
    %3114 = vmatpush2.bf16.msra.mxu0 %v2889
    %3115 = vmatprep.subr.bf16.mxu0 %v2886
    %3116 = vmatpush2.bf16.msra.mxu0 %v2885
    %3117 = vmatprep.subr.bf16.mxu0 %v2882
    %3118 = vmatpush2.bf16.msra.mxu0 %v2881
    %3119 = vmatprep.subr.bf16.mxu0 %v2878
    %3120 = vmatpush2.bf16.msra.mxu0 %v2877
    %3121 = vmatprep.subr.bf16.mxu0 %v2874
    %3122 = vmatpush2.bf16.msra.mxu0 %v2873
    %3123 = vmatprep.subr.bf16.mxu0 %v2870
    %3124 = vmatpush2.bf16.msra.mxu0 %v2869
    %3125 = vmatprep.mubr.bf16.mxu0 %v2296
    %3126 = vmatmul.mubr.bf16.gmra.mxu0 %v2295
    %v3127 = vpop.f32.mrf.mxu0
    %v3128 = vadd.f32 %v2436, %v3127
    %v3129 = vpop.f32.mrf.mxu0
    %v3130 = vadd.f32 %v2440, %v3129
    %v3131 = vpop.f32.mrf.mxu0
    %v3132 = vadd.f32 %v2436, %v3131
    %v3133 = vpop.f32.mrf.mxu0
    %v3134 = vadd.f32 %v2440, %v3133
    %3135 = vmatprep.mubr.bf16.mxu0 %v2300
    %3136 = vmatmul.mubr.bf16.gmra.mxu0 %v2299
    %v3137 = vpop.f32.mrf.mxu0
    %v3138 = vadd.f32 %v2436, %v3137
    %v3139 = vpop.f32.mrf.mxu0
    %v3140 = vadd.f32 %v2440, %v3139
    %v3141 = vpop.f32.mrf.mxu0
    %v3142 = vpop.f32.mrf.mxu0
    %3143 = vdwg.mxu0
    %3144 = vmatprep.subr.bf16.mxu0 %v2930
    %3145 = vmatpush1.bf16.msra.mxu0 %v2929
    %3146 = vmatprep.subr.bf16.mxu0 %v2926
    %3147 = vmatpush1.bf16.msra.mxu0 %v2925
    %3148 = vmatprep.subr.bf16.mxu0 %v2922
    %3149 = vmatpush1.bf16.msra.mxu0 %v2921
    %3150 = vmatprep.subr.bf16.mxu0 %v2918
    %3151 = vmatpush1.bf16.msra.mxu0 %v2917
    %3152 = vmatprep.subr.bf16.mxu0 %v2914
    %3153 = vmatpush1.bf16.msra.mxu0 %v2913
    %3154 = vmatprep.subr.bf16.mxu0 %v2910
    %3155 = vmatpush1.bf16.msra.mxu0 %v2909
    %3156 = vmatprep.subr.bf16.mxu0 %v2906
    %3157 = vmatpush1.bf16.msra.mxu0 %v2905
    %3158 = vmatprep.subr.bf16.mxu0 %v2902
    %3159 = vmatpush1.bf16.msra.mxu0 %v2901
    %3160 = vmatprep.subr.bf16.mxu0 %v2962
    %3161 = vmatpush2.bf16.msra.mxu0 %v2961
    %3162 = vmatprep.subr.bf16.mxu0 %v2958
    %3163 = vmatpush2.bf16.msra.mxu0 %v2957
    %3164 = vmatprep.subr.bf16.mxu0 %v2954
    %3165 = vmatpush2.bf16.msra.mxu0 %v2953
    %3166 = vmatprep.subr.bf16.mxu0 %v2950
    %3167 = vmatpush2.bf16.msra.mxu0 %v2949
    %3168 = vmatprep.subr.bf16.mxu0 %v2946
    %3169 = vmatpush2.bf16.msra.mxu0 %v2945
    %3170 = vmatprep.subr.bf16.mxu0 %v2942
    %3171 = vmatpush2.bf16.msra.mxu0 %v2941
    %3172 = vmatprep.subr.bf16.mxu0 %v2938
    %3173 = vmatpush2.bf16.msra.mxu0 %v2937
    %3174 = vmatprep.subr.bf16.mxu0 %v2934
    %3175 = vmatpush2.bf16.msra.mxu0 %v2933
    %3176 = vmatprep.mubr.bf16.mxu0 %v2298
    %3177 = vmatmul.mubr.bf16.gmra.mxu0 %v2297
    %v3178 = vpop.f32.mrf.mxu0
    %v3179 = vadd.f32 %v3128, %v3178
    %v3180 = vpop.f32.mrf.mxu0
    %v3181 = vadd.f32 %v3130, %v3180
    %v3182 = vpop.f32.mrf.mxu0
    %v3183 = vadd.f32 %v3132, %v3182
    %v3184 = vpop.f32.mrf.mxu0
    %v3185 = vadd.f32 %v3134, %v3184
    %3186 = vmatprep.mubr.bf16.mxu0 %v2302
    %3187 = vmatmul.mubr.bf16.gmra.mxu0 %v2301
    %v3188 = vpop.f32.mrf.mxu0
    %v3189 = vadd.f32 %v3138, %v3188
    %v3190 = vpop.f32.mrf.mxu0
    %v3191 = vadd.f32 %v3140, %v3190
    %v3192 = vpop.f32.mrf.mxu0
    %v3193 = vpop.f32.mrf.mxu0
    %3194 = vdwg.mxu0
    %3195 = vmatprep.subr.bf16.mxu0 %v2868
    %3196 = vmatpush1.bf16.msra.mxu0 %v2867
    %3197 = vmatprep.subr.bf16.mxu0 %v2864
    %3198 = vmatpush1.bf16.msra.mxu0 %v2863
    %3199 = vmatprep.subr.bf16.mxu0 %v2860
    %3200 = vmatpush1.bf16.msra.mxu0 %v2859
    %3201 = vmatprep.subr.bf16.mxu0 %v2856
    %3202 = vmatpush1.bf16.msra.mxu0 %v2855
    %3203 = vmatprep.subr.bf16.mxu0 %v2852
    %3204 = vmatpush1.bf16.msra.mxu0 %v2851
    %3205 = vmatprep.subr.bf16.mxu0 %v2848
    %3206 = vmatpush1.bf16.msra.mxu0 %v2847
    %3207 = vmatprep.subr.bf16.mxu0 %v2844
    %3208 = vmatpush1.bf16.msra.mxu0 %v2843
    %3209 = vmatprep.subr.bf16.mxu0 %v2840
    %3210 = vmatpush1.bf16.msra.mxu0 %v2839
    %3211 = vmatprep.subr.bf16.mxu0 %v2900
    %3212 = vmatpush2.bf16.msra.mxu0 %v2899
    %3213 = vmatprep.subr.bf16.mxu0 %v2896
    %3214 = vmatpush2.bf16.msra.mxu0 %v2895
    %3215 = vmatprep.subr.bf16.mxu0 %v2892
    %3216 = vmatpush2.bf16.msra.mxu0 %v2891
    %3217 = vmatprep.subr.bf16.mxu0 %v2888
    %3218 = vmatpush2.bf16.msra.mxu0 %v2887
    %3219 = vmatprep.subr.bf16.mxu0 %v2884
    %3220 = vmatpush2.bf16.msra.mxu0 %v2883
    %3221 = vmatprep.subr.bf16.mxu0 %v2880
    %3222 = vmatpush2.bf16.msra.mxu0 %v2879
    %3223 = vmatprep.subr.bf16.mxu0 %v2876
    %3224 = vmatpush2.bf16.msra.mxu0 %v2875
    %3225 = vmatprep.subr.bf16.mxu0 %v2872
    %3226 = vmatpush2.bf16.msra.mxu0 %v2871
    %3227 = vmatprep.mubr.bf16.mxu0 %v2296
    %3228 = vmatmul.mubr.bf16.gmra.mxu0 %v2295
    %v3229 = vpop.f32.mrf.mxu0
    %v3230 = vadd.f32 %v2444, %v3229
    %v3231 = vpop.f32.mrf.mxu0
    %v3232 = vadd.f32 %v2448, %v3231
    %v3233 = vpop.f32.mrf.mxu0
    %v3234 = vadd.f32 %v2444, %v3233
    %v3235 = vpop.f32.mrf.mxu0
    %v3236 = vadd.f32 %v2448, %v3235
    %3237 = vmatprep.mubr.bf16.mxu0 %v2300
    %3238 = vmatmul.mubr.bf16.gmra.mxu0 %v2299
    %v3239 = vpop.f32.mrf.mxu0
    %v3240 = vadd.f32 %v2444, %v3239
    %v3241 = vpop.f32.mrf.mxu0
    %v3242 = vadd.f32 %v2448, %v3241
    %v3243 = vpop.f32.mrf.mxu0
    %v3244 = vpop.f32.mrf.mxu0
    %3245 = vdwg.mxu0
    %3246 = vmatprep.subr.bf16.mxu0 %v2932
    %3247 = vmatpush1.bf16.msra.mxu0 %v2931
    %3248 = vmatprep.subr.bf16.mxu0 %v2928
    %3249 = vmatpush1.bf16.msra.mxu0 %v2927
    %3250 = vmatprep.subr.bf16.mxu0 %v2924
    %3251 = vmatpush1.bf16.msra.mxu0 %v2923
    %3252 = vmatprep.subr.bf16.mxu0 %v2920
    %3253 = vmatpush1.bf16.msra.mxu0 %v2919
    %3254 = vmatprep.subr.bf16.mxu0 %v2916
    %3255 = vmatpush1.bf16.msra.mxu0 %v2915
    %3256 = vmatprep.subr.bf16.mxu0 %v2912
    %3257 = vmatpush1.bf16.msra.mxu0 %v2911
    %3258 = vmatprep.subr.bf16.mxu0 %v2908
    %3259 = vmatpush1.bf16.msra.mxu0 %v2907
    %3260 = vmatprep.subr.bf16.mxu0 %v2904
    %3261 = vmatpush1.bf16.msra.mxu0 %v2903
    %3262 = vmatprep.subr.bf16.mxu0 %v2964
    %3263 = vmatpush2.bf16.msra.mxu0 %v2963
    %3264 = vmatprep.subr.bf16.mxu0 %v2960
    %3265 = vmatpush2.bf16.msra.mxu0 %v2959
    %3266 = vmatprep.subr.bf16.mxu0 %v2956
    %3267 = vmatpush2.bf16.msra.mxu0 %v2955
    %3268 = vmatprep.subr.bf16.mxu0 %v2952
    %3269 = vmatpush2.bf16.msra.mxu0 %v2951
    %3270 = vmatprep.subr.bf16.mxu0 %v2948
    %3271 = vmatpush2.bf16.msra.mxu0 %v2947
    %3272 = vmatprep.subr.bf16.mxu0 %v2944
    %3273 = vmatpush2.bf16.msra.mxu0 %v2943
    %3274 = vmatprep.subr.bf16.mxu0 %v2940
    %3275 = vmatpush2.bf16.msra.mxu0 %v2939
    %3276 = vmatprep.subr.bf16.mxu0 %v2936
    %3277 = vmatpush2.bf16.msra.mxu0 %v2935
    %3278 = vmatprep.mubr.bf16.mxu0 %v2298
    %3279 = vmatmul.mubr.bf16.gmra.mxu0 %v2297
    %v3280 = vpop.f32.mrf.mxu0
    %v3281 = vadd.f32 %v3230, %v3280
    %v3282 = vpop.f32.mrf.mxu0
    %v3283 = vadd.f32 %v3232, %v3282
    %v3284 = vpop.f32.mrf.mxu0
    %v3285 = vadd.f32 %v3234, %v3284
    %v3286 = vpop.f32.mrf.mxu0
    %v3287 = vadd.f32 %v3236, %v3286
    %3288 = vmatprep.mubr.bf16.mxu0 %v2302
    %3289 = vmatmul.mubr.bf16.gmra.mxu0 %v2301
    %v3290 = vpop.f32.mrf.mxu0
    %v3291 = vadd.f32 %v3240, %v3290
    %v3292 = vpop.f32.mrf.mxu0
    %v3293 = vadd.f32 %v3242, %v3292
    %v3294 = vpop.f32.mrf.mxu0
    %v3295 = vpop.f32.mrf.mxu0
    %3296 = vdwg.mxu0
    %v3297 = vmax.f32 %v3179, 0.0
    %v3298 = vmax.f32 %v3181, 0.0
    %v3299 = vmax.f32 %v3281, 0.0
    %v3300 = vmax.f32 %v3283, 0.0
    %v3301 = vmax.f32 %v3183, 0.0
    %v3302 = vmax.f32 %v3185, 0.0
    %v3303 = vmax.f32 %v3285, 0.0
    %v3304 = vmax.f32 %v3287, 0.0
    %v3305 = vmax.f32 %v3189, 0.0
    %v3306 = vmax.f32 %v3191, 0.0
    %v3307 = vmax.f32 %v3291, 0.0
    %v3308 = vmax.f32 %v3293, 0.0
    %v3309 = vpack.c.bf16 %v3301, %v3297
    %v3310 = vpack.c.bf16 %v3302, %v3298
    %v3311 = vpack.c.bf16 %v3303, %v3299
    %v3312 = vpack.c.bf16 %v3304, %v3300
    %v3313 = vpack.c.bf16 %v3305, %v3305
    %v3314 = vpack.c.bf16 %v3306, %v3306
    %v3315 = vpack.c.bf16 %v3307, %v3307
    %v3316 = vpack.c.bf16 %v3308, %v3308
    %v3317 = vld [vmem:[#allocation8] sm:$0xf]
    %v3318 = vld [vmem:[#allocation8 + $0x4] sm:$0xf]
    %v3319 = vld [vmem:[#allocation8 + $0x8] sm:$0xf]
    %v3320 = vld [vmem:[#allocation8 + $0xc] sm:$0xf]
    %v3321 = vld [vmem:[#allocation8 + $0x10] sm:$0xf]
    %v3322 = vld [vmem:[#allocation8 + $0x14] sm:$0xf]
    %v3323 = vld [vmem:[#allocation8 + $0x18] sm:$0xf]
    %v3324 = vld [vmem:[#allocation8 + $0x1c] sm:$0xf]
    %v3325 = vld [vmem:[#allocation8 + $0x20] sm:$0xf]
    %v3326 = vld [vmem:[#allocation8 + $0x24] sm:$0xf]
    %v3327 = vld [vmem:[#allocation8 + $0x28] sm:$0xf]
    %v3328 = vld [vmem:[#allocation8 + $0x2c] sm:$0xf]
    %v3329 = vld [vmem:[#allocation8 + $0x30] sm:$0xf]
    %v3330 = vld [vmem:[#allocation8 + $0x34] sm:$0xf]
    %v3331 = vld [vmem:[#allocation8 + $0x38] sm:$0xf]
    %v3332 = vld [vmem:[#allocation8 + $0x3c] sm:$0xf]
    %v3333 = vld [vmem:[#allocation8 + $0x40] sm:$0xf]
    %v3334 = vld [vmem:[#allocation8 + $0x44] sm:$0xf]
    %v3335 = vld [vmem:[#allocation8 + $0x48] sm:$0xf]
    %v3336 = vld [vmem:[#allocation8 + $0x4c] sm:$0xf]
    %v3337 = vld [vmem:[#allocation8 + $0x50] sm:$0xf]
    %v3338 = vld [vmem:[#allocation8 + $0x54] sm:$0xf]
    %v3339 = vld [vmem:[#allocation8 + $0x58] sm:$0xf]
    %v3340 = vld [vmem:[#allocation8 + $0x5c] sm:$0xf]
    %v3341 = vld [vmem:[#allocation8 + $0x60] sm:$0xf]
    %v3342 = vld [vmem:[#allocation8 + $0x64] sm:$0xf]
    %v3343 = vld [vmem:[#allocation8 + $0x68] sm:$0xf]
    %v3344 = vld [vmem:[#allocation8 + $0x6c] sm:$0xf]
    %v3345 = vld [vmem:[#allocation8 + $0x70] sm:$0xf]
    %v3346 = vld [vmem:[#allocation8 + $0x74] sm:$0xf]
    %v3347 = vld [vmem:[#allocation8 + $0x78] sm:$0xf]
    %v3348 = vld [vmem:[#allocation8 + $0x7c] sm:$0xf]
    %v3349 = vld [vmem:[#allocation8 + $0x80] sm:$0xf]
    %v3350 = vld [vmem:[#allocation8 + $0x84] sm:$0xf]
    %v3351 = vld [vmem:[#allocation8 + $0x88] sm:$0xf]
    %v3352 = vld [vmem:[#allocation8 + $0x8c] sm:$0xf]
    %v3353 = vld [vmem:[#allocation8 + $0x90] sm:$0xf]
    %v3354 = vld [vmem:[#allocation8 + $0x94] sm:$0xf]
    %v3355 = vld [vmem:[#allocation8 + $0x98] sm:$0xf]
    %v3356 = vld [vmem:[#allocation8 + $0x9c] sm:$0xf]
    %v3357 = vld [vmem:[#allocation8 + $0xa0] sm:$0xf]
    %v3358 = vld [vmem:[#allocation8 + $0xa4] sm:$0xf]
    %v3359 = vld [vmem:[#allocation8 + $0xa8] sm:$0xf]
    %v3360 = vld [vmem:[#allocation8 + $0xac] sm:$0xf]
    %v3361 = vld [vmem:[#allocation8 + $0xb0] sm:$0xf]
    %v3362 = vld [vmem:[#allocation8 + $0xb4] sm:$0xf]
    %v3363 = vld [vmem:[#allocation8 + $0xb8] sm:$0xf]
    %v3364 = vld [vmem:[#allocation8 + $0xbc] sm:$0xf]
    %v3365 = vld [vmem:[#allocation8 + $0xc0] sm:$0xf]
    %v3366 = vld [vmem:[#allocation8 + $0xc4] sm:$0xf]
    %v3367 = vld [vmem:[#allocation8 + $0xc8] sm:$0xf]
    %v3368 = vld [vmem:[#allocation8 + $0xcc] sm:$0xf]
    %v3369 = vld [vmem:[#allocation8 + $0xd0] sm:$0xf]
    %v3370 = vld [vmem:[#allocation8 + $0xd4] sm:$0xf]
    %v3371 = vld [vmem:[#allocation8 + $0xd8] sm:$0xf]
    %v3372 = vld [vmem:[#allocation8 + $0xdc] sm:$0xf]
    %v3373 = vld [vmem:[#allocation8 + $0xe0] sm:$0xf]
    %v3374 = vld [vmem:[#allocation8 + $0xe4] sm:$0xf]
    %v3375 = vld [vmem:[#allocation8 + $0xe8] sm:$0xf]
    %v3376 = vld [vmem:[#allocation8 + $0xec] sm:$0xf]
    %v3377 = vld [vmem:[#allocation8 + $0xf0] sm:$0xf]
    %v3378 = vld [vmem:[#allocation8 + $0xf4] sm:$0xf]
    %v3379 = vld [vmem:[#allocation8 + $0xf8] sm:$0xf]
    %v3380 = vld [vmem:[#allocation8 + $0xfc] sm:$0xf]
    %v3381 = vld [vmem:[%s10] sm:$0x1]
    %v3383 = vlaneseq
    %v3384 = vshrl.u32 %v3383, 7
    %v3385 = vsub.s32 0, %v3384
    %v3386 = vrot.slane %v3381, %v3385
    %v3452 = vunpack.c.l.b16 %v3317
    %v3453 = vunpack.c.l.b16 %v3318
    %v3454 = vunpack.c.l.b16 %v3319
    %v3455 = vunpack.c.l.b16 %v3320
    %v3456 = vunpack.c.l.b16 %v3321
    %v3457 = vunpack.c.l.b16 %v3322
    %v3458 = vunpack.c.l.b16 %v3323
    %v3459 = vunpack.c.l.b16 %v3324
    %v3460 = vunpack.c.l.b16 %v3325
    %v3461 = vunpack.c.l.b16 %v3326
    %v3462 = vunpack.c.l.b16 %v3327
    %v3463 = vunpack.c.l.b16 %v3328
    %v3464 = vunpack.c.l.b16 %v3329
    %v3465 = vunpack.c.l.b16 %v3330
    %v3466 = vunpack.c.l.b16 %v3331
    %v3467 = vunpack.c.l.b16 %v3332
    %v3468 = vunpack.c.l.b16 %v3333
    %v3469 = vunpack.c.l.b16 %v3334
    %v3470 = vunpack.c.l.b16 %v3335
    %v3471 = vunpack.c.l.b16 %v3336
    %v3472 = vunpack.c.l.b16 %v3337
    %v3473 = vunpack.c.l.b16 %v3338
    %v3474 = vunpack.c.l.b16 %v3339
    %v3475 = vunpack.c.l.b16 %v3340
    %v3476 = vunpack.c.l.b16 %v3341
    %v3477 = vunpack.c.l.b16 %v3342
    %v3478 = vunpack.c.l.b16 %v3343
    %v3479 = vunpack.c.l.b16 %v3344
    %v3480 = vunpack.c.l.b16 %v3345
    %v3481 = vunpack.c.l.b16 %v3346
    %v3482 = vunpack.c.l.b16 %v3347
    %v3483 = vunpack.c.l.b16 %v3348
    %v3484 = vunpack.c.l.b16 %v3349
    %v3485 = vunpack.c.l.b16 %v3350
    %v3486 = vunpack.c.l.b16 %v3351
    %v3487 = vunpack.c.l.b16 %v3352
    %v3488 = vunpack.c.l.b16 %v3353
    %v3489 = vunpack.c.l.b16 %v3354
    %v3490 = vunpack.c.l.b16 %v3355
    %v3491 = vunpack.c.l.b16 %v3356
    %v3492 = vunpack.c.l.b16 %v3357
    %v3493 = vunpack.c.l.b16 %v3358
    %v3494 = vunpack.c.l.b16 %v3359
    %v3495 = vunpack.c.l.b16 %v3360
    %v3496 = vunpack.c.l.b16 %v3361
    %v3497 = vunpack.c.l.b16 %v3362
    %v3498 = vunpack.c.l.b16 %v3363
    %v3499 = vunpack.c.l.b16 %v3364
    %v3500 = vunpack.c.l.b16 %v3365
    %v3501 = vunpack.c.l.b16 %v3366
    %v3502 = vunpack.c.l.b16 %v3367
    %v3503 = vunpack.c.l.b16 %v3368
    %v3504 = vunpack.c.l.b16 %v3369
    %v3505 = vunpack.c.l.b16 %v3370
    %v3506 = vunpack.c.l.b16 %v3371
    %v3507 = vunpack.c.l.b16 %v3372
    %v3508 = vunpack.c.l.b16 %v3373
    %v3509 = vunpack.c.l.b16 %v3374
    %v3510 = vunpack.c.l.b16 %v3375
    %v3511 = vunpack.c.l.b16 %v3376
    %v3512 = vunpack.c.l.b16 %v3377
    %v3513 = vunpack.c.l.b16 %v3378
    %v3514 = vunpack.c.l.b16 %v3379
    %v3515 = vunpack.c.l.b16 %v3380
    %v3516 = vpack.c.b16 %v3453, %v3452
    %v3517 = vpack.c.b16 %v3455, %v3454
    %v3518 = vpack.c.b16 %v3457, %v3456
    %v3519 = vpack.c.b16 %v3459, %v3458
    %v3520 = vpack.c.b16 %v3461, %v3460
    %v3521 = vpack.c.b16 %v3463, %v3462
    %v3522 = vpack.c.b16 %v3465, %v3464
    %v3523 = vpack.c.b16 %v3467, %v3466
    %v3524 = vpack.c.b16 %v3469, %v3468
    %v3525 = vpack.c.b16 %v3471, %v3470
    %v3526 = vpack.c.b16 %v3473, %v3472
    %v3527 = vpack.c.b16 %v3475, %v3474
    %v3528 = vpack.c.b16 %v3477, %v3476
    %v3529 = vpack.c.b16 %v3479, %v3478
    %v3530 = vpack.c.b16 %v3481, %v3480
    %v3531 = vpack.c.b16 %v3483, %v3482
    %v3532 = vpack.c.b16 %v3485, %v3484
    %v3533 = vpack.c.b16 %v3487, %v3486
    %v3534 = vpack.c.b16 %v3489, %v3488
    %v3535 = vpack.c.b16 %v3491, %v3490
    %v3536 = vpack.c.b16 %v3493, %v3492
    %v3537 = vpack.c.b16 %v3495, %v3494
    %v3538 = vpack.c.b16 %v3497, %v3496
    %v3539 = vpack.c.b16 %v3499, %v3498
    %v3540 = vpack.c.b16 %v3501, %v3500
    %v3541 = vpack.c.b16 %v3503, %v3502
    %v3542 = vpack.c.b16 %v3505, %v3504
    %v3543 = vpack.c.b16 %v3507, %v3506
    %v3544 = vpack.c.b16 %v3509, %v3508
    %v3545 = vpack.c.b16 %v3511, %v3510
    %v3546 = vpack.c.b16 %v3513, %v3512
    %v3547 = vpack.c.b16 %v3515, %v3514
    %3580 = vmatprep.subr.bf16.mxu0 0
    %3581 = vmatpush1.bf16.msra.mxu0 %v3523
    %3582 = vmatprep.subr.bf16.mxu0 0
    %3583 = vmatpush1.bf16.msra.mxu0 %v3522
    %3584 = vmatprep.subr.bf16.mxu0 0
    %3585 = vmatpush1.bf16.msra.mxu0 %v3521
    %3586 = vmatprep.subr.bf16.mxu0 0
    %3587 = vmatpush1.bf16.msra.mxu0 %v3520
    %3588 = vmatprep.subr.bf16.mxu0 0
    %3589 = vmatpush1.bf16.msra.mxu0 %v3519
    %3590 = vmatprep.subr.bf16.mxu0 0
    %3591 = vmatpush1.bf16.msra.mxu0 %v3518
    %3592 = vmatprep.subr.bf16.mxu0 0
    %3593 = vmatpush1.bf16.msra.mxu0 %v3517
    %3594 = vmatprep.subr.bf16.mxu0 0
    %3595 = vmatpush1.bf16.msra.mxu0 %v3516
    %3596 = vmatprep.subr.bf16.mxu0 0
    %3597 = vmatpush2.bf16.msra.mxu0 %v3531
    %3598 = vmatprep.subr.bf16.mxu0 0
    %3599 = vmatpush2.bf16.msra.mxu0 %v3530
    %3600 = vmatprep.subr.bf16.mxu0 0
    %3601 = vmatpush2.bf16.msra.mxu0 %v3529
    %3602 = vmatprep.subr.bf16.mxu0 0
    %3603 = vmatpush2.bf16.msra.mxu0 %v3528
    %3604 = vmatprep.subr.bf16.mxu0 0
    %3605 = vmatpush2.bf16.msra.mxu0 %v3527
    %3606 = vmatprep.subr.bf16.mxu0 0
    %3607 = vmatpush2.bf16.msra.mxu0 %v3526
    %3608 = vmatprep.subr.bf16.mxu0 0
    %3609 = vmatpush2.bf16.msra.mxu0 %v3525
    %3610 = vmatprep.subr.bf16.mxu0 0
    %3611 = vmatpush2.bf16.msra.mxu0 %v3524
    %3612 = vmatprep.mubr.bf16.mxu0 %v3310
    %3613 = vmatmul.mubr.bf16.gmra.mxu0 %v3309
    %v3614 = vpop.f32.mrf.mxu0
    %v3615 = vadd.f32 %v3386, %v3614
    %v3616 = vpop.f32.mrf.mxu0
    %v3617 = vpop.f32.mrf.mxu0
    %v3618 = vadd.f32 %v3386, %v3617
    %v3619 = vpop.f32.mrf.mxu0
    %3620 = vmatprep.mubr.bf16.mxu0 %v3314
    %3621 = vmatmul.mubr.bf16.gmra.mxu0 %v3313
    %v3622 = vpop.f32.mrf.mxu0
    %v3623 = vadd.f32 %v3386, %v3622
    %v3624 = vpop.f32.mrf.mxu0
    %v3625 = vpop.f32.mrf.mxu0
    %v3626 = vpop.f32.mrf.mxu0
    %3627 = vdwg.mxu0
    %3628 = vmatprep.subr.bf16.mxu0 0
    %3629 = vmatpush1.bf16.msra.mxu0 %v3539
    %3630 = vmatprep.subr.bf16.mxu0 0
    %3631 = vmatpush1.bf16.msra.mxu0 %v3538
    %3632 = vmatprep.subr.bf16.mxu0 0
    %3633 = vmatpush1.bf16.msra.mxu0 %v3537
    %3634 = vmatprep.subr.bf16.mxu0 0
    %3635 = vmatpush1.bf16.msra.mxu0 %v3536
    %3636 = vmatprep.subr.bf16.mxu0 0
    %3637 = vmatpush1.bf16.msra.mxu0 %v3535
    %3638 = vmatprep.subr.bf16.mxu0 0
    %3639 = vmatpush1.bf16.msra.mxu0 %v3534
    %3640 = vmatprep.subr.bf16.mxu0 0
    %3641 = vmatpush1.bf16.msra.mxu0 %v3533
    %3642 = vmatprep.subr.bf16.mxu0 0
    %3643 = vmatpush1.bf16.msra.mxu0 %v3532
    %3644 = vmatprep.subr.bf16.mxu0 0
    %3645 = vmatpush2.bf16.msra.mxu0 %v3547
    %3646 = vmatprep.subr.bf16.mxu0 0
    %3647 = vmatpush2.bf16.msra.mxu0 %v3546
    %3648 = vmatprep.subr.bf16.mxu0 0
    %3649 = vmatpush2.bf16.msra.mxu0 %v3545
    %3650 = vmatprep.subr.bf16.mxu0 0
    %3651 = vmatpush2.bf16.msra.mxu0 %v3544
    %3652 = vmatprep.subr.bf16.mxu0 0
    %3653 = vmatpush2.bf16.msra.mxu0 %v3543
    %3654 = vmatprep.subr.bf16.mxu0 0
    %3655 = vmatpush2.bf16.msra.mxu0 %v3542
    %3656 = vmatprep.subr.bf16.mxu0 0
    %3657 = vmatpush2.bf16.msra.mxu0 %v3541
    %3658 = vmatprep.subr.bf16.mxu0 0
    %3659 = vmatpush2.bf16.msra.mxu0 %v3540
    %3660 = vmatprep.mubr.bf16.mxu0 %v3312
    %3661 = vmatmul.mubr.bf16.gmra.mxu0 %v3311
    %v3662 = vpop.f32.mrf.mxu0
    %v3663 = vadd.f32 %v3615, %v3662
    %v3664 = vpop.f32.mrf.mxu0
    %v3665 = vpop.f32.mrf.mxu0
    %v3666 = vadd.f32 %v3618, %v3665
    %v3667 = vpop.f32.mrf.mxu0
    %3668 = vmatprep.mubr.bf16.mxu0 %v3316
    %3669 = vmatmul.mubr.bf16.gmra.mxu0 %v3315
    %v3670 = vpop.f32.mrf.mxu0
    %v3671 = vadd.f32 %v3623, %v3670
    %v3672 = vpop.f32.mrf.mxu0
    %v3673 = vpop.f32.mrf.mxu0
    %v3674 = vpop.f32.mrf.mxu0
    %3675 = vdwg.mxu0
    %v3676 = vmax.f32 %v3663, 0.0
    %v3677 = vmax.f32 %v3666, 0.0
    %v3678 = vmax.f32 %v3671, 0.0
    %v3679 = vtanh.pop %v3676
    %v3680 = vtanh.pop %v3677
    %v3681 = vtanh.pop %v3678
    %v3682 = vmul.f32 %v3679, 2.0
    %v3683 = vmul.f32 %v3680, 2.0
    %v3684 = vmul.f32 %v3681, 2.0
    %3685 = vst [vmem:[#allocation10] sm:$0xff] %v3682
    %3686 = vst [vmem:[#allocation10 + $0x8] sm:$0xff] %v3683
    %3687 = vst [vmem:[#allocation10 + $0x10] sm:$0xff] %v3684
    // Predicated region
    $region62: #{tpu_custom_call.1} parent=1 // pred_check
      _
    $region63: #{tpu_custom_call.1} parent=1 // pred_check_branch
      %3689 = sbr.rel (0) target = $region65
    $region64: #{tpu_custom_call.1} parent=1 // pred_region
      %s3691 = ssub.s32 384, 384
      %3692 = vsyncadd [#allocation4], %s3691
      %s3693 = sshll.u32 [#allocation10], 4
      %s3694 = int_to_ptr.vmem [resolvable:$true] %s3693
      %3699 = dma.vmem_to_hbm [thread:$0]  %s3694, 384, %s11, [#allocation4], 128, 128, 8
    $region65: #{tpu_custom_call.1} parent=1 // pred_fallthru
      _
    // Predicated region
    $region66: #{tpu_custom_call.1} parent=1 // pred_check
      _
    $region67: #{tpu_custom_call.1} parent=1 // pred_check_branch
      %3701 = sbr.rel (0) target = $region69
    $region68: #{tpu_custom_call.1} parent=1 // pred_region
      %3702 = dma.done [#allocation4], 384
    $region69: #{tpu_custom_call.1} parent=1 // pred_fallthru
      _
    %3703 = vsyncpa [#allocation3], 1
    %3704 = vsyncpa [#allocation6], 1
    %3705 = vsyncpa [#allocation9], 1
    %3706 = vsyncpa [#allocation4], 1

</llo_original>
